<compile_context>
chip_gen: v6e
topology: v6e:2x2x1
jax: 0.10.0
libtpu: 0.0.40
codegen_flags: <defaults>
</compile_context>

<pallas_src>
import jax
import jax.numpy as jnp
from jax.experimental import pallas as pl
from jax.experimental.pallas import tpu as pltpu

F32 = jnp.float32
BF16 = jnp.bfloat16
VMEM = pltpu.MemorySpace.VMEM
SMEM = pltpu.MemorySpace.SMEM

LANE = 128   # lane width of a vreg
SUB = 8      # sublane count of a vreg


def _pad_to(n, m):
    return ((n + m - 1) // m) * m


# ------------------------------ fused kernel --------------------------------

def encoder_fused_kernel(
        # SMEM scalar inputs
        inv_n_ref, lcw_ref, lcb_ref, scb_ref,
        # VMEM inputs
        x_ref, pool_ref, nmask_ref,
        iw1_ref, ib1_ref, iw2_ref, ib2_ref,
        gw1_ref, gb1_ref, gw2_ref, gb2_ref,
        mhad_ref, scw_ref,
        # HBM input (manual DMA)
        adj_hbm_ref,
        # outputs
        pgg_ref, sub_ref,
        # scratch
        adj_vmem_ref, adj_sem):
    # Kick off the adjacency HBM->VMEM DMA; ini_embed below does not need the
    # adjacency, so the (dominant) N^2 transfer overlaps with its matmuls.
    adj_cp = pltpu.make_async_copy(adj_hbm_ref, adj_vmem_ref, adj_sem)
    adj_cp.start()

    nmask = nmask_ref[...]            # [Np, 1]  1.0 for valid nodes, else 0.0
    inv_n = inv_n_ref[0]              # 1 / num_valid_nodes

    # ---- ini_embed: Linear -> ReLU -> Linear ----
    t = jnp.maximum(
        jnp.dot(x_ref[...], iw1_ref[...], preferred_element_type=jnp.float32)
        + ib1_ref[...], 0.0)
    h = (jnp.dot(t, iw2_ref[...], preferred_element_type=jnp.float32)
         + ib2_ref[...]) * nmask

    adj_cp.wait()
    adj = adj_vmem_ref[...]           # bf16 [Np, Np], self-loops folded (A + I)

    lacc = jnp.zeros_like(h)          # layer_conv accumulator (folded 1x1 conv)

    num_layers = gw1_ref.shape[0]
    # Small static L -> Python unroll; switch to lax.fori_loop(unroll=True)
    # if num_gc_layers grows large.
    for i in range(num_layers):
        # GINConv (eps=0): MLP((A + I) @ h); aggregation in bf16 on the MXU.
        s = jnp.dot(adj, h.astype(BF16), preferred_element_type=jnp.float32)
        t = jnp.maximum(
            jnp.dot(s, gw1_ref[i], preferred_element_type=jnp.float32)
            + gb1_ref[i], 0.0)
        m = (jnp.dot(t, gw2_ref[i], preferred_element_type=jnp.float32)
             + gb2_ref[i])
        # ReLU + BatchNorm1d (training batch stats, gamma=1, beta=0, eps=1e-5).
        r = jnp.maximum(m, 0.0) * nmask         # exclude padded rows from stats
        sum_r = jnp.sum(r, axis=0, keepdims=True)
        sum_r2 = jnp.sum(r * r, axis=0, keepdims=True)
        mean = sum_r * inv_n
        var = jnp.maximum(sum_r2 * inv_n - mean * mean, 0.0)  # biased, one pass
        # No trailing nmask: padded rows never reach valid rows (zero adjacency
        # columns) and are re-masked in pos below.
        h = (r - mean) * jax.lax.rsqrt(var + 1e-5)
        # layer_conv: 1x1 Conv2d(L -> 1) over the layer stack == weighted sum.
        lacc = lacc + lcw_ref[i] * h

    pos = (lacc + lcb_ref[0]) * nmask           # pos_global_node (padded rows 0)

    # ---- multi_head_subgraph_generation + subgraph_conv + global_add_pool ----
    # mask_s = (softmax(pos @ mha[s])[:, 0] >= 0.5)
    #        == (pos @ (mha[s,:,0]-mha[s,:,1]) >= 0)
    # subgraph_embed = pos * (sum_s scw[s] * mask_s) + scb
    logits = jnp.dot(pos, mhad_ref[...], preferred_element_type=jnp.float32)  # [Np, Sp]
    head_mask = (logits >= 0.0).astype(jnp.float32)
    # VPU multiply + lane reduce (XLU) instead of a 1-lane-wide MXU matmul.
    w_node = jnp.sum(head_mask * scw_ref[...], axis=-1, keepdims=True)        # [Np, 1]
    acc = pos * w_node + scb_ref[0]

    # Fused pooling: single pool @ concat([pos, acc]) shares the pool LHS.
    pool = pool_ref[...]                        # [Gp, Np] one-hot(batch)
    both = jnp.dot(pool, jnp.concatenate([pos, acc], axis=-1),
                   preferred_element_type=jnp.float32)                        # [Gp, 2*Dp]
    dp = pos.shape[-1]
    pgg_ref[...] = both[:, :dp]
    sub_ref[...] = both[:, dp:]


# ------------------------------ parameters ---------------------------------

def _xavier(key, fan_out, fan_in):
    a = (6.0 / (fan_in + fan_out)) ** 0.5
    return jax.random.uniform(key, (fan_out, fan_in), F32, -a, a)


def _pad2(w, rows, cols):
    return jnp.zeros((rows, cols), F32).at[:w.shape[0], :w.shape[1]].set(w)


def init_params(key, num_features, dim, num_gc_layers, times):
    """Weights are pre-transposed to [in, out] and zero-padded once here."""
    num_subgraph = 2 ** times
    dim_pad = _pad_to(dim, LANE)
    nf_pad = _pad_to(num_features, LANE)
    s_pad = _pad_to(num_subgraph, LANE)

    ks = jax.random.split(key, 4 + 2 * num_gc_layers)

    # ini_embed: Linear(nf,dim) -> ReLU -> Linear(dim,dim); biases 0 (init_emb)
    iw1 = _xavier(ks[0], dim, num_features).T
    iw2 = _xavier(ks[1], dim, dim).T
    gw1 = [_xavier(ks[2 + 2 * i], dim, dim).T for i in range(num_gc_layers)]
    gw2 = [_xavier(ks[3 + 2 * i], dim, dim).T for i in range(num_gc_layers)]

    lcw = jax.random.uniform(ks[2 + 2 * num_gc_layers], (num_gc_layers,),
                             F32, -0.5, 0.5)
    mha = 0.1 * jax.random.normal(ks[3 + 2 * num_gc_layers],
                                  (num_subgraph, dim, 2), F32)
    scw = jax.random.uniform(jax.random.fold_in(key, 999), (num_subgraph,),
                             F32, -0.5, 0.5)

    # 2-way softmax argmax depends only on the logit difference.
    mha_diff = (mha[:, :, 0] - mha[:, :, 1]).T          # [dim, S]

    return {
        "dim": dim, "dim_pad": dim_pad, "nf": num_features, "nf_pad": nf_pad,
        "num_gc_layers": num_gc_layers,
        "num_subgraph": num_subgraph, "s_pad": s_pad,
        "ini_w1": _pad2(iw1, nf_pad, dim_pad),
        "ini_b1": jnp.zeros((1, dim_pad), F32),
        "ini_w2": _pad2(iw2, dim_pad, dim_pad),
        "ini_b2": jnp.zeros((1, dim_pad), F32),
        "gin_w1": jnp.stack([_pad2(w, dim_pad, dim_pad) for w in gw1]),
        "gin_b1": jnp.zeros((num_gc_layers, 1, dim_pad), F32),
        "gin_w2": jnp.stack([_pad2(w, dim_pad, dim_pad) for w in gw2]),
        "gin_b2": jnp.zeros((num_gc_layers, 1, dim_pad), F32),
        "layer_conv_w": lcw,                            # SMEM, [L]
        "layer_conv_b": jnp.zeros((1,), F32),
        "mha_diff": _pad2(mha_diff, dim_pad, s_pad),
        # row layout for the VPU multiply + lane reduce
        "sub_conv_w": jnp.zeros((1, s_pad), F32).at[0, :num_subgraph].set(scw),
        "sub_conv_b": jnp.zeros((1,), F32),
    }


# --------------------------- input preparation ------------------------------

def prepare_graph_inputs(x, edge_index, batch, num_graphs, params):
    """One-time glue: padded, lane-aligned dense operands, built OUTSIDE the
    per-call path (no re-pad on every encoder call)."""
    N, NF = x.shape
    NFp = params["nf_pad"]
    Np = _pad_to(max(N, LANE), LANE)        # lane-aligned node axis
    Gp = _pad_to(max(num_graphs, SUB), SUB)

    # Dense adjacency with GIN self-loops folded in (eps=0): A[dst, src] += 1,
    # plus identity. Edge counts are small integers -> exact in bf16.
    adjI = (jnp.zeros((Np, Np), F32)
            .at[edge_index[1], edge_index[0]].add(1.0)
            .at[jnp.arange(Np), jnp.arange(Np)].add(1.0)).astype(BF16)

    xp = jnp.zeros((Np, NFp), F32).at[:N, :NF].set(x)
    poolp = jnp.zeros((Gp, Np), F32).at[batch, jnp.arange(N)].set(1.0)
    nmask = jnp.zeros((Np, 1), F32).at[:N, :].set(1.0)
    inv_n = jnp.full((1,), 1.0 / N, F32)

    return {"x": xp, "adj": adjI, "pool": poolp, "nmask": nmask,
            "inv_n": inv_n, "num_graphs": num_graphs}


def _vmem_limit_bytes(np_, gp, dp, nfp, sp, layers):
    """Explicit scoped-VMEM sizing from the actual resident set (+headroom)."""
    f32 = 4
    weights = (nfp * dp + dp * dp + 2 * layers * dp * dp + dp * sp) * f32
    weights += (2 * dp + 2 * layers * dp + sp) * f32        # biases, scw
    resident = (np_ * nfp + gp * np_ + np_) * f32           # x, pool, nmask
    resident += np_ * np_ * 2                               # bf16 adjacency scratch
    temporaries = (10 * np_ * dp + np_ * sp) * f32          # live [Np, Dp] tiles
    outputs = 2 * gp * dp * f32
    need = weights + resident + temporaries + outputs
    return int(min(100 * 2**20, max(4 * need, 32 * 2**20)))


# ------------------------------ forward pass --------------------------------

def graph_enhance_encoder(inputs, params):
    """Encoder.forward for mode='MH', percent=None (single fused pallas_call).

    inputs : dict from prepare_graph_inputs (padded x/adj/pool/nmask/inv_n)
    returns: (pos_global_graph [G, D], sampling_subgraph [G, D])
    """
    Np = inputs["adj"].shape[0]
    Gp = inputs["pool"].shape[0]
    D, Dp = params["dim"], params["dim_pad"]
    G = inputs["num_graphs"]

    smem = pl.BlockSpec(memory_space=SMEM)
    vmem = pl.BlockSpec(memory_space=VMEM)
    hbm = pl.BlockSpec(memory_space=pl.ANY)   # adjacency: manual DMA in-kernel

    vmem_limit = _vmem_limit_bytes(Np, Gp, Dp, params["nf_pad"],
                                   params["s_pad"], params["num_gc_layers"])

    pgg, sub = pl.pallas_call(
        encoder_fused_kernel,
        out_shape=(jax.ShapeDtypeStruct((Gp, Dp), F32),
                   jax.ShapeDtypeStruct((Gp, Dp), F32)),
        in_specs=[smem] * 4 + [vmem] * 13 + [hbm],
        out_specs=(pl.BlockSpec(memory_space=VMEM),
                   pl.BlockSpec(memory_space=VMEM)),
        scratch_shapes=[pltpu.VMEM((Np, Np), BF16),
                        pltpu.SemaphoreType.DMA],
        compiler_params=pltpu.CompilerParams(vmem_limit_bytes=vmem_limit),
    )(inputs["inv_n"], params["layer_conv_w"], params["layer_conv_b"],
      params["sub_conv_b"],
      inputs["x"], inputs["pool"], inputs["nmask"],
      params["ini_w1"], params["ini_b1"], params["ini_w2"], params["ini_b2"],
      params["gin_w1"], params["gin_b1"], params["gin_w2"], params["gin_b2"],
      params["mha_diff"], params["sub_conv_w"],
      inputs["adj"])

    return pgg[:G, :D], sub[:G, :D]


# --------------------------------- main -------------------------------------

if __name__ == "__main__":
    num_features = 16
    hidden_dim = 32
    num_gc_layers = 3
    times = 1            # -> num_subgraph = 2
    num_graphs = 2
    nodes_per_graph = 12
    N = num_graphs * nodes_per_graph

    key = jax.random.PRNGKey(0)
    kx, kp = jax.random.split(key)

    # node features
    x = jax.random.normal(kx, (N, num_features), F32)

    # deterministic bidirectional ring graph per batch element
    src, dst = [], []
    for g in range(num_graphs):
        base = g * nodes_per_graph
        for i in range(nodes_per_graph):
            j = (i + 1) % nodes_per_graph
            src += [base + i, base + j]
            dst += [base + j, base + i]
    edge_index = jnp.array([src, dst], dtype=jnp.int32)        # [2, E]
    batch = jnp.repeat(jnp.arange(num_graphs, dtype=jnp.int32), nodes_per_graph)

    params = init_params(kp, num_features, hidden_dim, num_gc_layers, times)
    inputs = prepare_graph_inputs(x, edge_index, batch, num_graphs, params)

    pos_global_graph, sampling_subgraph = graph_enhance_encoder(inputs, params)
    jax.block_until_ready((pos_global_graph, sampling_subgraph))

    assert pos_global_graph.shape == (num_graphs, hidden_dim)
    assert sampling_subgraph.shape == (num_graphs, hidden_dim)
    print("KERNEL_OK")
</pallas_src>

<mosaic_0001>
module attributes {stable_mosaic.version = 11 : i64} {
  func.func @encoder_fused_kernel(%arg0: memref<1xf32, #tpu.memory_space<smem>>, %arg1: memref<3xf32, #tpu.memory_space<smem>>, %arg2: memref<1xf32, #tpu.memory_space<smem>>, %arg3: memref<1xf32, #tpu.memory_space<smem>>, %arg4: memref<128x128xf32, #tpu.memory_space<vmem>>, %arg5: memref<8x128xf32, #tpu.memory_space<vmem>>, %arg6: memref<128x1xf32, #tpu.memory_space<vmem>>, %arg7: memref<128x128xf32, #tpu.memory_space<vmem>>, %arg8: memref<1x128xf32, #tpu.memory_space<vmem>>, %arg9: memref<128x128xf32, #tpu.memory_space<vmem>>, %arg10: memref<1x128xf32, #tpu.memory_space<vmem>>, %arg11: memref<3x128x128xf32, #tpu.memory_space<vmem>>, %arg12: memref<3x1x128xf32, #tpu.memory_space<vmem>>, %arg13: memref<3x128x128xf32, #tpu.memory_space<vmem>>, %arg14: memref<3x1x128xf32, #tpu.memory_space<vmem>>, %arg15: memref<128x128xf32, #tpu.memory_space<vmem>>, %arg16: memref<1x128xf32, #tpu.memory_space<vmem>>, %arg17: memref<128x128xbf16, #tpu.memory_space<any>>, %arg18: memref<8x128xf32, #tpu.memory_space<vmem>>, %arg19: memref<8x128xf32, #tpu.memory_space<vmem>>, %arg20: memref<128x128xbf16, #tpu.memory_space<vmem>>, %arg21: memref<!tpu.dma_semaphore, #tpu.memory_space<semaphore_mem>>) attributes {dimension_semantics = [], scalar_prefetch = 0 : i64, scratch_operands = 2 : i64, tpu.core_type = #tpu.core_type<tc>} {
    tpu.enqueue_dma source(%arg17 : memref<128x128xbf16, #tpu.memory_space<any>>) target(%arg20 : memref<128x128xbf16, #tpu.memory_space<vmem>>) target_semaphore(%arg21 : memref<!tpu.dma_semaphore, #tpu.memory_space<semaphore_mem>>)
    %c0 = arith.constant 0 : index
    %c0_0 = arith.constant 0 : index
    %0 = vector.load %arg6[%c0, %c0_0] : memref<128x1xf32, #tpu.memory_space<vmem>>, vector<128x1xf32>
    %c0_1 = arith.constant 0 : index
    %1 = memref.load %arg0[%c0_1] : memref<1xf32, #tpu.memory_space<smem>>
    %c0_2 = arith.constant 0 : index
    %c0_3 = arith.constant 0 : index
    %2 = vector.load %arg4[%c0_2, %c0_3] : memref<128x128xf32, #tpu.memory_space<vmem>>, vector<128x128xf32>
    %c0_4 = arith.constant 0 : index
    %c0_5 = arith.constant 0 : index
    %3 = vector.load %arg7[%c0_4, %c0_5] : memref<128x128xf32, #tpu.memory_space<vmem>>, vector<128x128xf32>
    %cst = arith.constant dense<0.000000e+00> : vector<128x128xf32>
    %4 = tpu.matmul %2, %3, %cst {dimension_numbers = #tpu.dot_dimension_numbers<[1], [0], [0], [1], [0, 0, 1, 1], [], []>} : vector<128x128xf32>, vector<128x128xf32>, vector<128x128xf32> -> vector<128x128xf32>
    %c0_6 = arith.constant 0 : index
    %c0_7 = arith.constant 0 : index
    %5 = vector.load %arg8[%c0_6, %c0_7] : memref<1x128xf32, #tpu.memory_space<vmem>>, vector<1x128xf32>
    %6 = vector.broadcast %5 : vector<1x128xf32> to vector<128x128xf32>
    %7 = arith.addf %4, %6 : vector<128x128xf32>
    %cst_8 = arith.constant 0.000000e+00 : f32
    %8 = vector.broadcast %cst_8 : f32 to vector<128x128xf32>
    %9 = arith.maximumf %7, %8 : vector<128x128xf32>
    %c0_9 = arith.constant 0 : index
    %c0_10 = arith.constant 0 : index
    %10 = vector.load %arg9[%c0_9, %c0_10] : memref<128x128xf32, #tpu.memory_space<vmem>>, vector<128x128xf32>
    %cst_11 = arith.constant dense<0.000000e+00> : vector<128x128xf32>
    %11 = tpu.matmul %9, %10, %cst_11 {dimension_numbers = #tpu.dot_dimension_numbers<[1], [0], [0], [1], [0, 0, 1, 1], [], []>} : vector<128x128xf32>, vector<128x128xf32>, vector<128x128xf32> -> vector<128x128xf32>
    %c0_12 = arith.constant 0 : index
    %c0_13 = arith.constant 0 : index
    %12 = vector.load %arg10[%c0_12, %c0_13] : memref<1x128xf32, #tpu.memory_space<vmem>>, vector<1x128xf32>
    %13 = vector.broadcast %12 : vector<1x128xf32> to vector<128x128xf32>
    %14 = arith.addf %11, %13 : vector<128x128xf32>
    %15 = vector.broadcast %0 : vector<128x1xf32> to vector<128x128xf32>
    %16 = arith.mulf %14, %15 : vector<128x128xf32>
    tpu.wait_dma2 semaphore(%arg21 : memref<!tpu.dma_semaphore, #tpu.memory_space<semaphore_mem>>) src(%arg17 : memref<128x128xbf16, #tpu.memory_space<any>>) dst(%arg20 : memref<128x128xbf16, #tpu.memory_space<vmem>>)
    %c0_14 = arith.constant 0 : index
    %c0_15 = arith.constant 0 : index
    %17 = vector.load %arg20[%c0_14, %c0_15] : memref<128x128xbf16, #tpu.memory_space<vmem>>, vector<128x128xbf16>
    %cst_16 = arith.constant 0.000000e+00 : f32
    %18 = vector.broadcast %cst_16 : f32 to vector<128x128xf32>
    %19 = arith.truncf %16 : vector<128x128xf32> to vector<128x128xbf16>
    %cst_17 = arith.constant dense<0.000000e+00> : vector<128x128xf32>
    %20 = tpu.matmul %17, %19, %cst_17 {dimension_numbers = #tpu.dot_dimension_numbers<[1], [0], [0], [1], [0, 0, 1, 1], [], []>} : vector<128x128xbf16>, vector<128x128xbf16>, vector<128x128xf32> -> vector<128x128xf32>
    %c0_18 = arith.constant 0 : index
    %c0_19 = arith.constant 0 : index
    %c0_20 = arith.constant 0 : index
    %21 = vector.load %arg11[%c0_18, %c0_19, %c0_20] : memref<3x128x128xf32, #tpu.memory_space<vmem>>, vector<1x128x128xf32>
    %22 = vector.shape_cast %21 : vector<1x128x128xf32> to vector<128x128xf32>
    %cst_21 = arith.constant dense<0.000000e+00> : vector<128x128xf32>
    %23 = tpu.matmul %20, %22, %cst_21 {dimension_numbers = #tpu.dot_dimension_numbers<[1], [0], [0], [1], [0, 0, 1, 1], [], []>} : vector<128x128xf32>, vector<128x128xf32>, vector<128x128xf32> -> vector<128x128xf32>
    %c0_22 = arith.constant 0 : index
    %c0_23 = arith.constant 0 : index
    %c0_24 = arith.constant 0 : index
    %24 = vector.load %arg12[%c0_22, %c0_23, %c0_24] : memref<3x1x128xf32, #tpu.memory_space<vmem>>, vector<1x1x128xf32>
    %25 = vector.shape_cast %24 : vector<1x1x128xf32> to vector<1x128xf32>
    %26 = vector.broadcast %25 : vector<1x128xf32> to vector<128x128xf32>
    %27 = arith.addf %23, %26 : vector<128x128xf32>
    %cst_25 = arith.constant 0.000000e+00 : f32
    %28 = vector.broadcast %cst_25 : f32 to vector<128x128xf32>
    %29 = arith.maximumf %27, %28 : vector<128x128xf32>
    %c0_26 = arith.constant 0 : index
    %c0_27 = arith.constant 0 : index
    %c0_28 = arith.constant 0 : index
    %30 = vector.load %arg13[%c0_26, %c0_27, %c0_28] : memref<3x128x128xf32, #tpu.memory_space<vmem>>, vector<1x128x128xf32>
    %31 = vector.shape_cast %30 : vector<1x128x128xf32> to vector<128x128xf32>
    %cst_29 = arith.constant dense<0.000000e+00> : vector<128x128xf32>
    %32 = tpu.matmul %29, %31, %cst_29 {dimension_numbers = #tpu.dot_dimension_numbers<[1], [0], [0], [1], [0, 0, 1, 1], [], []>} : vector<128x128xf32>, vector<128x128xf32>, vector<128x128xf32> -> vector<128x128xf32>
    %c0_30 = arith.constant 0 : index
    %c0_31 = arith.constant 0 : index
    %c0_32 = arith.constant 0 : index
    %33 = vector.load %arg14[%c0_30, %c0_31, %c0_32] : memref<3x1x128xf32, #tpu.memory_space<vmem>>, vector<1x1x128xf32>
    %34 = vector.shape_cast %33 : vector<1x1x128xf32> to vector<1x128xf32>
    %35 = vector.broadcast %34 : vector<1x128xf32> to vector<128x128xf32>
    %36 = arith.addf %32, %35 : vector<128x128xf32>
    %cst_33 = arith.constant 0.000000e+00 : f32
    %37 = vector.broadcast %cst_33 : f32 to vector<128x128xf32>
    %38 = arith.maximumf %36, %37 : vector<128x128xf32>
    %39 = vector.broadcast %0 : vector<128x1xf32> to vector<128x128xf32>
    %40 = arith.mulf %38, %39 : vector<128x128xf32>
    %cst_34 = arith.constant dense<0.000000e+00> : vector<128xf32>
    %41 = vector.multi_reduction <add>, %40, %cst_34 [0] : vector<128x128xf32> to vector<128xf32>
    %42 = vector.shape_cast %41 : vector<128xf32> to vector<1x128xf32>
    %43 = arith.mulf %40, %40 : vector<128x128xf32>
    %cst_35 = arith.constant dense<0.000000e+00> : vector<128xf32>
    %44 = vector.multi_reduction <add>, %43, %cst_35 [0] : vector<128x128xf32> to vector<128xf32>
    %45 = vector.shape_cast %44 : vector<128xf32> to vector<1x128xf32>
    %46 = vector.broadcast %1 : f32 to vector<1x128xf32>
    %47 = arith.mulf %42, %46 : vector<1x128xf32>
    %48 = vector.broadcast %1 : f32 to vector<1x128xf32>
    %49 = arith.mulf %45, %48 : vector<1x128xf32>
    %50 = arith.mulf %47, %47 : vector<1x128xf32>
    %51 = arith.subf %49, %50 : vector<1x128xf32>
    %cst_36 = arith.constant 0.000000e+00 : f32
    %52 = vector.broadcast %cst_36 : f32 to vector<1x128xf32>
    %53 = arith.maximumf %51, %52 : vector<1x128xf32>
    %54 = vector.broadcast %47 : vector<1x128xf32> to vector<128x128xf32>
    %55 = arith.subf %40, %54 : vector<128x128xf32>
    %cst_37 = arith.constant 9.99999974E-6 : f32
    %56 = vector.broadcast %cst_37 : f32 to vector<1x128xf32>
    %57 = arith.addf %53, %56 : vector<1x128xf32>
    %58 = math.rsqrt %57 : vector<1x128xf32>
    %59 = vector.broadcast %58 : vector<1x128xf32> to vector<128x128xf32>
    %60 = arith.mulf %55, %59 : vector<128x128xf32>
    %c0_38 = arith.constant 0 : index
    %61 = memref.load %arg1[%c0_38] : memref<3xf32, #tpu.memory_space<smem>>
    %62 = vector.broadcast %61 : f32 to vector<128x128xf32>
    %63 = arith.mulf %62, %60 : vector<128x128xf32>
    %64 = arith.addf %18, %63 : vector<128x128xf32>
    %65 = arith.truncf %60 : vector<128x128xf32> to vector<128x128xbf16>
    %cst_39 = arith.constant dense<0.000000e+00> : vector<128x128xf32>
    %66 = tpu.matmul %17, %65, %cst_39 {dimension_numbers = #tpu.dot_dimension_numbers<[1], [0], [0], [1], [0, 0, 1, 1], [], []>} : vector<128x128xbf16>, vector<128x128xbf16>, vector<128x128xf32> -> vector<128x128xf32>
    %c1 = arith.constant 1 : index
    %c0_40 = arith.constant 0 : index
    %c0_41 = arith.constant 0 : index
    %67 = vector.load %arg11[%c1, %c0_40, %c0_41] : memref<3x128x128xf32, #tpu.memory_space<vmem>>, vector<1x128x128xf32>
    %68 = vector.shape_cast %67 : vector<1x128x128xf32> to vector<128x128xf32>
    %cst_42 = arith.constant dense<0.000000e+00> : vector<128x128xf32>
    %69 = tpu.matmul %66, %68, %cst_42 {dimension_numbers = #tpu.dot_dimension_numbers<[1], [0], [0], [1], [0, 0, 1, 1], [], []>} : vector<128x128xf32>, vector<128x128xf32>, vector<128x128xf32> -> vector<128x128xf32>
    %c1_43 = arith.constant 1 : index
    %c0_44 = arith.constant 0 : index
    %c0_45 = arith.constant 0 : index
    %70 = vector.load %arg12[%c1_43, %c0_44, %c0_45] : memref<3x1x128xf32, #tpu.memory_space<vmem>>, vector<1x1x128xf32>
    %71 = vector.shape_cast %70 : vector<1x1x128xf32> to vector<1x128xf32>
    %72 = vector.broadcast %71 : vector<1x128xf32> to vector<128x128xf32>
    %73 = arith.addf %69, %72 : vector<128x128xf32>
    %cst_46 = arith.constant 0.000000e+00 : f32
    %74 = vector.broadcast %cst_46 : f32 to vector<128x128xf32>
    %75 = arith.maximumf %73, %74 : vector<128x128xf32>
    %c1_47 = arith.constant 1 : index
    %c0_48 = arith.constant 0 : index
    %c0_49 = arith.constant 0 : index
    %76 = vector.load %arg13[%c1_47, %c0_48, %c0_49] : memref<3x128x128xf32, #tpu.memory_space<vmem>>, vector<1x128x128xf32>
    %77 = vector.shape_cast %76 : vector<1x128x128xf32> to vector<128x128xf32>
    %cst_50 = arith.constant dense<0.000000e+00> : vector<128x128xf32>
    %78 = tpu.matmul %75, %77, %cst_50 {dimension_numbers = #tpu.dot_dimension_numbers<[1], [0], [0], [1], [0, 0, 1, 1], [], []>} : vector<128x128xf32>, vector<128x128xf32>, vector<128x128xf32> -> vector<128x128xf32>
    %c1_51 = arith.constant 1 : index
    %c0_52 = arith.constant 0 : index
    %c0_53 = arith.constant 0 : index
    %79 = vector.load %arg14[%c1_51, %c0_52, %c0_53] : memref<3x1x128xf32, #tpu.memory_space<vmem>>, vector<1x1x128xf32>
    %80 = vector.shape_cast %79 : vector<1x1x128xf32> to vector<1x128xf32>
    %81 = vector.broadcast %80 : vector<1x128xf32> to vector<128x128xf32>
    %82 = arith.addf %78, %81 : vector<128x128xf32>
    %cst_54 = arith.constant 0.000000e+00 : f32
    %83 = vector.broadcast %cst_54 : f32 to vector<128x128xf32>
    %84 = arith.maximumf %82, %83 : vector<128x128xf32>
    %85 = vector.broadcast %0 : vector<128x1xf32> to vector<128x128xf32>
    %86 = arith.mulf %84, %85 : vector<128x128xf32>
    %cst_55 = arith.constant dense<0.000000e+00> : vector<128xf32>
    %87 = vector.multi_reduction <add>, %86, %cst_55 [0] : vector<128x128xf32> to vector<128xf32>
    %88 = vector.shape_cast %87 : vector<128xf32> to vector<1x128xf32>
    %89 = arith.mulf %86, %86 : vector<128x128xf32>
    %cst_56 = arith.constant dense<0.000000e+00> : vector<128xf32>
    %90 = vector.multi_reduction <add>, %89, %cst_56 [0] : vector<128x128xf32> to vector<128xf32>
    %91 = vector.shape_cast %90 : vector<128xf32> to vector<1x128xf32>
    %92 = vector.broadcast %1 : f32 to vector<1x128xf32>
    %93 = arith.mulf %88, %92 : vector<1x128xf32>
    %94 = vector.broadcast %1 : f32 to vector<1x128xf32>
    %95 = arith.mulf %91, %94 : vector<1x128xf32>
    %96 = arith.mulf %93, %93 : vector<1x128xf32>
    %97 = arith.subf %95, %96 : vector<1x128xf32>
    %cst_57 = arith.constant 0.000000e+00 : f32
    %98 = vector.broadcast %cst_57 : f32 to vector<1x128xf32>
    %99 = arith.maximumf %97, %98 : vector<1x128xf32>
    %100 = vector.broadcast %93 : vector<1x128xf32> to vector<128x128xf32>
    %101 = arith.subf %86, %100 : vector<128x128xf32>
    %cst_58 = arith.constant 9.99999974E-6 : f32
    %102 = vector.broadcast %cst_58 : f32 to vector<1x128xf32>
    %103 = arith.addf %99, %102 : vector<1x128xf32>
    %104 = math.rsqrt %103 : vector<1x128xf32>
    %105 = vector.broadcast %104 : vector<1x128xf32> to vector<128x128xf32>
    %106 = arith.mulf %101, %105 : vector<128x128xf32>
    %c1_59 = arith.constant 1 : index
    %107 = memref.load %arg1[%c1_59] : memref<3xf32, #tpu.memory_space<smem>>
    %108 = vector.broadcast %107 : f32 to vector<128x128xf32>
    %109 = arith.mulf %108, %106 : vector<128x128xf32>
    %110 = arith.addf %64, %109 : vector<128x128xf32>
    %111 = arith.truncf %106 : vector<128x128xf32> to vector<128x128xbf16>
    %cst_60 = arith.constant dense<0.000000e+00> : vector<128x128xf32>
    %112 = tpu.matmul %17, %111, %cst_60 {dimension_numbers = #tpu.dot_dimension_numbers<[1], [0], [0], [1], [0, 0, 1, 1], [], []>} : vector<128x128xbf16>, vector<128x128xbf16>, vector<128x128xf32> -> vector<128x128xf32>
    %c2 = arith.constant 2 : index
    %c0_61 = arith.constant 0 : index
    %c0_62 = arith.constant 0 : index
    %113 = vector.load %arg11[%c2, %c0_61, %c0_62] : memref<3x128x128xf32, #tpu.memory_space<vmem>>, vector<1x128x128xf32>
    %114 = vector.shape_cast %113 : vector<1x128x128xf32> to vector<128x128xf32>
    %cst_63 = arith.constant dense<0.000000e+00> : vector<128x128xf32>
    %115 = tpu.matmul %112, %114, %cst_63 {dimension_numbers = #tpu.dot_dimension_numbers<[1], [0], [0], [1], [0, 0, 1, 1], [], []>} : vector<128x128xf32>, vector<128x128xf32>, vector<128x128xf32> -> vector<128x128xf32>
    %c2_64 = arith.constant 2 : index
    %c0_65 = arith.constant 0 : index
    %c0_66 = arith.constant 0 : index
    %116 = vector.load %arg12[%c2_64, %c0_65, %c0_66] : memref<3x1x128xf32, #tpu.memory_space<vmem>>, vector<1x1x128xf32>
    %117 = vector.shape_cast %116 : vector<1x1x128xf32> to vector<1x128xf32>
    %118 = vector.broadcast %117 : vector<1x128xf32> to vector<128x128xf32>
    %119 = arith.addf %115, %118 : vector<128x128xf32>
    %cst_67 = arith.constant 0.000000e+00 : f32
    %120 = vector.broadcast %cst_67 : f32 to vector<128x128xf32>
    %121 = arith.maximumf %119, %120 : vector<128x128xf32>
    %c2_68 = arith.constant 2 : index
    %c0_69 = arith.constant 0 : index
    %c0_70 = arith.constant 0 : index
    %122 = vector.load %arg13[%c2_68, %c0_69, %c0_70] : memref<3x128x128xf32, #tpu.memory_space<vmem>>, vector<1x128x128xf32>
    %123 = vector.shape_cast %122 : vector<1x128x128xf32> to vector<128x128xf32>
    %cst_71 = arith.constant dense<0.000000e+00> : vector<128x128xf32>
    %124 = tpu.matmul %121, %123, %cst_71 {dimension_numbers = #tpu.dot_dimension_numbers<[1], [0], [0], [1], [0, 0, 1, 1], [], []>} : vector<128x128xf32>, vector<128x128xf32>, vector<128x128xf32> -> vector<128x128xf32>
    %c2_72 = arith.constant 2 : index
    %c0_73 = arith.constant 0 : index
    %c0_74 = arith.constant 0 : index
    %125 = vector.load %arg14[%c2_72, %c0_73, %c0_74] : memref<3x1x128xf32, #tpu.memory_space<vmem>>, vector<1x1x128xf32>
    %126 = vector.shape_cast %125 : vector<1x1x128xf32> to vector<1x128xf32>
    %127 = vector.broadcast %126 : vector<1x128xf32> to vector<128x128xf32>
    %128 = arith.addf %124, %127 : vector<128x128xf32>
    %cst_75 = arith.constant 0.000000e+00 : f32
    %129 = vector.broadcast %cst_75 : f32 to vector<128x128xf32>
    %130 = arith.maximumf %128, %129 : vector<128x128xf32>
    %131 = vector.broadcast %0 : vector<128x1xf32> to vector<128x128xf32>
    %132 = arith.mulf %130, %131 : vector<128x128xf32>
    %cst_76 = arith.constant dense<0.000000e+00> : vector<128xf32>
    %133 = vector.multi_reduction <add>, %132, %cst_76 [0] : vector<128x128xf32> to vector<128xf32>
    %134 = vector.shape_cast %133 : vector<128xf32> to vector<1x128xf32>
    %135 = arith.mulf %132, %132 : vector<128x128xf32>
    %cst_77 = arith.constant dense<0.000000e+00> : vector<128xf32>
    %136 = vector.multi_reduction <add>, %135, %cst_77 [0] : vector<128x128xf32> to vector<128xf32>
    %137 = vector.shape_cast %136 : vector<128xf32> to vector<1x128xf32>
    %138 = vector.broadcast %1 : f32 to vector<1x128xf32>
    %139 = arith.mulf %134, %138 : vector<1x128xf32>
    %140 = vector.broadcast %1 : f32 to vector<1x128xf32>
    %141 = arith.mulf %137, %140 : vector<1x128xf32>
    %142 = arith.mulf %139, %139 : vector<1x128xf32>
    %143 = arith.subf %141, %142 : vector<1x128xf32>
    %cst_78 = arith.constant 0.000000e+00 : f32
    %144 = vector.broadcast %cst_78 : f32 to vector<1x128xf32>
    %145 = arith.maximumf %143, %144 : vector<1x128xf32>
    %146 = vector.broadcast %139 : vector<1x128xf32> to vector<128x128xf32>
    %147 = arith.subf %132, %146 : vector<128x128xf32>
    %cst_79 = arith.constant 9.99999974E-6 : f32
    %148 = vector.broadcast %cst_79 : f32 to vector<1x128xf32>
    %149 = arith.addf %145, %148 : vector<1x128xf32>
    %150 = math.rsqrt %149 : vector<1x128xf32>
    %151 = vector.broadcast %150 : vector<1x128xf32> to vector<128x128xf32>
    %152 = arith.mulf %147, %151 : vector<128x128xf32>
    %c2_80 = arith.constant 2 : index
    %153 = memref.load %arg1[%c2_80] : memref<3xf32, #tpu.memory_space<smem>>
    %154 = vector.broadcast %153 : f32 to vector<128x128xf32>
    %155 = arith.mulf %154, %152 : vector<128x128xf32>
    %156 = arith.addf %110, %155 : vector<128x128xf32>
    %c0_81 = arith.constant 0 : index
    %157 = memref.load %arg2[%c0_81] : memref<1xf32, #tpu.memory_space<smem>>
    %158 = vector.broadcast %157 : f32 to vector<128x128xf32>
    %159 = arith.addf %156, %158 : vector<128x128xf32>
    %160 = vector.broadcast %0 : vector<128x1xf32> to vector<128x128xf32>
    %161 = arith.mulf %159, %160 : vector<128x128xf32>
    %c0_82 = arith.constant 0 : index
    %c0_83 = arith.constant 0 : index
    %162 = vector.load %arg15[%c0_82, %c0_83] : memref<128x128xf32, #tpu.memory_space<vmem>>, vector<128x128xf32>
    %cst_84 = arith.constant dense<0.000000e+00> : vector<128x128xf32>
    %163 = tpu.matmul %161, %162, %cst_84 {dimension_numbers = #tpu.dot_dimension_numbers<[1], [0], [0], [1], [0, 0, 1, 1], [], []>} : vector<128x128xf32>, vector<128x128xf32>, vector<128x128xf32> -> vector<128x128xf32>
    %cst_85 = arith.constant 0.000000e+00 : f32
    %164 = vector.broadcast %cst_85 : f32 to vector<128x128xf32>
    %165 = arith.cmpf oge, %163, %164 : vector<128x128xf32>
    %166 = arith.extui %165 : vector<128x128xi1> to vector<128x128xi32>
    %167 = arith.sitofp %166 : vector<128x128xi32> to vector<128x128xf32>
    %c0_86 = arith.constant 0 : index
    %c0_87 = arith.constant 0 : index
    %168 = vector.load %arg16[%c0_86, %c0_87] : memref<1x128xf32, #tpu.memory_space<vmem>>, vector<1x128xf32>
    %169 = vector.broadcast %168 : vector<1x128xf32> to vector<128x128xf32>
    %170 = arith.mulf %167, %169 : vector<128x128xf32>
    %cst_88 = arith.constant dense<0.000000e+00> : vector<128xf32>
    %171 = vector.multi_reduction <add>, %170, %cst_88 [1] : vector<128x128xf32> to vector<128xf32>
    %172 = vector.shape_cast %171 : vector<128xf32> to vector<128x1xf32>
    %173 = vector.broadcast %172 : vector<128x1xf32> to vector<128x128xf32>
    %174 = arith.mulf %161, %173 : vector<128x128xf32>
    %c0_89 = arith.constant 0 : index
    %175 = memref.load %arg3[%c0_89] : memref<1xf32, #tpu.memory_space<smem>>
    %176 = vector.broadcast %175 : f32 to vector<128x128xf32>
    %177 = arith.addf %174, %176 : vector<128x128xf32>
    %c0_90 = arith.constant 0 : index
    %c0_91 = arith.constant 0 : index
    %178 = vector.load %arg5[%c0_90, %c0_91] : memref<8x128xf32, #tpu.memory_space<vmem>>, vector<8x128xf32>
    %179 = tpu.concatenate %161, %177 in 1 : vector<128x128xf32>, vector<128x128xf32> -> vector<128x256xf32>
    %cst_92 = arith.constant dense<0.000000e+00> : vector<8x256xf32>
    %180 = tpu.matmul %178, %179, %cst_92 {dimension_numbers = #tpu.dot_dimension_numbers<[1], [0], [0], [1], [0, 0, 1, 1], [], []>} : vector<8x128xf32>, vector<128x256xf32>, vector<8x256xf32> -> vector<8x256xf32>
    %181 = vector.extract_strided_slice %180 {offsets = [0, 0], sizes = [8, 128], strides = [1, 1]} : vector<8x256xf32> to vector<8x128xf32>
    %c0_93 = arith.constant 0 : index
    %c0_94 = arith.constant 0 : index
    %182 = vector.load %arg18[%c0_93, %c0_94] : memref<8x128xf32, #tpu.memory_space<vmem>>, vector<8x128xf32>
    tpu.vector_store %arg18[%c0_93, %c0_94], %181 {strides = array<i32>} : memref<8x128xf32, #tpu.memory_space<vmem>>, vector<8x128xf32>,
    %183 = vector.extract_strided_slice %180 {offsets = [0, 128], sizes = [8, 128], strides = [1, 1]} : vector<8x256xf32> to vector<8x128xf32>
    %c0_95 = arith.constant 0 : index
    %c0_96 = arith.constant 0 : index
    %184 = vector.load %arg19[%c0_95, %c0_96] : memref<8x128xf32, #tpu.memory_space<vmem>>, vector<8x128xf32>
    tpu.vector_store %arg19[%c0_95, %c0_96], %183 {strides = array<i32>} : memref<8x128xf32, #tpu.memory_space<vmem>>, vector<8x128xf32>,
    return
  }
}

</mosaic_0001>

<llo_original>
// kernel: tpu_custom_call.1
$region0: #{tpu_custom_call.1}
  #allocation0 [shape = 'u32[]', space=smem, size = 0x4, offset = 0x4, fixed_abs, tag = 'smem constant byte address 0x4 - core index']
  #allocation1 [shape = 'u32[144,128]{1,0:T(1,128)}', space=vmem, size = 0x12000, scoped, tag = 'internal scratch']
  #allocation2 [shape = 'bf16[128,128]{1,0:T(8,128)(2,1)}', space=vmem, size = 0x8000, scoped, tag = 'scratch operand']
  #allocation3 [shape = 's32[1]{0}', space=sflag, size = 0x4, scoped, tag = 'scratch operand']
  #allocation4 [shape = 'f32[1]{0:T(128)S(6)}', space=smem, size = 0x200, scoped, tag = 'scoped memory for tpu_custom_call.1']
  #allocation5 [shape = 'f32[1]{0:T(128)S(6)}', space=smem, size = 0x200, scoped, tag = 'scoped memory for tpu_custom_call.1']
  #allocation6 [shape = 'f32[1]{0:T(128)S(6)}', space=smem, size = 0x200, scoped, tag = 'scoped memory for tpu_custom_call.1']
  #allocation21 [shape = 's32[]', space=sflag, size = 0x4, offset = 0, fixed_abs, tag = 'sflag constant byte address 0x0 - dummy sync flag']
  #allocation22 [shape = 's32[]', space=sflag, size = 0x4, offset = 0, fixed_abs, tag = 'sflag constant byte address 0x0 - dummy sync flag']
  #allocation23 [shape = 'u32[]', space=smem, size = 0x4, offset = 0x44, fixed_abs, tag = 'smem constant byte address 0x44 - assertion arg 0']
  #allocation24 [shape = 'u32[]', space=smem, size = 0x4, offset = 0x48, fixed_abs, tag = 'smem constant byte address 0x48 - assertion arg 1']
  %s0 = inlined_call_operand.<no memory space> [shape: f32[1], index: 0, kind: input, shape index: {}]
  %s1 = inlined_call_operand.hbm [shape: f32[3], index: 1, kind: input, shape index: {}]
  %s2 = inlined_call_operand.<no memory space> [shape: f32[1], index: 2, kind: input, shape index: {}]
  %s3 = inlined_call_operand.<no memory space> [shape: f32[1], index: 3, kind: input, shape index: {}]
  %s4 = inlined_call_operand.vmem [shape: f32[128,128], index: 4, kind: input, shape index: {}]
  %s5 = inlined_call_operand.vmem [shape: f32[8,128], index: 5, kind: input, shape index: {}]
  %s6 = inlined_call_operand.vmem [shape: f32[128,1], index: 6, kind: input, shape index: {}]
  %s7 = inlined_call_operand.hbm [shape: f32[128,128], index: 7, kind: input, shape index: {}]
  %s8 = inlined_call_operand.vmem [shape: f32[1,128], index: 8, kind: input, shape index: {}]
  %s9 = inlined_call_operand.hbm [shape: f32[128,128], index: 9, kind: input, shape index: {}]
  %s10 = inlined_call_operand.vmem [shape: f32[1,128], index: 10, kind: input, shape index: {}]
  %s11 = inlined_call_operand.hbm [shape: f32[3,128,128], index: 11, kind: input, shape index: {}]
  %s12 = inlined_call_operand.vmem [shape: f32[3,1,128], index: 12, kind: input, shape index: {}]
  %s13 = inlined_call_operand.hbm [shape: f32[3,128,128], index: 13, kind: input, shape index: {}]
  %s14 = inlined_call_operand.vmem [shape: f32[3,1,128], index: 14, kind: input, shape index: {}]
  %s15 = inlined_call_operand.hbm [shape: f32[128,128], index: 15, kind: input, shape index: {}]
  %s16 = inlined_call_operand.vmem [shape: f32[1,128], index: 16, kind: input, shape index: {}]
  %s17 = inlined_call_operand.hbm [shape: bf16[128,128], index: 17, kind: input, shape index: {}]
  %s18 = inlined_call_operand.hbm [shape: f32[8,128], index: 18, kind: output, shape index: {0}]
  %s19 = inlined_call_operand.hbm [shape: f32[8,128], index: 19, kind: output, shape index: {1}]
  %20 = xla_tuple %s18, %s19
  %s21 = sld [smem:[#allocation0]]
  $region114: #{tpu_custom_call.1} parent=0
    _
  %s23 = ssub.s32 1, %s21
  %s24 = scalar_select 0, %s23, %s21
  %25 = sst [smem:[#allocation4]] %s0
  %26 = sst [smem:[#allocation5]] %s2
  %27 = sst [smem:[#allocation6]] %s3
  $region1: #{tpu_custom_call.1} parent=0
    #allocation7 [shape = 'u8[512]{0}', space=smem, size = 0x200, scoped, tag = 'input window, operand 1, single buffered']
    #allocation8 [shape = 's32[1]{0}', space=sflag, size = 0x4, scoped, tag = 'scoped memory for tpu_custom_call.1']
    #allocation9 [shape = 's32[1]{0}', space=sflag, size = 0x4, scoped, tag = 'scoped memory for tpu_custom_call.1']
    #allocation10 [shape = 's32[1]{0}', space=sflag, size = 0x4, scoped, tag = 'scoped memory for tpu_custom_call.1']
    #allocation11 [shape = 'u8[65536]{0}', space=vmem, size = 0x10000, scoped, tag = 'input window, operand 7, single buffered']
    #allocation12 [shape = 'u8[65536]{0}', space=vmem, size = 0x10000, scoped, tag = 'input window, operand 9, single buffered']
    #allocation13 [shape = 's32[1]{0}', space=sflag, size = 0x4, scoped, tag = 'scoped memory for tpu_custom_call.1']
    #allocation14 [shape = 'u8[196608]{0}', space=vmem, size = 0x30000, scoped, tag = 'input window, operand 11, single buffered']
    #allocation15 [shape = 'u8[196608]{0}', space=vmem, size = 0x30000, scoped, tag = 'input window, operand 13, single buffered']
    #allocation16 [shape = 's32[1]{0}', space=sflag, size = 0x4, scoped, tag = 'scoped memory for tpu_custom_call.1']
    #allocation17 [shape = 'u8[65536]{0}', space=vmem, size = 0x10000, scoped, tag = 'input window, operand 15, single buffered']
    #allocation18 [shape = 'u8[4096]{0}', space=vmem, size = 0x1000, scoped, tag = 'output window, operand 0, single buffered']
    #allocation19 [shape = 'u8[4096]{0}', space=vmem, size = 0x1000, scoped, tag = 'output window, operand 1, single buffered']
    #allocation20 [shape = 's32[1]{0}', space=sflag, size = 0x4, scoped, tag = 'scoped memory for tpu_custom_call.1']
    %28 = vsyncpa [#allocation10], 0
    %29 = vsyncpa [#allocation8], 0
    %30 = vsyncpa [#allocation13], 0
    %31 = vsyncpa [#allocation16], 0
    %32 = vsyncpa [#allocation9], 0
    %33 = vsyncpa [#allocation20], 0
    // Predicated region
    $region2: #{tpu_custom_call.1} parent=1 // pred_check
      _
    $region3: #{tpu_custom_call.1} parent=1 // pred_check_branch
      %35 = sbr.rel (0) target = $region5
    $region4: #{tpu_custom_call.1} parent=1 // pred_region
      _
    $region5: #{tpu_custom_call.1} parent=1 // pred_fallthru
      _
    // Predicated region
    $region6: #{tpu_custom_call.1} parent=1 // pred_check
      _
    $region7: #{tpu_custom_call.1} parent=1 // pred_check_branch
      %37 = sbr.rel (0) target = $region9
    $region8: #{tpu_custom_call.1} parent=1 // pred_region
      %s39 = ssub.s32 16, 16
      %40 = vsyncadd [#allocation10], %s39
      %43 = dma.hbm_to_smem %s1, 16, [#allocation7], [#allocation10]
    $region9: #{tpu_custom_call.1} parent=1 // pred_fallthru
      _
    // Predicated region
    $region10: #{tpu_custom_call.1} parent=1 // pred_check
      _
    $region11: #{tpu_custom_call.1} parent=1 // pred_check_branch
      %45 = sbr.rel (0) target = $region13
    $region12: #{tpu_custom_call.1} parent=1 // pred_region
      _
    $region13: #{tpu_custom_call.1} parent=1 // pred_fallthru
      _
    // Predicated region
    $region14: #{tpu_custom_call.1} parent=1 // pred_check
      _
    $region15: #{tpu_custom_call.1} parent=1 // pred_check_branch
      %47 = sbr.rel (0) target = $region17
    $region16: #{tpu_custom_call.1} parent=1 // pred_region
      _
    $region17: #{tpu_custom_call.1} parent=1 // pred_fallthru
      _
    // Predicated region
    $region18: #{tpu_custom_call.1} parent=1 // pred_check
      _
    $region19: #{tpu_custom_call.1} parent=1 // pred_check_branch
      %49 = sbr.rel (0) target = $region21
    $region20: #{tpu_custom_call.1} parent=1 // pred_region
      _
    $region21: #{tpu_custom_call.1} parent=1 // pred_fallthru
      _
    // Predicated region
    $region22: #{tpu_custom_call.1} parent=1 // pred_check
      _
    $region23: #{tpu_custom_call.1} parent=1 // pred_check_branch
      %51 = sbr.rel (0) target = $region25
    $region24: #{tpu_custom_call.1} parent=1 // pred_region
      _
    $region25: #{tpu_custom_call.1} parent=1 // pred_fallthru
      _
    // Predicated region
    $region26: #{tpu_custom_call.1} parent=1 // pred_check
      _
    $region27: #{tpu_custom_call.1} parent=1 // pred_check_branch
      %53 = sbr.rel (0) target = $region29
    $region28: #{tpu_custom_call.1} parent=1 // pred_region
      _
    $region29: #{tpu_custom_call.1} parent=1 // pred_fallthru
      _
    // Predicated region
    $region30: #{tpu_custom_call.1} parent=1 // pred_check
      _
    $region31: #{tpu_custom_call.1} parent=1 // pred_check_branch
      %55 = sbr.rel (0) target = $region33
    $region32: #{tpu_custom_call.1} parent=1 // pred_region
      %s57 = ssub.s32 2048, 2048
      %58 = vsyncadd [#allocation8], %s57
      %s59 = sshll.u32 [#allocation11], 4
      %s60 = int_to_ptr.vmem [resolvable:$true] %s59
      %65 = dma.hbm_to_vmem [thread:$0]  %s7, 2048, %s60, [#allocation8], 128, 128, 8
    $region33: #{tpu_custom_call.1} parent=1 // pred_fallthru
      _
    // Predicated region
    $region34: #{tpu_custom_call.1} parent=1 // pred_check
      _
    $region35: #{tpu_custom_call.1} parent=1 // pred_check_branch
      %67 = sbr.rel (0) target = $region37
    $region36: #{tpu_custom_call.1} parent=1 // pred_region
      _
    $region37: #{tpu_custom_call.1} parent=1 // pred_fallthru
      _
    // Predicated region
    $region38: #{tpu_custom_call.1} parent=1 // pred_check
      _
    $region39: #{tpu_custom_call.1} parent=1 // pred_check_branch
      %69 = sbr.rel (0) target = $region41
    $region40: #{tpu_custom_call.1} parent=1 // pred_region
      %s71 = ssub.s32 2048, 2048
      %72 = vsyncadd [#allocation13], %s71
      %s73 = sshll.u32 [#allocation12], 4
      %s74 = int_to_ptr.vmem [resolvable:$true] %s73
      %79 = dma.hbm_to_vmem [thread:$0]  %s9, 2048, %s74, [#allocation13], 128, 128, 8
    $region41: #{tpu_custom_call.1} parent=1 // pred_fallthru
      _
    // Predicated region
    $region42: #{tpu_custom_call.1} parent=1 // pred_check
      _
    $region43: #{tpu_custom_call.1} parent=1 // pred_check_branch
      %81 = sbr.rel (0) target = $region45
    $region44: #{tpu_custom_call.1} parent=1 // pred_region
      _
    $region45: #{tpu_custom_call.1} parent=1 // pred_fallthru
      _
    // Predicated region
    $region46: #{tpu_custom_call.1} parent=1 // pred_check
      _
    $region47: #{tpu_custom_call.1} parent=1 // pred_check_branch
      %83 = sbr.rel (0) target = $region49
    $region48: #{tpu_custom_call.1} parent=1 // pred_region
      %s85 = ssub.s32 6144, 6144
      %86 = vsyncadd [#allocation13], %s85
      %s87 = sshll.u32 [#allocation14], 4
      %s88 = int_to_ptr.vmem [resolvable:$true] %s87
      %93 = dma.hbm_to_vmem [thread:$0]  %s11, 6144, %s88, [#allocation13], 128, 128, 8
    $region49: #{tpu_custom_call.1} parent=1 // pred_fallthru
      _
    // Predicated region
    $region50: #{tpu_custom_call.1} parent=1 // pred_check
      _
    $region51: #{tpu_custom_call.1} parent=1 // pred_check_branch
      %95 = sbr.rel (0) target = $region53
    $region52: #{tpu_custom_call.1} parent=1 // pred_region
      _
    $region53: #{tpu_custom_call.1} parent=1 // pred_fallthru
      _
    // Predicated region
    $region54: #{tpu_custom_call.1} parent=1 // pred_check
      _
    $region55: #{tpu_custom_call.1} parent=1 // pred_check_branch
      %97 = sbr.rel (0) target = $region57
    $region56: #{tpu_custom_call.1} parent=1 // pred_region
      %s99 = ssub.s32 6144, 6144
      %100 = vsyncadd [#allocation16], %s99
      %s101 = sshll.u32 [#allocation15], 4
      %s102 = int_to_ptr.vmem [resolvable:$true] %s101
      %107 = dma.hbm_to_vmem [thread:$0]  %s13, 6144, %s102, [#allocation16], 128, 128, 8
    $region57: #{tpu_custom_call.1} parent=1 // pred_fallthru
      _
    // Predicated region
    $region58: #{tpu_custom_call.1} parent=1 // pred_check
      _
    $region59: #{tpu_custom_call.1} parent=1 // pred_check_branch
      %109 = sbr.rel (0) target = $region61
    $region60: #{tpu_custom_call.1} parent=1 // pred_region
      _
    $region61: #{tpu_custom_call.1} parent=1 // pred_fallthru
      _
    // Predicated region
    $region62: #{tpu_custom_call.1} parent=1 // pred_check
      _
    $region63: #{tpu_custom_call.1} parent=1 // pred_check_branch
      %111 = sbr.rel (0) target = $region65
    $region64: #{tpu_custom_call.1} parent=1 // pred_region
      %s113 = ssub.s32 2048, 2048
      %114 = vsyncadd [#allocation16], %s113
      %s115 = sshll.u32 [#allocation17], 4
      %s116 = int_to_ptr.vmem [resolvable:$true] %s115
      %121 = dma.hbm_to_vmem [thread:$0]  %s15, 2048, %s116, [#allocation16], 128, 128, 8
    $region65: #{tpu_custom_call.1} parent=1 // pred_fallthru
      _
    // Predicated region
    $region66: #{tpu_custom_call.1} parent=1 // pred_check
      _
    $region67: #{tpu_custom_call.1} parent=1 // pred_check_branch
      %123 = sbr.rel (0) target = $region69
    $region68: #{tpu_custom_call.1} parent=1 // pred_region
      _
    $region69: #{tpu_custom_call.1} parent=1 // pred_fallthru
      _
    // Predicated region
    $region70: #{tpu_custom_call.1} parent=1 // pred_check
      _
    $region71: #{tpu_custom_call.1} parent=1 // pred_check_branch
      %125 = sbr.rel (0) target = $region73
    $region72: #{tpu_custom_call.1} parent=1 // pred_region
      %126 = dma.done [#allocation10], 16
    $region73: #{tpu_custom_call.1} parent=1 // pred_fallthru
      _
    // Predicated region
    $region74: #{tpu_custom_call.1} parent=1 // pred_check
      _
    $region75: #{tpu_custom_call.1} parent=1 // pred_check_branch
      %128 = sbr.rel (0) target = $region77
    $region76: #{tpu_custom_call.1} parent=1 // pred_region
      %129 = dma.done [#allocation8], 2048
    $region77: #{tpu_custom_call.1} parent=1 // pred_fallthru
      _
    // Predicated region
    $region78: #{tpu_custom_call.1} parent=1 // pred_check
      _
    $region79: #{tpu_custom_call.1} parent=1 // pred_check_branch
      %131 = sbr.rel (0) target = $region81
    $region80: #{tpu_custom_call.1} parent=1 // pred_region
      %132 = dma.done [#allocation13], 2048
    $region81: #{tpu_custom_call.1} parent=1 // pred_fallthru
      _
    // Predicated region
    $region82: #{tpu_custom_call.1} parent=1 // pred_check
      _
    $region83: #{tpu_custom_call.1} parent=1 // pred_check_branch
      %134 = sbr.rel (0) target = $region85
    $region84: #{tpu_custom_call.1} parent=1 // pred_region
      %135 = dma.done [#allocation13], 6144
    $region85: #{tpu_custom_call.1} parent=1 // pred_fallthru
      _
    // Predicated region
    $region86: #{tpu_custom_call.1} parent=1 // pred_check
      _
    $region87: #{tpu_custom_call.1} parent=1 // pred_check_branch
      %137 = sbr.rel (0) target = $region89
    $region88: #{tpu_custom_call.1} parent=1 // pred_region
      %138 = dma.done [#allocation16], 6144
    $region89: #{tpu_custom_call.1} parent=1 // pred_fallthru
      _
    // Predicated region
    $region90: #{tpu_custom_call.1} parent=1 // pred_check
      _
    $region91: #{tpu_custom_call.1} parent=1 // pred_check_branch
      %140 = sbr.rel (0) target = $region93
    $region92: #{tpu_custom_call.1} parent=1 // pred_region
      %141 = dma.done [#allocation16], 2048
    $region93: #{tpu_custom_call.1} parent=1 // pred_fallthru
      _
    %142 = sfence
    // Predicated region
    $region94: #{tpu_custom_call.1} parent=1 // pred_check
      _
    $region95: #{tpu_custom_call.1} parent=1 // pred_check_branch
      %145 = sbr.rel target = $region97
    $region96: #{tpu_custom_call.1} parent=1 // pred_region
      %146 = sst [smem:[#allocation23]] [#allocation22]
      %147 = sst [smem:[#allocation24]] [#allocation21]
    $region97: #{tpu_custom_call.1} parent=1 // pred_fallthru
      _
    %149 = shalt.err (0)
    %s151 = sshll.u32 [#allocation2], 4
    %s152 = int_to_ptr.vmem [resolvable:$true] %s151
    %154 = dma.hbm_to_vmem [thread:$0]  %s17, 1024, %s152, [#allocation3]
    %v155 = vld [vmem:[%s6] sm:$0xff]
    %v156 = vld [vmem:[%s6 + $0x8] sm:$0xff]
    %v157 = vld [vmem:[%s6 + $0x10] sm:$0xff]
    %v158 = vld [vmem:[%s6 + $0x18] sm:$0xff]
    %v159 = vld [vmem:[%s6 + $0x20] sm:$0xff]
    %v160 = vld [vmem:[%s6 + $0x28] sm:$0xff]
    %v161 = vld [vmem:[%s6 + $0x30] sm:$0xff]
    %v162 = vld [vmem:[%s6 + $0x38] sm:$0xff]
    %v163 = vld [vmem:[%s6 + $0x40] sm:$0xff]
    %v164 = vld [vmem:[%s6 + $0x48] sm:$0xff]
    %v165 = vld [vmem:[%s6 + $0x50] sm:$0xff]
    %v166 = vld [vmem:[%s6 + $0x58] sm:$0xff]
    %v167 = vld [vmem:[%s6 + $0x60] sm:$0xff]
    %v168 = vld [vmem:[%s6 + $0x68] sm:$0xff]
    %v169 = vld [vmem:[%s6 + $0x70] sm:$0xff]
    %v170 = vld [vmem:[%s6 + $0x78] sm:$0xff]
    %s171 = sld [smem:[#allocation4]]
    %v172 = vld [vmem:[%s4] sm:$0xff]
    %v173 = vld [vmem:[%s4 + $0x8] sm:$0xff]
    %v174 = vld [vmem:[%s4 + $0x10] sm:$0xff]
    %v175 = vld [vmem:[%s4 + $0x18] sm:$0xff]
    %v176 = vld [vmem:[%s4 + $0x20] sm:$0xff]
    %v177 = vld [vmem:[%s4 + $0x28] sm:$0xff]
    %v178 = vld [vmem:[%s4 + $0x30] sm:$0xff]
    %v179 = vld [vmem:[%s4 + $0x38] sm:$0xff]
    %v180 = vld [vmem:[%s4 + $0x40] sm:$0xff]
    %v181 = vld [vmem:[%s4 + $0x48] sm:$0xff]
    %v182 = vld [vmem:[%s4 + $0x50] sm:$0xff]
    %v183 = vld [vmem:[%s4 + $0x58] sm:$0xff]
    %v184 = vld [vmem:[%s4 + $0x60] sm:$0xff]
    %v185 = vld [vmem:[%s4 + $0x68] sm:$0xff]
    %v186 = vld [vmem:[%s4 + $0x70] sm:$0xff]
    %v187 = vld [vmem:[%s4 + $0x78] sm:$0xff]
    %v188 = vld [vmem:[#allocation11] sm:$0xff]
    %v189 = vld [vmem:[#allocation11 + $0x8] sm:$0xff]
    %v190 = vld [vmem:[#allocation11 + $0x10] sm:$0xff]
    %v191 = vld [vmem:[#allocation11 + $0x18] sm:$0xff]
    %v192 = vld [vmem:[#allocation11 + $0x20] sm:$0xff]
    %v193 = vld [vmem:[#allocation11 + $0x28] sm:$0xff]
    %v194 = vld [vmem:[#allocation11 + $0x30] sm:$0xff]
    %v195 = vld [vmem:[#allocation11 + $0x38] sm:$0xff]
    %v196 = vld [vmem:[#allocation11 + $0x40] sm:$0xff]
    %v197 = vld [vmem:[#allocation11 + $0x48] sm:$0xff]
    %v198 = vld [vmem:[#allocation11 + $0x50] sm:$0xff]
    %v199 = vld [vmem:[#allocation11 + $0x58] sm:$0xff]
    %v200 = vld [vmem:[#allocation11 + $0x60] sm:$0xff]
    %v201 = vld [vmem:[#allocation11 + $0x68] sm:$0xff]
    %v202 = vld [vmem:[#allocation11 + $0x70] sm:$0xff]
    %v203 = vld [vmem:[#allocation11 + $0x78] sm:$0xff]
    %v204 = vld [vmem:[%s8] sm:$0x1]
    %v206 = vlaneseq
    %v207 = vshrl.u32 %v206, 7
    %v208 = vsub.s32 0, %v207
    %v209 = vrot.slane %v204, %v208
    %211 = vmatprep.subr.mxu0 0.0
    %212 = vmatpush1.msra.mxu0 %v203
    %213 = vmatprep.subr.mxu0 0.0
    %214 = vmatpush1.msra.mxu0 %v202
    %215 = vmatprep.subr.mxu0 0.0
    %216 = vmatpush1.msra.mxu0 %v201
    %217 = vmatprep.subr.mxu0 0.0
    %218 = vmatpush1.msra.mxu0 %v200
    %219 = vmatprep.subr.mxu0 0.0
    %220 = vmatpush1.msra.mxu0 %v199
    %221 = vmatprep.subr.mxu0 0.0
    %222 = vmatpush1.msra.mxu0 %v198
    %223 = vmatprep.subr.mxu0 0.0
    %224 = vmatpush1.msra.mxu0 %v197
    %225 = vmatprep.subr.mxu0 0.0
    %226 = vmatpush1.msra.mxu0 %v196
    %227 = vmatprep.subr.mxu0 0.0
    %228 = vmatpush1.msra.mxu0 %v195
    %229 = vmatprep.subr.mxu0 0.0
    %230 = vmatpush1.msra.mxu0 %v194
    %231 = vmatprep.subr.mxu0 0.0
    %232 = vmatpush1.msra.mxu0 %v193
    %233 = vmatprep.subr.mxu0 0.0
    %234 = vmatpush1.msra.mxu0 %v192
    %235 = vmatprep.subr.mxu0 0.0
    %236 = vmatpush1.msra.mxu0 %v191
    %237 = vmatprep.subr.mxu0 0.0
    %238 = vmatpush1.msra.mxu0 %v190
    %239 = vmatprep.subr.mxu0 0.0
    %240 = vmatpush1.msra.mxu0 %v189
    %241 = vmatprep.subr.mxu0 0.0
    %242 = vmatpush1.msra.mxu0 %v188
    %243 = vmatprep.subr.mxu0 0.0
    %244 = vmatpush2.msra.mxu0 0.0
    %245 = vmatprep.subr.mxu0 0.0
    %246 = vmatpush2.msra.mxu0 0.0
    %247 = vmatprep.subr.mxu0 0.0
    %248 = vmatpush2.msra.mxu0 0.0
    %249 = vmatprep.subr.mxu0 0.0
    %250 = vmatpush2.msra.mxu0 0.0
    %251 = vmatprep.subr.mxu0 0.0
    %252 = vmatpush2.msra.mxu0 0.0
    %253 = vmatprep.subr.mxu0 0.0
    %254 = vmatpush2.msra.mxu0 0.0
    %255 = vmatprep.subr.mxu0 0.0
    %256 = vmatpush2.msra.mxu0 0.0
    %257 = vmatprep.subr.mxu0 0.0
    %258 = vmatpush2.msra.mxu0 0.0
    %259 = vmatprep.subr.mxu0 0.0
    %260 = vmatpush2.msra.mxu0 0.0
    %261 = vmatprep.subr.mxu0 0.0
    %262 = vmatpush2.msra.mxu0 0.0
    %263 = vmatprep.subr.mxu0 0.0
    %264 = vmatpush2.msra.mxu0 0.0
    %265 = vmatprep.subr.mxu0 0.0
    %266 = vmatpush2.msra.mxu0 0.0
    %267 = vmatprep.subr.mxu0 0.0
    %268 = vmatpush2.msra.mxu0 0.0
    %269 = vmatprep.subr.mxu0 0.0
    %270 = vmatpush2.msra.mxu0 0.0
    %271 = vmatprep.subr.mxu0 0.0
    %272 = vmatpush2.msra.mxu0 0.0
    %273 = vmatprep.subr.mxu0 0.0
    %274 = vmatpush2.msra.mxu0 0.0
    %275 = vmatprep.mubr.f32.mxu0 0.0
    %276 = vmatmul.mubr.f32.gmra.mxu0 %v172
    %v277 = vpop.f32.mrf.mxu0
    %v278 = vadd.f32 %v209, %v277
    %v279 = vpop.f32.mrf.mxu0
    %280 = vmatprep.mubr.f32.mxu0 0.0
    %281 = vmatmul.mubr.f32.gmra.mxu0 %v173
    %v282 = vpop.f32.mrf.mxu0
    %v283 = vadd.f32 %v209, %v282
    %v284 = vpop.f32.mrf.mxu0
    %285 = vmatprep.mubr.f32.mxu0 0.0
    %286 = vmatmul.mubr.f32.gmra.mxu0 %v174
    %v287 = vpop.f32.mrf.mxu0
    %v288 = vadd.f32 %v209, %v287
    %v289 = vpop.f32.mrf.mxu0
    %290 = vmatprep.mubr.f32.mxu0 0.0
    %291 = vmatmul.mubr.f32.gmra.mxu0 %v175
    %v292 = vpop.f32.mrf.mxu0
    %v293 = vadd.f32 %v209, %v292
    %v294 = vpop.f32.mrf.mxu0
    %295 = vmatprep.mubr.f32.mxu0 0.0
    %296 = vmatmul.mubr.f32.gmra.mxu0 %v176
    %v297 = vpop.f32.mrf.mxu0
    %v298 = vadd.f32 %v209, %v297
    %v299 = vpop.f32.mrf.mxu0
    %300 = vmatprep.mubr.f32.mxu0 0.0
    %301 = vmatmul.mubr.f32.gmra.mxu0 %v177
    %v302 = vpop.f32.mrf.mxu0
    %v303 = vadd.f32 %v209, %v302
    %v304 = vpop.f32.mrf.mxu0
    %305 = vmatprep.mubr.f32.mxu0 0.0
    %306 = vmatmul.mubr.f32.gmra.mxu0 %v178
    %v307 = vpop.f32.mrf.mxu0
    %v308 = vadd.f32 %v209, %v307
    %v309 = vpop.f32.mrf.mxu0
    %310 = vmatprep.mubr.f32.mxu0 0.0
    %311 = vmatmul.mubr.f32.gmra.mxu0 %v179
    %v312 = vpop.f32.mrf.mxu0
    %v313 = vadd.f32 %v209, %v312
    %v314 = vpop.f32.mrf.mxu0
    %315 = vmatprep.mubr.f32.mxu0 0.0
    %316 = vmatmul.mubr.f32.gmra.mxu0 %v180
    %v317 = vpop.f32.mrf.mxu0
    %v318 = vadd.f32 %v209, %v317
    %v319 = vpop.f32.mrf.mxu0
    %320 = vmatprep.mubr.f32.mxu0 0.0
    %321 = vmatmul.mubr.f32.gmra.mxu0 %v181
    %v322 = vpop.f32.mrf.mxu0
    %v323 = vadd.f32 %v209, %v322
    %v324 = vpop.f32.mrf.mxu0
    %325 = vmatprep.mubr.f32.mxu0 0.0
    %326 = vmatmul.mubr.f32.gmra.mxu0 %v182
    %v327 = vpop.f32.mrf.mxu0
    %v328 = vadd.f32 %v209, %v327
    %v329 = vpop.f32.mrf.mxu0
    %330 = vmatprep.mubr.f32.mxu0 0.0
    %331 = vmatmul.mubr.f32.gmra.mxu0 %v183
    %v332 = vpop.f32.mrf.mxu0
    %v333 = vadd.f32 %v209, %v332
    %v334 = vpop.f32.mrf.mxu0
    %335 = vmatprep.mubr.f32.mxu0 0.0
    %336 = vmatmul.mubr.f32.gmra.mxu0 %v184
    %v337 = vpop.f32.mrf.mxu0
    %v338 = vadd.f32 %v209, %v337
    %v339 = vpop.f32.mrf.mxu0
    %340 = vmatprep.mubr.f32.mxu0 0.0
    %341 = vmatmul.mubr.f32.gmra.mxu0 %v185
    %v342 = vpop.f32.mrf.mxu0
    %v343 = vadd.f32 %v209, %v342
    %v344 = vpop.f32.mrf.mxu0
    %345 = vmatprep.mubr.f32.mxu0 0.0
    %346 = vmatmul.mubr.f32.gmra.mxu0 %v186
    %v347 = vpop.f32.mrf.mxu0
    %v348 = vadd.f32 %v209, %v347
    %v349 = vpop.f32.mrf.mxu0
    %350 = vmatprep.mubr.f32.mxu0 0.0
    %351 = vmatmul.mubr.f32.gmra.mxu0 %v187
    %v352 = vpop.f32.mrf.mxu0
    %v353 = vadd.f32 %v209, %v352
    %v354 = vpop.f32.mrf.mxu0
    %355 = vdwg.mxu0
    %v356 = vmax.f32 %v278, 0.0
    %v357 = vmax.f32 %v283, 0.0
    %v358 = vmax.f32 %v288, 0.0
    %v359 = vmax.f32 %v293, 0.0
    %v360 = vmax.f32 %v298, 0.0
    %v361 = vmax.f32 %v303, 0.0
    %v362 = vmax.f32 %v308, 0.0
    %v363 = vmax.f32 %v313, 0.0
    %v364 = vmax.f32 %v318, 0.0
    %v365 = vmax.f32 %v323, 0.0
    %v366 = vmax.f32 %v328, 0.0
    %v367 = vmax.f32 %v333, 0.0
    %v368 = vmax.f32 %v338, 0.0
    %v369 = vmax.f32 %v343, 0.0
    %v370 = vmax.f32 %v348, 0.0
    %v371 = vmax.f32 %v353, 0.0
    %v372 = vld [vmem:[#allocation12] sm:$0xff]
    %v373 = vld [vmem:[#allocation12 + $0x8] sm:$0xff]
    %v374 = vld [vmem:[#allocation12 + $0x10] sm:$0xff]
    %v375 = vld [vmem:[#allocation12 + $0x18] sm:$0xff]
    %v376 = vld [vmem:[#allocation12 + $0x20] sm:$0xff]
    %v377 = vld [vmem:[#allocation12 + $0x28] sm:$0xff]
    %v378 = vld [vmem:[#allocation12 + $0x30] sm:$0xff]
    %v379 = vld [vmem:[#allocation12 + $0x38] sm:$0xff]
    %v380 = vld [vmem:[#allocation12 + $0x40] sm:$0xff]
    %v381 = vld [vmem:[#allocation12 + $0x48] sm:$0xff]
    %v382 = vld [vmem:[#allocation12 + $0x50] sm:$0xff]
    %v383 = vld [vmem:[#allocation12 + $0x58] sm:$0xff]
    %v384 = vld [vmem:[#allocation12 + $0x60] sm:$0xff]
    %v385 = vld [vmem:[#allocation12 + $0x68] sm:$0xff]
    %v386 = vld [vmem:[#allocation12 + $0x70] sm:$0xff]
    %v387 = vld [vmem:[#allocation12 + $0x78] sm:$0xff]
    %v388 = vld [vmem:[%s10] sm:$0x1]
    %v390 = vlaneseq
    %v391 = vshrl.u32 %v390, 7
    %v392 = vsub.s32 0, %v391
    %v393 = vrot.slane %v388, %v392
    %395 = vmatprep.subr.mxu0 0.0
    %396 = vmatpush1.msra.mxu0 %v387
    %397 = vmatprep.subr.mxu0 0.0
    %398 = vmatpush1.msra.mxu0 %v386
    %399 = vmatprep.subr.mxu0 0.0
    %400 = vmatpush1.msra.mxu0 %v385
    %401 = vmatprep.subr.mxu0 0.0
    %402 = vmatpush1.msra.mxu0 %v384
    %403 = vmatprep.subr.mxu0 0.0
    %404 = vmatpush1.msra.mxu0 %v383
    %405 = vmatprep.subr.mxu0 0.0
    %406 = vmatpush1.msra.mxu0 %v382
    %407 = vmatprep.subr.mxu0 0.0
    %408 = vmatpush1.msra.mxu0 %v381
    %409 = vmatprep.subr.mxu0 0.0
    %410 = vmatpush1.msra.mxu0 %v380
    %411 = vmatprep.subr.mxu0 0.0
    %412 = vmatpush1.msra.mxu0 %v379
    %413 = vmatprep.subr.mxu0 0.0
    %414 = vmatpush1.msra.mxu0 %v378
    %415 = vmatprep.subr.mxu0 0.0
    %416 = vmatpush1.msra.mxu0 %v377
    %417 = vmatprep.subr.mxu0 0.0
    %418 = vmatpush1.msra.mxu0 %v376
    %419 = vmatprep.subr.mxu0 0.0
    %420 = vmatpush1.msra.mxu0 %v375
    %421 = vmatprep.subr.mxu0 0.0
    %422 = vmatpush1.msra.mxu0 %v374
    %423 = vmatprep.subr.mxu0 0.0
    %424 = vmatpush1.msra.mxu0 %v373
    %425 = vmatprep.subr.mxu0 0.0
    %426 = vmatpush1.msra.mxu0 %v372
    %427 = vmatprep.subr.mxu0 0.0
    %428 = vmatpush2.msra.mxu0 0.0
    %429 = vmatprep.subr.mxu0 0.0
    %430 = vmatpush2.msra.mxu0 0.0
    %431 = vmatprep.subr.mxu0 0.0
    %432 = vmatpush2.msra.mxu0 0.0
    %433 = vmatprep.subr.mxu0 0.0
    %434 = vmatpush2.msra.mxu0 0.0
    %435 = vmatprep.subr.mxu0 0.0
    %436 = vmatpush2.msra.mxu0 0.0
    %437 = vmatprep.subr.mxu0 0.0
    %438 = vmatpush2.msra.mxu0 0.0
    %439 = vmatprep.subr.mxu0 0.0
    %440 = vmatpush2.msra.mxu0 0.0
    %441 = vmatprep.subr.mxu0 0.0
    %442 = vmatpush2.msra.mxu0 0.0
    %443 = vmatprep.subr.mxu0 0.0
    %444 = vmatpush2.msra.mxu0 0.0
    %445 = vmatprep.subr.mxu0 0.0
    %446 = vmatpush2.msra.mxu0 0.0
    %447 = vmatprep.subr.mxu0 0.0
    %448 = vmatpush2.msra.mxu0 0.0
    %449 = vmatprep.subr.mxu0 0.0
    %450 = vmatpush2.msra.mxu0 0.0
    %451 = vmatprep.subr.mxu0 0.0
    %452 = vmatpush2.msra.mxu0 0.0
    %453 = vmatprep.subr.mxu0 0.0
    %454 = vmatpush2.msra.mxu0 0.0
    %455 = vmatprep.subr.mxu0 0.0
    %456 = vmatpush2.msra.mxu0 0.0
    %457 = vmatprep.subr.mxu0 0.0
    %458 = vmatpush2.msra.mxu0 0.0
    %459 = vmatprep.mubr.f32.mxu0 0.0
    %460 = vmatmul.mubr.f32.gmra.mxu0 %v356
    %v461 = vpop.f32.mrf.mxu0
    %v462 = vadd.f32 %v393, %v461
    %v463 = vpop.f32.mrf.mxu0
    %464 = vmatprep.mubr.f32.mxu0 0.0
    %465 = vmatmul.mubr.f32.gmra.mxu0 %v357
    %v466 = vpop.f32.mrf.mxu0
    %v467 = vadd.f32 %v393, %v466
    %v468 = vpop.f32.mrf.mxu0
    %469 = vmatprep.mubr.f32.mxu0 0.0
    %470 = vmatmul.mubr.f32.gmra.mxu0 %v358
    %v471 = vpop.f32.mrf.mxu0
    %v472 = vadd.f32 %v393, %v471
    %v473 = vpop.f32.mrf.mxu0
    %474 = vmatprep.mubr.f32.mxu0 0.0
    %475 = vmatmul.mubr.f32.gmra.mxu0 %v359
    %v476 = vpop.f32.mrf.mxu0
    %v477 = vadd.f32 %v393, %v476
    %v478 = vpop.f32.mrf.mxu0
    %479 = vmatprep.mubr.f32.mxu0 0.0
    %480 = vmatmul.mubr.f32.gmra.mxu0 %v360
    %v481 = vpop.f32.mrf.mxu0
    %v482 = vadd.f32 %v393, %v481
    %v483 = vpop.f32.mrf.mxu0
    %484 = vmatprep.mubr.f32.mxu0 0.0
    %485 = vmatmul.mubr.f32.gmra.mxu0 %v361
    %v486 = vpop.f32.mrf.mxu0
    %v487 = vadd.f32 %v393, %v486
    %v488 = vpop.f32.mrf.mxu0
    %489 = vmatprep.mubr.f32.mxu0 0.0
    %490 = vmatmul.mubr.f32.gmra.mxu0 %v362
    %v491 = vpop.f32.mrf.mxu0
    %v492 = vadd.f32 %v393, %v491
    %v493 = vpop.f32.mrf.mxu0
    %494 = vmatprep.mubr.f32.mxu0 0.0
    %495 = vmatmul.mubr.f32.gmra.mxu0 %v363
    %v496 = vpop.f32.mrf.mxu0
    %v497 = vadd.f32 %v393, %v496
    %v498 = vpop.f32.mrf.mxu0
    %499 = vmatprep.mubr.f32.mxu0 0.0
    %500 = vmatmul.mubr.f32.gmra.mxu0 %v364
    %v501 = vpop.f32.mrf.mxu0
    %v502 = vadd.f32 %v393, %v501
    %v503 = vpop.f32.mrf.mxu0
    %504 = vmatprep.mubr.f32.mxu0 0.0
    %505 = vmatmul.mubr.f32.gmra.mxu0 %v365
    %v506 = vpop.f32.mrf.mxu0
    %v507 = vadd.f32 %v393, %v506
    %v508 = vpop.f32.mrf.mxu0
    %509 = vmatprep.mubr.f32.mxu0 0.0
    %510 = vmatmul.mubr.f32.gmra.mxu0 %v366
    %v511 = vpop.f32.mrf.mxu0
    %v512 = vadd.f32 %v393, %v511
    %v513 = vpop.f32.mrf.mxu0
    %514 = vmatprep.mubr.f32.mxu0 0.0
    %515 = vmatmul.mubr.f32.gmra.mxu0 %v367
    %v516 = vpop.f32.mrf.mxu0
    %v517 = vadd.f32 %v393, %v516
    %v518 = vpop.f32.mrf.mxu0
    %519 = vmatprep.mubr.f32.mxu0 0.0
    %520 = vmatmul.mubr.f32.gmra.mxu0 %v368
    %v521 = vpop.f32.mrf.mxu0
    %v522 = vadd.f32 %v393, %v521
    %v523 = vpop.f32.mrf.mxu0
    %524 = vmatprep.mubr.f32.mxu0 0.0
    %525 = vmatmul.mubr.f32.gmra.mxu0 %v369
    %v526 = vpop.f32.mrf.mxu0
    %v527 = vadd.f32 %v393, %v526
    %v528 = vpop.f32.mrf.mxu0
    %529 = vmatprep.mubr.f32.mxu0 0.0
    %530 = vmatmul.mubr.f32.gmra.mxu0 %v370
    %v531 = vpop.f32.mrf.mxu0
    %v532 = vadd.f32 %v393, %v531
    %v533 = vpop.f32.mrf.mxu0
    %534 = vmatprep.mubr.f32.mxu0 0.0
    %535 = vmatmul.mubr.f32.gmra.mxu0 %v371
    %v536 = vpop.f32.mrf.mxu0
    %v537 = vadd.f32 %v393, %v536
    %v538 = vpop.f32.mrf.mxu0
    %539 = vdwg.mxu0
    %541 = vset.pattern.permute.xlu0 0
    %542 = vperm.xlu0 %541, %v155
    %v543 = vpop.permute.xlu0 %542
    %546 = vset.pattern.permute.xlu0 0
    %547 = vperm.xlu0 %546, %v156
    %v548 = vpop.permute.xlu0 %547
    %551 = vset.pattern.permute.xlu0 0
    %552 = vperm.xlu0 %551, %v157
    %v553 = vpop.permute.xlu0 %552
    %556 = vset.pattern.permute.xlu0 0
    %557 = vperm.xlu0 %556, %v158
    %v558 = vpop.permute.xlu0 %557
    %561 = vset.pattern.permute.xlu0 0
    %562 = vperm.xlu0 %561, %v159
    %v563 = vpop.permute.xlu0 %562
    %566 = vset.pattern.permute.xlu0 0
    %567 = vperm.xlu0 %566, %v160
    %v568 = vpop.permute.xlu0 %567
    %571 = vset.pattern.permute.xlu0 0
    %572 = vperm.xlu0 %571, %v161
    %v573 = vpop.permute.xlu0 %572
    %576 = vset.pattern.permute.xlu0 0
    %577 = vperm.xlu0 %576, %v162
    %v578 = vpop.permute.xlu0 %577
    %581 = vset.pattern.permute.xlu0 0
    %582 = vperm.xlu0 %581, %v163
    %v583 = vpop.permute.xlu0 %582
    %586 = vset.pattern.permute.xlu0 0
    %587 = vperm.xlu0 %586, %v164
    %v588 = vpop.permute.xlu0 %587
    %591 = vset.pattern.permute.xlu0 0
    %592 = vperm.xlu0 %591, %v165
    %v593 = vpop.permute.xlu0 %592
    %596 = vset.pattern.permute.xlu0 0
    %597 = vperm.xlu0 %596, %v166
    %v598 = vpop.permute.xlu0 %597
    %601 = vset.pattern.permute.xlu0 0
    %602 = vperm.xlu0 %601, %v167
    %v603 = vpop.permute.xlu0 %602
    %606 = vset.pattern.permute.xlu0 0
    %607 = vperm.xlu0 %606, %v168
    %v608 = vpop.permute.xlu0 %607
    %611 = vset.pattern.permute.xlu0 0
    %612 = vperm.xlu0 %611, %v169
    %v613 = vpop.permute.xlu0 %612
    %616 = vset.pattern.permute.xlu0 0
    %617 = vperm.xlu0 %616, %v170
    %v618 = vpop.permute.xlu0 %617
    %v620 = vmul.f32 %v462, %v543
    %v621 = vmul.f32 %v467, %v548
    %v622 = vmul.f32 %v472, %v553
    %v623 = vmul.f32 %v477, %v558
    %v624 = vmul.f32 %v482, %v563
    %v625 = vmul.f32 %v487, %v568
    %v626 = vmul.f32 %v492, %v573
    %v627 = vmul.f32 %v497, %v578
    %v628 = vmul.f32 %v502, %v583
    %v629 = vmul.f32 %v507, %v588
    %v630 = vmul.f32 %v512, %v593
    %v631 = vmul.f32 %v517, %v598
    %v632 = vmul.f32 %v522, %v603
    %v633 = vmul.f32 %v527, %v608
    %v634 = vmul.f32 %v532, %v613
    %v635 = vmul.f32 %v537, %v618
    %s636 = smul.u32 4, 16
    %s637 = smul.u32 %s636, 1
    %s638 = sshll.u32 %s637, 4
    %639 = dma.done [#allocation3], %s638
    %v640 = vld [vmem:[#allocation2] sm:$0xf]
    %v641 = vld [vmem:[#allocation2 + $0x4] sm:$0xf]
    %v642 = vld [vmem:[#allocation2 + $0x8] sm:$0xf]
    %v643 = vld [vmem:[#allocation2 + $0xc] sm:$0xf]
    %v644 = vld [vmem:[#allocation2 + $0x10] sm:$0xf]
    %v645 = vld [vmem:[#allocation2 + $0x14] sm:$0xf]
    %v646 = vld [vmem:[#allocation2 + $0x18] sm:$0xf]
    %v647 = vld [vmem:[#allocation2 + $0x1c] sm:$0xf]
    %v648 = vld [vmem:[#allocation2 + $0x20] sm:$0xf]
    %v649 = vld [vmem:[#allocation2 + $0x24] sm:$0xf]
    %v650 = vld [vmem:[#allocation2 + $0x28] sm:$0xf]
    %v651 = vld [vmem:[#allocation2 + $0x2c] sm:$0xf]
    %v652 = vld [vmem:[#allocation2 + $0x30] sm:$0xf]
    %v653 = vld [vmem:[#allocation2 + $0x34] sm:$0xf]
    %v654 = vld [vmem:[#allocation2 + $0x38] sm:$0xf]
    %v655 = vld [vmem:[#allocation2 + $0x3c] sm:$0xf]
    %v656 = vpack.c.bf16 %v621, %v620
    %v657 = vpack.c.bf16 %v623, %v622
    %v658 = vpack.c.bf16 %v625, %v624
    %v659 = vpack.c.bf16 %v627, %v626
    %v660 = vpack.c.bf16 %v629, %v628
    %v661 = vpack.c.bf16 %v631, %v630
    %v662 = vpack.c.bf16 %v633, %v632
    %v663 = vpack.c.bf16 %v635, %v634
    %v680 = vunpack.c.l.b16 %v640
    %v681 = vunpack.c.l.b16 %v641
    %v682 = vunpack.c.l.b16 %v642
    %v683 = vunpack.c.l.b16 %v643
    %v684 = vunpack.c.l.b16 %v644
    %v685 = vunpack.c.l.b16 %v645
    %v686 = vunpack.c.l.b16 %v646
    %v687 = vunpack.c.l.b16 %v647
    %v688 = vunpack.c.l.b16 %v648
    %v689 = vunpack.c.l.b16 %v649
    %v690 = vunpack.c.l.b16 %v650
    %v691 = vunpack.c.l.b16 %v651
    %v692 = vunpack.c.l.b16 %v652
    %v693 = vunpack.c.l.b16 %v653
    %v694 = vunpack.c.l.b16 %v654
    %v695 = vunpack.c.l.b16 %v655
    %v696 = vpack.c.b16 %v681, %v680
    %v697 = vpack.c.b16 %v683, %v682
    %v698 = vpack.c.b16 %v685, %v684
    %v699 = vpack.c.b16 %v687, %v686
    %v700 = vpack.c.b16 %v689, %v688
    %v701 = vpack.c.b16 %v691, %v690
    %v702 = vpack.c.b16 %v693, %v692
    %v703 = vpack.c.b16 %v695, %v694
    %712 = vmatprep.subr.bf16.mxu0 0
    %713 = vmatpush1.bf16.msra.mxu0 %v663
    %714 = vmatprep.subr.bf16.mxu0 0
    %715 = vmatpush1.bf16.msra.mxu0 %v662
    %716 = vmatprep.subr.bf16.mxu0 0
    %717 = vmatpush1.bf16.msra.mxu0 %v661
    %718 = vmatprep.subr.bf16.mxu0 0
    %719 = vmatpush1.bf16.msra.mxu0 %v660
    %720 = vmatprep.subr.bf16.mxu0 0
    %721 = vmatpush1.bf16.msra.mxu0 %v659
    %722 = vmatprep.subr.bf16.mxu0 0
    %723 = vmatpush1.bf16.msra.mxu0 %v658
    %724 = vmatprep.subr.bf16.mxu0 0
    %725 = vmatpush1.bf16.msra.mxu0 %v657
    %726 = vmatprep.subr.bf16.mxu0 0
    %727 = vmatpush1.bf16.msra.mxu0 %v656
    %728 = vmatprep.subr.bf16.mxu0 0
    %729 = vmatpush2.bf16.msra.mxu0 0
    %730 = vmatprep.subr.bf16.mxu0 0
    %731 = vmatpush2.bf16.msra.mxu0 0
    %732 = vmatprep.subr.bf16.mxu0 0
    %733 = vmatpush2.bf16.msra.mxu0 0
    %734 = vmatprep.subr.bf16.mxu0 0
    %735 = vmatpush2.bf16.msra.mxu0 0
    %736 = vmatprep.subr.bf16.mxu0 0
    %737 = vmatpush2.bf16.msra.mxu0 0
    %738 = vmatprep.subr.bf16.mxu0 0
    %739 = vmatpush2.bf16.msra.mxu0 0
    %740 = vmatprep.subr.bf16.mxu0 0
    %741 = vmatpush2.bf16.msra.mxu0 0
    %742 = vmatprep.subr.bf16.mxu0 0
    %743 = vmatpush2.bf16.msra.mxu0 0
    %744 = vmatprep.mubr.bf16.mxu0 0
    %745 = vmatmul.mubr.bf16.gmra.mxu0 %v696
    %v746 = vpop.f32.mrf.mxu0
    %v747 = vadd.f32 0.0, %v746
    %v748 = vpop.f32.mrf.mxu0
    %v749 = vpop.f32.mrf.mxu0
    %v750 = vadd.f32 0.0, %v749
    %v751 = vpop.f32.mrf.mxu0
    %752 = vmatprep.mubr.bf16.mxu0 0
    %753 = vmatmul.mubr.bf16.gmra.mxu0 %v697
    %v754 = vpop.f32.mrf.mxu0
    %v755 = vadd.f32 0.0, %v754
    %v756 = vpop.f32.mrf.mxu0
    %v757 = vpop.f32.mrf.mxu0
    %v758 = vadd.f32 0.0, %v757
    %v759 = vpop.f32.mrf.mxu0
    %760 = vmatprep.mubr.bf16.mxu0 0
    %761 = vmatmul.mubr.bf16.gmra.mxu0 %v698
    %v762 = vpop.f32.mrf.mxu0
    %v763 = vadd.f32 0.0, %v762
    %v764 = vpop.f32.mrf.mxu0
    %v765 = vpop.f32.mrf.mxu0
    %v766 = vadd.f32 0.0, %v765
    %v767 = vpop.f32.mrf.mxu0
    %768 = vmatprep.mubr.bf16.mxu0 0
    %769 = vmatmul.mubr.bf16.gmra.mxu0 %v699
    %v770 = vpop.f32.mrf.mxu0
    %v771 = vadd.f32 0.0, %v770
    %v772 = vpop.f32.mrf.mxu0
    %v773 = vpop.f32.mrf.mxu0
    %v774 = vadd.f32 0.0, %v773
    %v775 = vpop.f32.mrf.mxu0
    %776 = vmatprep.mubr.bf16.mxu0 0
    %777 = vmatmul.mubr.bf16.gmra.mxu0 %v700
    %v778 = vpop.f32.mrf.mxu0
    %v779 = vadd.f32 0.0, %v778
    %v780 = vpop.f32.mrf.mxu0
    %v781 = vpop.f32.mrf.mxu0
    %v782 = vadd.f32 0.0, %v781
    %v783 = vpop.f32.mrf.mxu0
    %784 = vmatprep.mubr.bf16.mxu0 0
    %785 = vmatmul.mubr.bf16.gmra.mxu0 %v701
    %v786 = vpop.f32.mrf.mxu0
    %v787 = vadd.f32 0.0, %v786
    %v788 = vpop.f32.mrf.mxu0
    %v789 = vpop.f32.mrf.mxu0
    %v790 = vadd.f32 0.0, %v789
    %v791 = vpop.f32.mrf.mxu0
    %792 = vmatprep.mubr.bf16.mxu0 0
    %793 = vmatmul.mubr.bf16.gmra.mxu0 %v702
    %v794 = vpop.f32.mrf.mxu0
    %v795 = vadd.f32 0.0, %v794
    %v796 = vpop.f32.mrf.mxu0
    %v797 = vpop.f32.mrf.mxu0
    %v798 = vadd.f32 0.0, %v797
    %v799 = vpop.f32.mrf.mxu0
    %800 = vmatprep.mubr.bf16.mxu0 0
    %801 = vmatmul.mubr.bf16.gmra.mxu0 %v703
    %v802 = vpop.f32.mrf.mxu0
    %v803 = vadd.f32 0.0, %v802
    %v804 = vpop.f32.mrf.mxu0
    %v805 = vpop.f32.mrf.mxu0
    %v806 = vadd.f32 0.0, %v805
    %v807 = vpop.f32.mrf.mxu0
    %808 = vdwg.mxu0
    %v809 = vld [vmem:[#allocation14] sm:$0xff]
    %v810 = vld [vmem:[#allocation14 + $0x8] sm:$0xff]
    %v811 = vld [vmem:[#allocation14 + $0x10] sm:$0xff]
    %v812 = vld [vmem:[#allocation14 + $0x18] sm:$0xff]
    %v813 = vld [vmem:[#allocation14 + $0x20] sm:$0xff]
    %v814 = vld [vmem:[#allocation14 + $0x28] sm:$0xff]
    %v815 = vld [vmem:[#allocation14 + $0x30] sm:$0xff]
    %v816 = vld [vmem:[#allocation14 + $0x38] sm:$0xff]
    %v817 = vld [vmem:[#allocation14 + $0x40] sm:$0xff]
    %v818 = vld [vmem:[#allocation14 + $0x48] sm:$0xff]
    %v819 = vld [vmem:[#allocation14 + $0x50] sm:$0xff]
    %v820 = vld [vmem:[#allocation14 + $0x58] sm:$0xff]
    %v821 = vld [vmem:[#allocation14 + $0x60] sm:$0xff]
    %v822 = vld [vmem:[#allocation14 + $0x68] sm:$0xff]
    %v823 = vld [vmem:[#allocation14 + $0x70] sm:$0xff]
    %v824 = vld [vmem:[#allocation14 + $0x78] sm:$0xff]
    %v825 = vld [vmem:[%s12] sm:$0x1]
    %v827 = vlaneseq
    %v828 = vshrl.u32 %v827, 7
    %v829 = vsub.s32 0, %v828
    %v830 = vrot.slane %v825, %v829
    %832 = vmatprep.subr.mxu0 0.0
    %833 = vmatpush1.msra.mxu0 %v824
    %834 = vmatprep.subr.mxu0 0.0
    %835 = vmatpush1.msra.mxu0 %v823
    %836 = vmatprep.subr.mxu0 0.0
    %837 = vmatpush1.msra.mxu0 %v822
    %838 = vmatprep.subr.mxu0 0.0
    %839 = vmatpush1.msra.mxu0 %v821
    %840 = vmatprep.subr.mxu0 0.0
    %841 = vmatpush1.msra.mxu0 %v820
    %842 = vmatprep.subr.mxu0 0.0
    %843 = vmatpush1.msra.mxu0 %v819
    %844 = vmatprep.subr.mxu0 0.0
    %845 = vmatpush1.msra.mxu0 %v818
    %846 = vmatprep.subr.mxu0 0.0
    %847 = vmatpush1.msra.mxu0 %v817
    %848 = vmatprep.subr.mxu0 0.0
    %849 = vmatpush1.msra.mxu0 %v816
    %850 = vmatprep.subr.mxu0 0.0
    %851 = vmatpush1.msra.mxu0 %v815
    %852 = vmatprep.subr.mxu0 0.0
    %853 = vmatpush1.msra.mxu0 %v814
    %854 = vmatprep.subr.mxu0 0.0
    %855 = vmatpush1.msra.mxu0 %v813
    %856 = vmatprep.subr.mxu0 0.0
    %857 = vmatpush1.msra.mxu0 %v812
    %858 = vmatprep.subr.mxu0 0.0
    %859 = vmatpush1.msra.mxu0 %v811
    %860 = vmatprep.subr.mxu0 0.0
    %861 = vmatpush1.msra.mxu0 %v810
    %862 = vmatprep.subr.mxu0 0.0
    %863 = vmatpush1.msra.mxu0 %v809
    %864 = vmatprep.subr.mxu0 0.0
    %865 = vmatpush2.msra.mxu0 0.0
    %866 = vmatprep.subr.mxu0 0.0
    %867 = vmatpush2.msra.mxu0 0.0
    %868 = vmatprep.subr.mxu0 0.0
    %869 = vmatpush2.msra.mxu0 0.0
    %870 = vmatprep.subr.mxu0 0.0
    %871 = vmatpush2.msra.mxu0 0.0
    %872 = vmatprep.subr.mxu0 0.0
    %873 = vmatpush2.msra.mxu0 0.0
    %874 = vmatprep.subr.mxu0 0.0
    %875 = vmatpush2.msra.mxu0 0.0
    %876 = vmatprep.subr.mxu0 0.0
    %877 = vmatpush2.msra.mxu0 0.0
    %878 = vmatprep.subr.mxu0 0.0
    %879 = vmatpush2.msra.mxu0 0.0
    %880 = vmatprep.subr.mxu0 0.0
    %881 = vmatpush2.msra.mxu0 0.0
    %882 = vmatprep.subr.mxu0 0.0
    %883 = vmatpush2.msra.mxu0 0.0
    %884 = vmatprep.subr.mxu0 0.0
    %885 = vmatpush2.msra.mxu0 0.0
    %886 = vmatprep.subr.mxu0 0.0
    %887 = vmatpush2.msra.mxu0 0.0
    %888 = vmatprep.subr.mxu0 0.0
    %889 = vmatpush2.msra.mxu0 0.0
    %890 = vmatprep.subr.mxu0 0.0
    %891 = vmatpush2.msra.mxu0 0.0
    %892 = vmatprep.subr.mxu0 0.0
    %893 = vmatpush2.msra.mxu0 0.0
    %894 = vmatprep.subr.mxu0 0.0
    %895 = vmatpush2.msra.mxu0 0.0
    %896 = vmatprep.mubr.f32.mxu0 0.0
    %897 = vmatmul.mubr.f32.gmra.mxu0 %v747
    %v898 = vpop.f32.mrf.mxu0
    %v899 = vadd.f32 %v830, %v898
    %v900 = vpop.f32.mrf.mxu0
    %901 = vmatprep.mubr.f32.mxu0 0.0
    %902 = vmatmul.mubr.f32.gmra.mxu0 %v750
    %v903 = vpop.f32.mrf.mxu0
    %v904 = vadd.f32 %v830, %v903
    %v905 = vpop.f32.mrf.mxu0
    %906 = vmatprep.mubr.f32.mxu0 0.0
    %907 = vmatmul.mubr.f32.gmra.mxu0 %v755
    %v908 = vpop.f32.mrf.mxu0
    %v909 = vadd.f32 %v830, %v908
    %v910 = vpop.f32.mrf.mxu0
    %911 = vmatprep.mubr.f32.mxu0 0.0
    %912 = vmatmul.mubr.f32.gmra.mxu0 %v758
    %v913 = vpop.f32.mrf.mxu0
    %v914 = vadd.f32 %v830, %v913
    %v915 = vpop.f32.mrf.mxu0
    %916 = vmatprep.mubr.f32.mxu0 0.0
    %917 = vmatmul.mubr.f32.gmra.mxu0 %v763
    %v918 = vpop.f32.mrf.mxu0
    %v919 = vadd.f32 %v830, %v918
    %v920 = vpop.f32.mrf.mxu0
    %921 = vmatprep.mubr.f32.mxu0 0.0
    %922 = vmatmul.mubr.f32.gmra.mxu0 %v766
    %v923 = vpop.f32.mrf.mxu0
    %v924 = vadd.f32 %v830, %v923
    %v925 = vpop.f32.mrf.mxu0
    %926 = vmatprep.mubr.f32.mxu0 0.0
    %927 = vmatmul.mubr.f32.gmra.mxu0 %v771
    %v928 = vpop.f32.mrf.mxu0
    %v929 = vadd.f32 %v830, %v928
    %v930 = vpop.f32.mrf.mxu0
    %931 = vmatprep.mubr.f32.mxu0 0.0
    %932 = vmatmul.mubr.f32.gmra.mxu0 %v774
    %v933 = vpop.f32.mrf.mxu0
    %v934 = vadd.f32 %v830, %v933
    %v935 = vpop.f32.mrf.mxu0
    %936 = vmatprep.mubr.f32.mxu0 0.0
    %937 = vmatmul.mubr.f32.gmra.mxu0 %v779
    %v938 = vpop.f32.mrf.mxu0
    %v939 = vadd.f32 %v830, %v938
    %v940 = vpop.f32.mrf.mxu0
    %941 = vmatprep.mubr.f32.mxu0 0.0
    %942 = vmatmul.mubr.f32.gmra.mxu0 %v782
    %v943 = vpop.f32.mrf.mxu0
    %v944 = vadd.f32 %v830, %v943
    %v945 = vpop.f32.mrf.mxu0
    %946 = vmatprep.mubr.f32.mxu0 0.0
    %947 = vmatmul.mubr.f32.gmra.mxu0 %v787
    %v948 = vpop.f32.mrf.mxu0
    %v949 = vadd.f32 %v830, %v948
    %v950 = vpop.f32.mrf.mxu0
    %951 = vmatprep.mubr.f32.mxu0 0.0
    %952 = vmatmul.mubr.f32.gmra.mxu0 %v790
    %v953 = vpop.f32.mrf.mxu0
    %v954 = vadd.f32 %v830, %v953
    %v955 = vpop.f32.mrf.mxu0
    %956 = vmatprep.mubr.f32.mxu0 0.0
    %957 = vmatmul.mubr.f32.gmra.mxu0 %v795
    %v958 = vpop.f32.mrf.mxu0
    %v959 = vadd.f32 %v830, %v958
    %v960 = vpop.f32.mrf.mxu0
    %961 = vmatprep.mubr.f32.mxu0 0.0
    %962 = vmatmul.mubr.f32.gmra.mxu0 %v798
    %v963 = vpop.f32.mrf.mxu0
    %v964 = vadd.f32 %v830, %v963
    %v965 = vpop.f32.mrf.mxu0
    %966 = vmatprep.mubr.f32.mxu0 0.0
    %967 = vmatmul.mubr.f32.gmra.mxu0 %v803
    %v968 = vpop.f32.mrf.mxu0
    %v969 = vadd.f32 %v830, %v968
    %v970 = vpop.f32.mrf.mxu0
    %971 = vmatprep.mubr.f32.mxu0 0.0
    %972 = vmatmul.mubr.f32.gmra.mxu0 %v806
    %v973 = vpop.f32.mrf.mxu0
    %v974 = vadd.f32 %v830, %v973
    %v975 = vpop.f32.mrf.mxu0
    %976 = vdwg.mxu0
    %v977 = vmax.f32 %v899, 0.0
    %v978 = vmax.f32 %v904, 0.0
    %v979 = vmax.f32 %v909, 0.0
    %v980 = vmax.f32 %v914, 0.0
    %v981 = vmax.f32 %v919, 0.0
    %v982 = vmax.f32 %v924, 0.0
    %v983 = vmax.f32 %v929, 0.0
    %v984 = vmax.f32 %v934, 0.0
    %v985 = vmax.f32 %v939, 0.0
    %v986 = vmax.f32 %v944, 0.0
    %v987 = vmax.f32 %v949, 0.0
    %v988 = vmax.f32 %v954, 0.0
    %v989 = vmax.f32 %v959, 0.0
    %v990 = vmax.f32 %v964, 0.0
    %v991 = vmax.f32 %v969, 0.0
    %v992 = vmax.f32 %v974, 0.0
    %v993 = vld [vmem:[#allocation15] sm:$0xff]
    %v994 = vld [vmem:[#allocation15 + $0x8] sm:$0xff]
    %v995 = vld [vmem:[#allocation15 + $0x10] sm:$0xff]
    %v996 = vld [vmem:[#allocation15 + $0x18] sm:$0xff]
    %v997 = vld [vmem:[#allocation15 + $0x20] sm:$0xff]
    %v998 = vld [vmem:[#allocation15 + $0x28] sm:$0xff]
    %v999 = vld [vmem:[#allocation15 + $0x30] sm:$0xff]
    %v1000 = vld [vmem:[#allocation15 + $0x38] sm:$0xff]
    %v1001 = vld [vmem:[#allocation15 + $0x40] sm:$0xff]
    %v1002 = vld [vmem:[#allocation15 + $0x48] sm:$0xff]
    %v1003 = vld [vmem:[#allocation15 + $0x50] sm:$0xff]
    %v1004 = vld [vmem:[#allocation15 + $0x58] sm:$0xff]
    %v1005 = vld [vmem:[#allocation15 + $0x60] sm:$0xff]
    %v1006 = vld [vmem:[#allocation15 + $0x68] sm:$0xff]
    %v1007 = vld [vmem:[#allocation15 + $0x70] sm:$0xff]
    %v1008 = vld [vmem:[#allocation15 + $0x78] sm:$0xff]
    %v1009 = vld [vmem:[%s14] sm:$0x1]
    %v1011 = vlaneseq
    %v1012 = vshrl.u32 %v1011, 7
    %v1013 = vsub.s32 0, %v1012
    %v1014 = vrot.slane %v1009, %v1013
    %1016 = vmatprep.subr.mxu0 0.0
    %1017 = vmatpush1.msra.mxu0 %v1008
    %1018 = vmatprep.subr.mxu0 0.0
    %1019 = vmatpush1.msra.mxu0 %v1007
    %1020 = vmatprep.subr.mxu0 0.0
    %1021 = vmatpush1.msra.mxu0 %v1006
    %1022 = vmatprep.subr.mxu0 0.0
    %1023 = vmatpush1.msra.mxu0 %v1005
    %1024 = vmatprep.subr.mxu0 0.0
    %1025 = vmatpush1.msra.mxu0 %v1004
    %1026 = vmatprep.subr.mxu0 0.0
    %1027 = vmatpush1.msra.mxu0 %v1003
    %1028 = vmatprep.subr.mxu0 0.0
    %1029 = vmatpush1.msra.mxu0 %v1002
    %1030 = vmatprep.subr.mxu0 0.0
    %1031 = vmatpush1.msra.mxu0 %v1001
    %1032 = vmatprep.subr.mxu0 0.0
    %1033 = vmatpush1.msra.mxu0 %v1000
    %1034 = vmatprep.subr.mxu0 0.0
    %1035 = vmatpush1.msra.mxu0 %v999
    %1036 = vmatprep.subr.mxu0 0.0
    %1037 = vmatpush1.msra.mxu0 %v998
    %1038 = vmatprep.subr.mxu0 0.0
    %1039 = vmatpush1.msra.mxu0 %v997
    %1040 = vmatprep.subr.mxu0 0.0
    %1041 = vmatpush1.msra.mxu0 %v996
    %1042 = vmatprep.subr.mxu0 0.0
    %1043 = vmatpush1.msra.mxu0 %v995
    %1044 = vmatprep.subr.mxu0 0.0
    %1045 = vmatpush1.msra.mxu0 %v994
    %1046 = vmatprep.subr.mxu0 0.0
    %1047 = vmatpush1.msra.mxu0 %v993
    %1048 = vmatprep.subr.mxu0 0.0
    %1049 = vmatpush2.msra.mxu0 0.0
    %1050 = vmatprep.subr.mxu0 0.0
    %1051 = vmatpush2.msra.mxu0 0.0
    %1052 = vmatprep.subr.mxu0 0.0
    %1053 = vmatpush2.msra.mxu0 0.0
    %1054 = vmatprep.subr.mxu0 0.0
    %1055 = vmatpush2.msra.mxu0 0.0
    %1056 = vmatprep.subr.mxu0 0.0
    %1057 = vmatpush2.msra.mxu0 0.0
    %1058 = vmatprep.subr.mxu0 0.0
    %1059 = vmatpush2.msra.mxu0 0.0
    %1060 = vmatprep.subr.mxu0 0.0
    %1061 = vmatpush2.msra.mxu0 0.0
    %1062 = vmatprep.subr.mxu0 0.0
    %1063 = vmatpush2.msra.mxu0 0.0
    %1064 = vmatprep.subr.mxu0 0.0
    %1065 = vmatpush2.msra.mxu0 0.0
    %1066 = vmatprep.subr.mxu0 0.0
    %1067 = vmatpush2.msra.mxu0 0.0
    %1068 = vmatprep.subr.mxu0 0.0
    %1069 = vmatpush2.msra.mxu0 0.0
    %1070 = vmatprep.subr.mxu0 0.0
    %1071 = vmatpush2.msra.mxu0 0.0
    %1072 = vmatprep.subr.mxu0 0.0
    %1073 = vmatpush2.msra.mxu0 0.0
    %1074 = vmatprep.subr.mxu0 0.0
    %1075 = vmatpush2.msra.mxu0 0.0
    %1076 = vmatprep.subr.mxu0 0.0
    %1077 = vmatpush2.msra.mxu0 0.0
    %1078 = vmatprep.subr.mxu0 0.0
    %1079 = vmatpush2.msra.mxu0 0.0
    %1080 = vmatprep.mubr.f32.mxu0 0.0
    %1081 = vmatmul.mubr.f32.gmra.mxu0 %v977
    %v1082 = vpop.f32.mrf.mxu0
    %v1083 = vadd.f32 %v1014, %v1082
    %v1084 = vpop.f32.mrf.mxu0
    %1085 = vmatprep.mubr.f32.mxu0 0.0
    %1086 = vmatmul.mubr.f32.gmra.mxu0 %v978
    %v1087 = vpop.f32.mrf.mxu0
    %v1088 = vadd.f32 %v1014, %v1087
    %v1089 = vpop.f32.mrf.mxu0
    %1090 = vmatprep.mubr.f32.mxu0 0.0
    %1091 = vmatmul.mubr.f32.gmra.mxu0 %v979
    %v1092 = vpop.f32.mrf.mxu0
    %v1093 = vadd.f32 %v1014, %v1092
    %v1094 = vpop.f32.mrf.mxu0
    %1095 = vmatprep.mubr.f32.mxu0 0.0
    %1096 = vmatmul.mubr.f32.gmra.mxu0 %v980
    %v1097 = vpop.f32.mrf.mxu0
    %v1098 = vadd.f32 %v1014, %v1097
    %v1099 = vpop.f32.mrf.mxu0
    %1100 = vmatprep.mubr.f32.mxu0 0.0
    %1101 = vmatmul.mubr.f32.gmra.mxu0 %v981
    %v1102 = vpop.f32.mrf.mxu0
    %v1103 = vadd.f32 %v1014, %v1102
    %v1104 = vpop.f32.mrf.mxu0
    %1105 = vmatprep.mubr.f32.mxu0 0.0
    %1106 = vmatmul.mubr.f32.gmra.mxu0 %v982
    %v1107 = vpop.f32.mrf.mxu0
    %v1108 = vadd.f32 %v1014, %v1107
    %v1109 = vpop.f32.mrf.mxu0
    %1110 = vmatprep.mubr.f32.mxu0 0.0
    %1111 = vmatmul.mubr.f32.gmra.mxu0 %v983
    %v1112 = vpop.f32.mrf.mxu0
    %v1113 = vadd.f32 %v1014, %v1112
    %v1114 = vpop.f32.mrf.mxu0
    %1115 = vmatprep.mubr.f32.mxu0 0.0
    %1116 = vmatmul.mubr.f32.gmra.mxu0 %v984
    %v1117 = vpop.f32.mrf.mxu0
    %v1118 = vadd.f32 %v1014, %v1117
    %v1119 = vpop.f32.mrf.mxu0
    %1120 = vmatprep.mubr.f32.mxu0 0.0
    %1121 = vmatmul.mubr.f32.gmra.mxu0 %v985
    %v1122 = vpop.f32.mrf.mxu0
    %v1123 = vadd.f32 %v1014, %v1122
    %v1124 = vpop.f32.mrf.mxu0
    %1125 = vmatprep.mubr.f32.mxu0 0.0
    %1126 = vmatmul.mubr.f32.gmra.mxu0 %v986
    %v1127 = vpop.f32.mrf.mxu0
    %v1128 = vadd.f32 %v1014, %v1127
    %v1129 = vpop.f32.mrf.mxu0
    %1130 = vmatprep.mubr.f32.mxu0 0.0
    %1131 = vmatmul.mubr.f32.gmra.mxu0 %v987
    %v1132 = vpop.f32.mrf.mxu0
    %v1133 = vadd.f32 %v1014, %v1132
    %v1134 = vpop.f32.mrf.mxu0
    %1135 = vmatprep.mubr.f32.mxu0 0.0
    %1136 = vmatmul.mubr.f32.gmra.mxu0 %v988
    %v1137 = vpop.f32.mrf.mxu0
    %v1138 = vadd.f32 %v1014, %v1137
    %v1139 = vpop.f32.mrf.mxu0
    %1140 = vmatprep.mubr.f32.mxu0 0.0
    %1141 = vmatmul.mubr.f32.gmra.mxu0 %v989
    %v1142 = vpop.f32.mrf.mxu0
    %v1143 = vadd.f32 %v1014, %v1142
    %v1144 = vpop.f32.mrf.mxu0
    %1145 = vmatprep.mubr.f32.mxu0 0.0
    %1146 = vmatmul.mubr.f32.gmra.mxu0 %v990
    %v1147 = vpop.f32.mrf.mxu0
    %v1148 = vadd.f32 %v1014, %v1147
    %v1149 = vpop.f32.mrf.mxu0
    %1150 = vmatprep.mubr.f32.mxu0 0.0
    %1151 = vmatmul.mubr.f32.gmra.mxu0 %v991
    %v1152 = vpop.f32.mrf.mxu0
    %v1153 = vadd.f32 %v1014, %v1152
    %v1154 = vpop.f32.mrf.mxu0
    %1155 = vmatprep.mubr.f32.mxu0 0.0
    %1156 = vmatmul.mubr.f32.gmra.mxu0 %v992
    %v1157 = vpop.f32.mrf.mxu0
    %v1158 = vadd.f32 %v1014, %v1157
    %v1159 = vpop.f32.mrf.mxu0
    %1160 = vdwg.mxu0
    %v1161 = vmax.f32 %v1083, 0.0
    %v1162 = vmax.f32 %v1088, 0.0
    %v1163 = vmax.f32 %v1093, 0.0
    %v1164 = vmax.f32 %v1098, 0.0
    %v1165 = vmax.f32 %v1103, 0.0
    %v1166 = vmax.f32 %v1108, 0.0
    %v1167 = vmax.f32 %v1113, 0.0
    %v1168 = vmax.f32 %v1118, 0.0
    %v1169 = vmax.f32 %v1123, 0.0
    %v1170 = vmax.f32 %v1128, 0.0
    %v1171 = vmax.f32 %v1133, 0.0
    %v1172 = vmax.f32 %v1138, 0.0
    %v1173 = vmax.f32 %v1143, 0.0
    %v1174 = vmax.f32 %v1148, 0.0
    %v1175 = vmax.f32 %v1153, 0.0
    %v1176 = vmax.f32 %v1158, 0.0
    %v1177 = vmul.f32 %v1161, %v543
    %v1178 = vmul.f32 %v1162, %v548
    %v1179 = vmul.f32 %v1163, %v553
    %v1180 = vmul.f32 %v1164, %v558
    %v1181 = vmul.f32 %v1165, %v563
    %v1182 = vmul.f32 %v1166, %v568
    %v1183 = vmul.f32 %v1167, %v573
    %v1184 = vmul.f32 %v1168, %v578
    %v1185 = vmul.f32 %v1169, %v583
    %v1186 = vmul.f32 %v1170, %v588
    %v1187 = vmul.f32 %v1171, %v593
    %v1188 = vmul.f32 %v1172, %v598
    %v1189 = vmul.f32 %v1173, %v603
    %v1190 = vmul.f32 %v1174, %v608
    %v1191 = vmul.f32 %v1175, %v613
    %v1192 = vmul.f32 %v1176, %v618
    %v1193 = vadd.f32 %v1177, %v1178
    %v1194 = vadd.f32 %v1193, %v1179
    %v1195 = vadd.f32 %v1194, %v1180
    %v1196 = vadd.f32 %v1195, %v1181
    %v1197 = vadd.f32 %v1196, %v1182
    %v1198 = vadd.f32 %v1197, %v1183
    %v1199 = vadd.f32 %v1198, %v1184
    %v1200 = vadd.f32 %v1199, %v1185
    %v1201 = vadd.f32 %v1200, %v1186
    %v1202 = vadd.f32 %v1201, %v1187
    %v1203 = vadd.f32 %v1202, %v1188
    %v1204 = vadd.f32 %v1203, %v1189
    %v1205 = vadd.f32 %v1204, %v1190
    %v1206 = vadd.f32 %v1205, %v1191
    %v1207 = vadd.f32 %v1206, %v1192
    %v1208 = vrot.slane %v1207, 4
    %v1209 = vadd.f32 %v1207, %v1208
    %v1210 = vrot.slane %v1209, 2
    %v1211 = vadd.f32 %v1209, %v1210
    %v1212 = vrot.slane %v1211, 1
    %v1213 = vadd.f32 %v1211, %v1212
    %v1214 = vmul.f32 %v1177, %v1177
    %v1215 = vmul.f32 %v1178, %v1178
    %v1216 = vmul.f32 %v1179, %v1179
    %v1217 = vmul.f32 %v1180, %v1180
    %v1218 = vmul.f32 %v1181, %v1181
    %v1219 = vmul.f32 %v1182, %v1182
    %v1220 = vmul.f32 %v1183, %v1183
    %v1221 = vmul.f32 %v1184, %v1184
    %v1222 = vmul.f32 %v1185, %v1185
    %v1223 = vmul.f32 %v1186, %v1186
    %v1224 = vmul.f32 %v1187, %v1187
    %v1225 = vmul.f32 %v1188, %v1188
    %v1226 = vmul.f32 %v1189, %v1189
    %v1227 = vmul.f32 %v1190, %v1190
    %v1228 = vmul.f32 %v1191, %v1191
    %v1229 = vmul.f32 %v1192, %v1192
    %v1230 = vadd.f32 %v1214, %v1215
    %v1231 = vadd.f32 %v1230, %v1216
    %v1232 = vadd.f32 %v1231, %v1217
    %v1233 = vadd.f32 %v1232, %v1218
    %v1234 = vadd.f32 %v1233, %v1219
    %v1235 = vadd.f32 %v1234, %v1220
    %v1236 = vadd.f32 %v1235, %v1221
    %v1237 = vadd.f32 %v1236, %v1222
    %v1238 = vadd.f32 %v1237, %v1223
    %v1239 = vadd.f32 %v1238, %v1224
    %v1240 = vadd.f32 %v1239, %v1225
    %v1241 = vadd.f32 %v1240, %v1226
    %v1242 = vadd.f32 %v1241, %v1227
    %v1243 = vadd.f32 %v1242, %v1228
    %v1244 = vadd.f32 %v1243, %v1229
    %v1245 = vrot.slane %v1244, 4
    %v1246 = vadd.f32 %v1244, %v1245
    %v1247 = vrot.slane %v1246, 2
    %v1248 = vadd.f32 %v1246, %v1247
    %v1249 = vrot.slane %v1248, 1
    %v1250 = vadd.f32 %v1248, %v1249
    %v1251 = vstv %s171
    %v1252 = vmul.f32 %v1213, %v1251
    %v1253 = vmul.f32 %v1250, %v1251
    %v1254 = vmul.f32 %v1252, %v1252
    %v1255 = vsub.f32 %v1253, %v1254
    %v1256 = vmax.f32 %v1255, 0.0
    %v1257 = vsub.f32 %v1177, %v1252
    %v1258 = vsub.f32 %v1178, %v1252
    %v1259 = vsub.f32 %v1179, %v1252
    %v1260 = vsub.f32 %v1180, %v1252
    %v1261 = vsub.f32 %v1181, %v1252
    %v1262 = vsub.f32 %v1182, %v1252
    %v1263 = vsub.f32 %v1183, %v1252
    %v1264 = vsub.f32 %v1184, %v1252
    %v1265 = vsub.f32 %v1185, %v1252
    %v1266 = vsub.f32 %v1186, %v1252
    %v1267 = vsub.f32 %v1187, %v1252
    %v1268 = vsub.f32 %v1188, %v1252
    %v1269 = vsub.f32 %v1189, %v1252
    %v1270 = vsub.f32 %v1190, %v1252
    %v1271 = vsub.f32 %v1191, %v1252
    %v1272 = vsub.f32 %v1192, %v1252
    %v1273 = vadd.f32 %v1256, 1e-05
    %v1274 = vrsqrt.pop %v1273
    %v1275 = vmul.f32 %v1257, %v1274
    %v1276 = vmul.f32 %v1258, %v1274
    %v1277 = vmul.f32 %v1259, %v1274
    %v1278 = vmul.f32 %v1260, %v1274
    %v1279 = vmul.f32 %v1261, %v1274
    %v1280 = vmul.f32 %v1262, %v1274
    %v1281 = vmul.f32 %v1263, %v1274
    %v1282 = vmul.f32 %v1264, %v1274
    %v1283 = vmul.f32 %v1265, %v1274
    %v1284 = vmul.f32 %v1266, %v1274
    %v1285 = vmul.f32 %v1267, %v1274
    %v1286 = vmul.f32 %v1268, %v1274
    %v1287 = vmul.f32 %v1269, %v1274
    %v1288 = vmul.f32 %v1270, %v1274
    %v1289 = vmul.f32 %v1271, %v1274
    %v1290 = vmul.f32 %v1272, %v1274
    %s1291 = sld [smem:[#allocation7]]
    %v1292 = vstv %s1291
    %v1293 = vmul.f32 %v1292, %v1275
    %v1294 = vmul.f32 %v1292, %v1276
    %v1295 = vmul.f32 %v1292, %v1277
    %v1296 = vmul.f32 %v1292, %v1278
    %v1297 = vmul.f32 %v1292, %v1279
    %v1298 = vmul.f32 %v1292, %v1280
    %v1299 = vmul.f32 %v1292, %v1281
    %v1300 = vmul.f32 %v1292, %v1282
    %v1301 = vmul.f32 %v1292, %v1283
    %v1302 = vmul.f32 %v1292, %v1284
    %v1303 = vmul.f32 %v1292, %v1285
    %v1304 = vmul.f32 %v1292, %v1286
    %v1305 = vmul.f32 %v1292, %v1287
    %v1306 = vmul.f32 %v1292, %v1288
    %v1307 = vmul.f32 %v1292, %v1289
    %v1308 = vmul.f32 %v1292, %v1290
    %v1309 = vadd.f32 %v1293, 0.0
    %v1310 = vadd.f32 %v1294, 0.0
    %v1311 = vadd.f32 %v1295, 0.0
    %v1312 = vadd.f32 %v1296, 0.0
    %v1313 = vadd.f32 %v1297, 0.0
    %v1314 = vadd.f32 %v1298, 0.0
    %v1315 = vadd.f32 %v1299, 0.0
    %v1316 = vadd.f32 %v1300, 0.0
    %v1317 = vadd.f32 %v1301, 0.0
    %v1318 = vadd.f32 %v1302, 0.0
    %v1319 = vadd.f32 %v1303, 0.0
    %v1320 = vadd.f32 %v1304, 0.0
    %v1321 = vadd.f32 %v1305, 0.0
    %v1322 = vadd.f32 %v1306, 0.0
    %v1323 = vadd.f32 %v1307, 0.0
    %v1324 = vadd.f32 %v1308, 0.0
    %v1325 = vpack.c.bf16 %v1276, %v1275
    %v1326 = vpack.c.bf16 %v1278, %v1277
    %v1327 = vpack.c.bf16 %v1280, %v1279
    %v1328 = vpack.c.bf16 %v1282, %v1281
    %v1329 = vpack.c.bf16 %v1284, %v1283
    %v1330 = vpack.c.bf16 %v1286, %v1285
    %v1331 = vpack.c.bf16 %v1288, %v1287
    %v1332 = vpack.c.bf16 %v1290, %v1289
    %1333 = vmatprep.subr.bf16.mxu0 0
    %1334 = vmatpush1.bf16.msra.mxu0 %v1332
    %1335 = vmatprep.subr.bf16.mxu0 0
    %1336 = vmatpush1.bf16.msra.mxu0 %v1331
    %1337 = vmatprep.subr.bf16.mxu0 0
    %1338 = vmatpush1.bf16.msra.mxu0 %v1330
    %1339 = vmatprep.subr.bf16.mxu0 0
    %1340 = vmatpush1.bf16.msra.mxu0 %v1329
    %1341 = vmatprep.subr.bf16.mxu0 0
    %1342 = vmatpush1.bf16.msra.mxu0 %v1328
    %1343 = vmatprep.subr.bf16.mxu0 0
    %1344 = vmatpush1.bf16.msra.mxu0 %v1327
    %1345 = vmatprep.subr.bf16.mxu0 0
    %1346 = vmatpush1.bf16.msra.mxu0 %v1326
    %1347 = vmatprep.subr.bf16.mxu0 0
    %1348 = vmatpush1.bf16.msra.mxu0 %v1325
    %1349 = vmatprep.subr.bf16.mxu0 0
    %1350 = vmatpush2.bf16.msra.mxu0 0
    %1351 = vmatprep.subr.bf16.mxu0 0
    %1352 = vmatpush2.bf16.msra.mxu0 0
    %1353 = vmatprep.subr.bf16.mxu0 0
    %1354 = vmatpush2.bf16.msra.mxu0 0
    %1355 = vmatprep.subr.bf16.mxu0 0
    %1356 = vmatpush2.bf16.msra.mxu0 0
    %1357 = vmatprep.subr.bf16.mxu0 0
    %1358 = vmatpush2.bf16.msra.mxu0 0
    %1359 = vmatprep.subr.bf16.mxu0 0
    %1360 = vmatpush2.bf16.msra.mxu0 0
    %1361 = vmatprep.subr.bf16.mxu0 0
    %1362 = vmatpush2.bf16.msra.mxu0 0
    %1363 = vmatprep.subr.bf16.mxu0 0
    %1364 = vmatpush2.bf16.msra.mxu0 0
    %1365 = vmatprep.mubr.bf16.mxu0 0
    %1366 = vmatmul.mubr.bf16.gmra.mxu0 %v696
    %v1367 = vpop.f32.mrf.mxu0
    %v1368 = vadd.f32 0.0, %v1367
    %v1369 = vpop.f32.mrf.mxu0
    %v1370 = vpop.f32.mrf.mxu0
    %v1371 = vadd.f32 0.0, %v1370
    %v1372 = vpop.f32.mrf.mxu0
    %1373 = vmatprep.mubr.bf16.mxu0 0
    %1374 = vmatmul.mubr.bf16.gmra.mxu0 %v697
    %v1375 = vpop.f32.mrf.mxu0
    %v1376 = vadd.f32 0.0, %v1375
    %v1377 = vpop.f32.mrf.mxu0
    %v1378 = vpop.f32.mrf.mxu0
    %v1379 = vadd.f32 0.0, %v1378
    %v1380 = vpop.f32.mrf.mxu0
    %1381 = vmatprep.mubr.bf16.mxu0 0
    %1382 = vmatmul.mubr.bf16.gmra.mxu0 %v698
    %v1383 = vpop.f32.mrf.mxu0
    %v1384 = vadd.f32 0.0, %v1383
    %v1385 = vpop.f32.mrf.mxu0
    %v1386 = vpop.f32.mrf.mxu0
    %v1387 = vadd.f32 0.0, %v1386
    %v1388 = vpop.f32.mrf.mxu0
    %1389 = vmatprep.mubr.bf16.mxu0 0
    %1390 = vmatmul.mubr.bf16.gmra.mxu0 %v699
    %v1391 = vpop.f32.mrf.mxu0
    %v1392 = vadd.f32 0.0, %v1391
    %v1393 = vpop.f32.mrf.mxu0
    %v1394 = vpop.f32.mrf.mxu0
    %v1395 = vadd.f32 0.0, %v1394
    %v1396 = vpop.f32.mrf.mxu0
    %1397 = vmatprep.mubr.bf16.mxu0 0
    %1398 = vmatmul.mubr.bf16.gmra.mxu0 %v700
    %v1399 = vpop.f32.mrf.mxu0
    %v1400 = vadd.f32 0.0, %v1399
    %v1401 = vpop.f32.mrf.mxu0
    %v1402 = vpop.f32.mrf.mxu0
    %v1403 = vadd.f32 0.0, %v1402
    %v1404 = vpop.f32.mrf.mxu0
    %1405 = vmatprep.mubr.bf16.mxu0 0
    %1406 = vmatmul.mubr.bf16.gmra.mxu0 %v701
    %v1407 = vpop.f32.mrf.mxu0
    %v1408 = vadd.f32 0.0, %v1407
    %v1409 = vpop.f32.mrf.mxu0
    %v1410 = vpop.f32.mrf.mxu0
    %v1411 = vadd.f32 0.0, %v1410
    %v1412 = vpop.f32.mrf.mxu0
    %1413 = vmatprep.mubr.bf16.mxu0 0
    %1414 = vmatmul.mubr.bf16.gmra.mxu0 %v702
    %v1415 = vpop.f32.mrf.mxu0
    %v1416 = vadd.f32 0.0, %v1415
    %v1417 = vpop.f32.mrf.mxu0
    %v1418 = vpop.f32.mrf.mxu0
    %v1419 = vadd.f32 0.0, %v1418
    %v1420 = vpop.f32.mrf.mxu0
    %1421 = vmatprep.mubr.bf16.mxu0 0
    %1422 = vmatmul.mubr.bf16.gmra.mxu0 %v703
    %v1423 = vpop.f32.mrf.mxu0
    %v1424 = vadd.f32 0.0, %v1423
    %v1425 = vpop.f32.mrf.mxu0
    %v1426 = vpop.f32.mrf.mxu0
    %v1427 = vadd.f32 0.0, %v1426
    %v1428 = vpop.f32.mrf.mxu0
    %1429 = vdwg.mxu0
    %s1430 = scalar_lea.vmem [#allocation14], 128
    %v1431 = vld [vmem:[%s1430] sm:$0xff]
    %v1432 = vld [vmem:[%s1430 + $0x8] sm:$0xff]
    %v1433 = vld [vmem:[%s1430 + $0x10] sm:$0xff]
    %v1434 = vld [vmem:[%s1430 + $0x18] sm:$0xff]
    %v1435 = vld [vmem:[%s1430 + $0x20] sm:$0xff]
    %v1436 = vld [vmem:[%s1430 + $0x28] sm:$0xff]
    %v1437 = vld [vmem:[%s1430 + $0x30] sm:$0xff]
    %v1438 = vld [vmem:[%s1430 + $0x38] sm:$0xff]
    %v1439 = vld [vmem:[%s1430 + $0x40] sm:$0xff]
    %v1440 = vld [vmem:[%s1430 + $0x48] sm:$0xff]
    %v1441 = vld [vmem:[%s1430 + $0x50] sm:$0xff]
    %v1442 = vld [vmem:[%s1430 + $0x58] sm:$0xff]
    %v1443 = vld [vmem:[%s1430 + $0x60] sm:$0xff]
    %v1444 = vld [vmem:[%s1430 + $0x68] sm:$0xff]
    %v1445 = vld [vmem:[%s1430 + $0x70] sm:$0xff]
    %v1446 = vld [vmem:[%s1430 + $0x78] sm:$0xff]
    %s1447 = scalar_lea.vmem %s12, 1
    %v1448 = vld [vmem:[%s1447] sm:$0x1]
    %v1450 = vlaneseq
    %v1451 = vshrl.u32 %v1450, 7
    %v1452 = vsub.s32 0, %v1451
    %v1453 = vrot.slane %v1448, %v1452
    %1455 = vmatprep.subr.mxu0 0.0
    %1456 = vmatpush1.msra.mxu0 %v1446
    %1457 = vmatprep.subr.mxu0 0.0
    %1458 = vmatpush1.msra.mxu0 %v1445
    %1459 = vmatprep.subr.mxu0 0.0
    %1460 = vmatpush1.msra.mxu0 %v1444
    %1461 = vmatprep.subr.mxu0 0.0
    %1462 = vmatpush1.msra.mxu0 %v1443
    %1463 = vmatprep.subr.mxu0 0.0
    %1464 = vmatpush1.msra.mxu0 %v1442
    %1465 = vmatprep.subr.mxu0 0.0
    %1466 = vmatpush1.msra.mxu0 %v1441
    %1467 = vmatprep.subr.mxu0 0.0
    %1468 = vmatpush1.msra.mxu0 %v1440
    %1469 = vmatprep.subr.mxu0 0.0
    %1470 = vmatpush1.msra.mxu0 %v1439
    %1471 = vmatprep.subr.mxu0 0.0
    %1472 = vmatpush1.msra.mxu0 %v1438
    %1473 = vmatprep.subr.mxu0 0.0
    %1474 = vmatpush1.msra.mxu0 %v1437
    %1475 = vmatprep.subr.mxu0 0.0
    %1476 = vmatpush1.msra.mxu0 %v1436
    %1477 = vmatprep.subr.mxu0 0.0
    %1478 = vmatpush1.msra.mxu0 %v1435
    %1479 = vmatprep.subr.mxu0 0.0
    %1480 = vmatpush1.msra.mxu0 %v1434
    %1481 = vmatprep.subr.mxu0 0.0
    %1482 = vmatpush1.msra.mxu0 %v1433
    %1483 = vmatprep.subr.mxu0 0.0
    %1484 = vmatpush1.msra.mxu0 %v1432
    %1485 = vmatprep.subr.mxu0 0.0
    %1486 = vmatpush1.msra.mxu0 %v1431
    %1487 = vmatprep.subr.mxu0 0.0
    %1488 = vmatpush2.msra.mxu0 0.0
    %1489 = vmatprep.subr.mxu0 0.0
    %1490 = vmatpush2.msra.mxu0 0.0
    %1491 = vmatprep.subr.mxu0 0.0
    %1492 = vmatpush2.msra.mxu0 0.0
    %1493 = vmatprep.subr.mxu0 0.0
    %1494 = vmatpush2.msra.mxu0 0.0
    %1495 = vmatprep.subr.mxu0 0.0
    %1496 = vmatpush2.msra.mxu0 0.0
    %1497 = vmatprep.subr.mxu0 0.0
    %1498 = vmatpush2.msra.mxu0 0.0
    %1499 = vmatprep.subr.mxu0 0.0
    %1500 = vmatpush2.msra.mxu0 0.0
    %1501 = vmatprep.subr.mxu0 0.0
    %1502 = vmatpush2.msra.mxu0 0.0
    %1503 = vmatprep.subr.mxu0 0.0
    %1504 = vmatpush2.msra.mxu0 0.0
    %1505 = vmatprep.subr.mxu0 0.0
    %1506 = vmatpush2.msra.mxu0 0.0
    %1507 = vmatprep.subr.mxu0 0.0
    %1508 = vmatpush2.msra.mxu0 0.0
    %1509 = vmatprep.subr.mxu0 0.0
    %1510 = vmatpush2.msra.mxu0 0.0
    %1511 = vmatprep.subr.mxu0 0.0
    %1512 = vmatpush2.msra.mxu0 0.0
    %1513 = vmatprep.subr.mxu0 0.0
    %1514 = vmatpush2.msra.mxu0 0.0
    %1515 = vmatprep.subr.mxu0 0.0
    %1516 = vmatpush2.msra.mxu0 0.0
    %1517 = vmatprep.subr.mxu0 0.0
    %1518 = vmatpush2.msra.mxu0 0.0
    %1519 = vmatprep.mubr.f32.mxu0 0.0
    %1520 = vmatmul.mubr.f32.gmra.mxu0 %v1368
    %v1521 = vpop.f32.mrf.mxu0
    %v1522 = vadd.f32 %v1453, %v1521
    %v1523 = vpop.f32.mrf.mxu0
    %1524 = vmatprep.mubr.f32.mxu0 0.0
    %1525 = vmatmul.mubr.f32.gmra.mxu0 %v1371
    %v1526 = vpop.f32.mrf.mxu0
    %v1527 = vadd.f32 %v1453, %v1526
    %v1528 = vpop.f32.mrf.mxu0
    %1529 = vmatprep.mubr.f32.mxu0 0.0
    %1530 = vmatmul.mubr.f32.gmra.mxu0 %v1376
    %v1531 = vpop.f32.mrf.mxu0
    %v1532 = vadd.f32 %v1453, %v1531
    %v1533 = vpop.f32.mrf.mxu0
    %1534 = vmatprep.mubr.f32.mxu0 0.0
    %1535 = vmatmul.mubr.f32.gmra.mxu0 %v1379
    %v1536 = vpop.f32.mrf.mxu0
    %v1537 = vadd.f32 %v1453, %v1536
    %v1538 = vpop.f32.mrf.mxu0
    %1539 = vmatprep.mubr.f32.mxu0 0.0
    %1540 = vmatmul.mubr.f32.gmra.mxu0 %v1384
    %v1541 = vpop.f32.mrf.mxu0
    %v1542 = vadd.f32 %v1453, %v1541
    %v1543 = vpop.f32.mrf.mxu0
    %1544 = vmatprep.mubr.f32.mxu0 0.0
    %1545 = vmatmul.mubr.f32.gmra.mxu0 %v1387
    %v1546 = vpop.f32.mrf.mxu0
    %v1547 = vadd.f32 %v1453, %v1546
    %v1548 = vpop.f32.mrf.mxu0
    %1549 = vmatprep.mubr.f32.mxu0 0.0
    %1550 = vmatmul.mubr.f32.gmra.mxu0 %v1392
    %v1551 = vpop.f32.mrf.mxu0
    %v1552 = vadd.f32 %v1453, %v1551
    %v1553 = vpop.f32.mrf.mxu0
    %1554 = vmatprep.mubr.f32.mxu0 0.0
    %1555 = vmatmul.mubr.f32.gmra.mxu0 %v1395
    %v1556 = vpop.f32.mrf.mxu0
    %v1557 = vadd.f32 %v1453, %v1556
    %v1558 = vpop.f32.mrf.mxu0
    %1559 = vmatprep.mubr.f32.mxu0 0.0
    %1560 = vmatmul.mubr.f32.gmra.mxu0 %v1400
    %v1561 = vpop.f32.mrf.mxu0
    %v1562 = vadd.f32 %v1453, %v1561
    %v1563 = vpop.f32.mrf.mxu0
    %1564 = vmatprep.mubr.f32.mxu0 0.0
    %1565 = vmatmul.mubr.f32.gmra.mxu0 %v1403
    %v1566 = vpop.f32.mrf.mxu0
    %v1567 = vadd.f32 %v1453, %v1566
    %v1568 = vpop.f32.mrf.mxu0
    %1569 = vmatprep.mubr.f32.mxu0 0.0
    %1570 = vmatmul.mubr.f32.gmra.mxu0 %v1408
    %v1571 = vpop.f32.mrf.mxu0
    %v1572 = vadd.f32 %v1453, %v1571
    %v1573 = vpop.f32.mrf.mxu0
    %1574 = vmatprep.mubr.f32.mxu0 0.0
    %1575 = vmatmul.mubr.f32.gmra.mxu0 %v1411
    %v1576 = vpop.f32.mrf.mxu0
    %v1577 = vadd.f32 %v1453, %v1576
    %v1578 = vpop.f32.mrf.mxu0
    %1579 = vmatprep.mubr.f32.mxu0 0.0
    %1580 = vmatmul.mubr.f32.gmra.mxu0 %v1416
    %v1581 = vpop.f32.mrf.mxu0
    %v1582 = vadd.f32 %v1453, %v1581
    %v1583 = vpop.f32.mrf.mxu0
    %1584 = vmatprep.mubr.f32.mxu0 0.0
    %1585 = vmatmul.mubr.f32.gmra.mxu0 %v1419
    %v1586 = vpop.f32.mrf.mxu0
    %v1587 = vadd.f32 %v1453, %v1586
    %v1588 = vpop.f32.mrf.mxu0
    %1589 = vmatprep.mubr.f32.mxu0 0.0
    %1590 = vmatmul.mubr.f32.gmra.mxu0 %v1424
    %v1591 = vpop.f32.mrf.mxu0
    %v1592 = vadd.f32 %v1453, %v1591
    %v1593 = vpop.f32.mrf.mxu0
    %1594 = vmatprep.mubr.f32.mxu0 0.0
    %1595 = vmatmul.mubr.f32.gmra.mxu0 %v1427
    %v1596 = vpop.f32.mrf.mxu0
    %v1597 = vadd.f32 %v1453, %v1596
    %v1598 = vpop.f32.mrf.mxu0
    %1599 = vdwg.mxu0
    %v1600 = vmax.f32 %v1522, 0.0
    %v1601 = vmax.f32 %v1527, 0.0
    %v1602 = vmax.f32 %v1532, 0.0
    %v1603 = vmax.f32 %v1537, 0.0
    %v1604 = vmax.f32 %v1542, 0.0
    %v1605 = vmax.f32 %v1547, 0.0
    %v1606 = vmax.f32 %v1552, 0.0
    %v1607 = vmax.f32 %v1557, 0.0
    %v1608 = vmax.f32 %v1562, 0.0
    %v1609 = vmax.f32 %v1567, 0.0
    %v1610 = vmax.f32 %v1572, 0.0
    %v1611 = vmax.f32 %v1577, 0.0
    %v1612 = vmax.f32 %v1582, 0.0
    %v1613 = vmax.f32 %v1587, 0.0
    %v1614 = vmax.f32 %v1592, 0.0
    %v1615 = vmax.f32 %v1597, 0.0
    %s1616 = scalar_lea.vmem [#allocation15], 128
    %v1617 = vld [vmem:[%s1616] sm:$0xff]
    %v1618 = vld [vmem:[%s1616 + $0x8] sm:$0xff]
    %v1619 = vld [vmem:[%s1616 + $0x10] sm:$0xff]
    %v1620 = vld [vmem:[%s1616 + $0x18] sm:$0xff]
    %v1621 = vld [vmem:[%s1616 + $0x20] sm:$0xff]
    %v1622 = vld [vmem:[%s1616 + $0x28] sm:$0xff]
    %v1623 = vld [vmem:[%s1616 + $0x30] sm:$0xff]
    %v1624 = vld [vmem:[%s1616 + $0x38] sm:$0xff]
    %v1625 = vld [vmem:[%s1616 + $0x40] sm:$0xff]
    %v1626 = vld [vmem:[%s1616 + $0x48] sm:$0xff]
    %v1627 = vld [vmem:[%s1616 + $0x50] sm:$0xff]
    %v1628 = vld [vmem:[%s1616 + $0x58] sm:$0xff]
    %v1629 = vld [vmem:[%s1616 + $0x60] sm:$0xff]
    %v1630 = vld [vmem:[%s1616 + $0x68] sm:$0xff]
    %v1631 = vld [vmem:[%s1616 + $0x70] sm:$0xff]
    %v1632 = vld [vmem:[%s1616 + $0x78] sm:$0xff]
    %s1633 = scalar_lea.vmem %s14, 1
    %v1634 = vld [vmem:[%s1633] sm:$0x1]
    %v1636 = vlaneseq
    %v1637 = vshrl.u32 %v1636, 7
    %v1638 = vsub.s32 0, %v1637
    %v1639 = vrot.slane %v1634, %v1638
    %1641 = vmatprep.subr.mxu0 0.0
    %1642 = vmatpush1.msra.mxu0 %v1632
    %1643 = vmatprep.subr.mxu0 0.0
    %1644 = vmatpush1.msra.mxu0 %v1631
    %1645 = vmatprep.subr.mxu0 0.0
    %1646 = vmatpush1.msra.mxu0 %v1630
    %1647 = vmatprep.subr.mxu0 0.0
    %1648 = vmatpush1.msra.mxu0 %v1629
    %1649 = vmatprep.subr.mxu0 0.0
    %1650 = vmatpush1.msra.mxu0 %v1628
    %1651 = vmatprep.subr.mxu0 0.0
    %1652 = vmatpush1.msra.mxu0 %v1627
    %1653 = vmatprep.subr.mxu0 0.0
    %1654 = vmatpush1.msra.mxu0 %v1626
    %1655 = vmatprep.subr.mxu0 0.0
    %1656 = vmatpush1.msra.mxu0 %v1625
    %1657 = vmatprep.subr.mxu0 0.0
    %1658 = vmatpush1.msra.mxu0 %v1624
    %1659 = vmatprep.subr.mxu0 0.0
    %1660 = vmatpush1.msra.mxu0 %v1623
    %1661 = vmatprep.subr.mxu0 0.0
    %1662 = vmatpush1.msra.mxu0 %v1622
    %1663 = vmatprep.subr.mxu0 0.0
    %1664 = vmatpush1.msra.mxu0 %v1621
    %1665 = vmatprep.subr.mxu0 0.0
    %1666 = vmatpush1.msra.mxu0 %v1620
    %1667 = vmatprep.subr.mxu0 0.0
    %1668 = vmatpush1.msra.mxu0 %v1619
    %1669 = vmatprep.subr.mxu0 0.0
    %1670 = vmatpush1.msra.mxu0 %v1618
    %1671 = vmatprep.subr.mxu0 0.0
    %1672 = vmatpush1.msra.mxu0 %v1617
    %1673 = vmatprep.subr.mxu0 0.0
    %1674 = vmatpush2.msra.mxu0 0.0
    %1675 = vmatprep.subr.mxu0 0.0
    %1676 = vmatpush2.msra.mxu0 0.0
    %1677 = vmatprep.subr.mxu0 0.0
    %1678 = vmatpush2.msra.mxu0 0.0
    %1679 = vmatprep.subr.mxu0 0.0
    %1680 = vmatpush2.msra.mxu0 0.0
    %1681 = vmatprep.subr.mxu0 0.0
    %1682 = vmatpush2.msra.mxu0 0.0
    %1683 = vmatprep.subr.mxu0 0.0
    %1684 = vmatpush2.msra.mxu0 0.0
    %1685 = vmatprep.subr.mxu0 0.0
    %1686 = vmatpush2.msra.mxu0 0.0
    %1687 = vmatprep.subr.mxu0 0.0
    %1688 = vmatpush2.msra.mxu0 0.0
    %1689 = vmatprep.subr.mxu0 0.0
    %1690 = vmatpush2.msra.mxu0 0.0
    %1691 = vmatprep.subr.mxu0 0.0
    %1692 = vmatpush2.msra.mxu0 0.0
    %1693 = vmatprep.subr.mxu0 0.0
    %1694 = vmatpush2.msra.mxu0 0.0
    %1695 = vmatprep.subr.mxu0 0.0
    %1696 = vmatpush2.msra.mxu0 0.0
    %1697 = vmatprep.subr.mxu0 0.0
    %1698 = vmatpush2.msra.mxu0 0.0
    %1699 = vmatprep.subr.mxu0 0.0
    %1700 = vmatpush2.msra.mxu0 0.0
    %1701 = vmatprep.subr.mxu0 0.0
    %1702 = vmatpush2.msra.mxu0 0.0
    %1703 = vmatprep.subr.mxu0 0.0
    %1704 = vmatpush2.msra.mxu0 0.0
    %1705 = vmatprep.mubr.f32.mxu0 0.0
    %1706 = vmatmul.mubr.f32.gmra.mxu0 %v1600
    %v1707 = vpop.f32.mrf.mxu0
    %v1708 = vadd.f32 %v1639, %v1707
    %v1709 = vpop.f32.mrf.mxu0
    %1710 = vmatprep.mubr.f32.mxu0 0.0
    %1711 = vmatmul.mubr.f32.gmra.mxu0 %v1601
    %v1712 = vpop.f32.mrf.mxu0
    %v1713 = vadd.f32 %v1639, %v1712
    %v1714 = vpop.f32.mrf.mxu0
    %1715 = vmatprep.mubr.f32.mxu0 0.0
    %1716 = vmatmul.mubr.f32.gmra.mxu0 %v1602
    %v1717 = vpop.f32.mrf.mxu0
    %v1718 = vadd.f32 %v1639, %v1717
    %v1719 = vpop.f32.mrf.mxu0
    %1720 = vmatprep.mubr.f32.mxu0 0.0
    %1721 = vmatmul.mubr.f32.gmra.mxu0 %v1603
    %v1722 = vpop.f32.mrf.mxu0
    %v1723 = vadd.f32 %v1639, %v1722
    %v1724 = vpop.f32.mrf.mxu0
    %1725 = vmatprep.mubr.f32.mxu0 0.0
    %1726 = vmatmul.mubr.f32.gmra.mxu0 %v1604
    %v1727 = vpop.f32.mrf.mxu0
    %v1728 = vadd.f32 %v1639, %v1727
    %v1729 = vpop.f32.mrf.mxu0
    %1730 = vmatprep.mubr.f32.mxu0 0.0
    %1731 = vmatmul.mubr.f32.gmra.mxu0 %v1605
    %v1732 = vpop.f32.mrf.mxu0
    %v1733 = vadd.f32 %v1639, %v1732
    %v1734 = vpop.f32.mrf.mxu0
    %1735 = vmatprep.mubr.f32.mxu0 0.0
    %1736 = vmatmul.mubr.f32.gmra.mxu0 %v1606
    %v1737 = vpop.f32.mrf.mxu0
    %v1738 = vadd.f32 %v1639, %v1737
    %v1739 = vpop.f32.mrf.mxu0
    %1740 = vmatprep.mubr.f32.mxu0 0.0
    %1741 = vmatmul.mubr.f32.gmra.mxu0 %v1607
    %v1742 = vpop.f32.mrf.mxu0
    %v1743 = vadd.f32 %v1639, %v1742
    %v1744 = vpop.f32.mrf.mxu0
    %1745 = vmatprep.mubr.f32.mxu0 0.0
    %1746 = vmatmul.mubr.f32.gmra.mxu0 %v1608
    %v1747 = vpop.f32.mrf.mxu0
    %v1748 = vadd.f32 %v1639, %v1747
    %v1749 = vpop.f32.mrf.mxu0
    %1750 = vmatprep.mubr.f32.mxu0 0.0
    %1751 = vmatmul.mubr.f32.gmra.mxu0 %v1609
    %v1752 = vpop.f32.mrf.mxu0
    %v1753 = vadd.f32 %v1639, %v1752
    %v1754 = vpop.f32.mrf.mxu0
    %1755 = vmatprep.mubr.f32.mxu0 0.0
    %1756 = vmatmul.mubr.f32.gmra.mxu0 %v1610
    %v1757 = vpop.f32.mrf.mxu0
    %v1758 = vadd.f32 %v1639, %v1757
    %v1759 = vpop.f32.mrf.mxu0
    %1760 = vmatprep.mubr.f32.mxu0 0.0
    %1761 = vmatmul.mubr.f32.gmra.mxu0 %v1611
    %v1762 = vpop.f32.mrf.mxu0
    %v1763 = vadd.f32 %v1639, %v1762
    %v1764 = vpop.f32.mrf.mxu0
    %1765 = vmatprep.mubr.f32.mxu0 0.0
    %1766 = vmatmul.mubr.f32.gmra.mxu0 %v1612
    %v1767 = vpop.f32.mrf.mxu0
    %v1768 = vadd.f32 %v1639, %v1767
    %v1769 = vpop.f32.mrf.mxu0
    %1770 = vmatprep.mubr.f32.mxu0 0.0
    %1771 = vmatmul.mubr.f32.gmra.mxu0 %v1613
    %v1772 = vpop.f32.mrf.mxu0
    %v1773 = vadd.f32 %v1639, %v1772
    %v1774 = vpop.f32.mrf.mxu0
    %1775 = vmatprep.mubr.f32.mxu0 0.0
    %1776 = vmatmul.mubr.f32.gmra.mxu0 %v1614
    %v1777 = vpop.f32.mrf.mxu0
    %v1778 = vadd.f32 %v1639, %v1777
    %v1779 = vpop.f32.mrf.mxu0
    %1780 = vmatprep.mubr.f32.mxu0 0.0
    %1781 = vmatmul.mubr.f32.gmra.mxu0 %v1615
    %v1782 = vpop.f32.mrf.mxu0
    %v1783 = vadd.f32 %v1639, %v1782
    %v1784 = vpop.f32.mrf.mxu0
    %1785 = vdwg.mxu0
    %v1786 = vmax.f32 %v1708, 0.0
    %v1787 = vmax.f32 %v1713, 0.0
    %v1788 = vmax.f32 %v1718, 0.0
    %v1789 = vmax.f32 %v1723, 0.0
    %v1790 = vmax.f32 %v1728, 0.0
    %v1791 = vmax.f32 %v1733, 0.0
    %v1792 = vmax.f32 %v1738, 0.0
    %v1793 = vmax.f32 %v1743, 0.0
    %v1794 = vmax.f32 %v1748, 0.0
    %v1795 = vmax.f32 %v1753, 0.0
    %v1796 = vmax.f32 %v1758, 0.0
    %v1797 = vmax.f32 %v1763, 0.0
    %v1798 = vmax.f32 %v1768, 0.0
    %v1799 = vmax.f32 %v1773, 0.0
    %v1800 = vmax.f32 %v1778, 0.0
    %v1801 = vmax.f32 %v1783, 0.0
    %v1802 = vmul.f32 %v1786, %v543
    %v1803 = vmul.f32 %v1787, %v548
    %v1804 = vmul.f32 %v1788, %v553
    %v1805 = vmul.f32 %v1789, %v558
    %v1806 = vmul.f32 %v1790, %v563
    %v1807 = vmul.f32 %v1791, %v568
    %v1808 = vmul.f32 %v1792, %v573
    %v1809 = vmul.f32 %v1793, %v578
    %v1810 = vmul.f32 %v1794, %v583
    %v1811 = vmul.f32 %v1795, %v588
    %v1812 = vmul.f32 %v1796, %v593
    %v1813 = vmul.f32 %v1797, %v598
    %v1814 = vmul.f32 %v1798, %v603
    %v1815 = vmul.f32 %v1799, %v608
    %v1816 = vmul.f32 %v1800, %v613
    %v1817 = vmul.f32 %v1801, %v618
    %v1818 = vadd.f32 %v1802, %v1803
    %v1819 = vadd.f32 %v1818, %v1804
    %v1820 = vadd.f32 %v1819, %v1805
    %v1821 = vadd.f32 %v1820, %v1806
    %v1822 = vadd.f32 %v1821, %v1807
    %v1823 = vadd.f32 %v1822, %v1808
    %v1824 = vadd.f32 %v1823, %v1809
    %v1825 = vadd.f32 %v1824, %v1810
    %v1826 = vadd.f32 %v1825, %v1811
    %v1827 = vadd.f32 %v1826, %v1812
    %v1828 = vadd.f32 %v1827, %v1813
    %v1829 = vadd.f32 %v1828, %v1814
    %v1830 = vadd.f32 %v1829, %v1815
    %v1831 = vadd.f32 %v1830, %v1816
    %v1832 = vadd.f32 %v1831, %v1817
    %v1833 = vrot.slane %v1832, 4
    %v1834 = vadd.f32 %v1832, %v1833
    %v1835 = vrot.slane %v1834, 2
    %v1836 = vadd.f32 %v1834, %v1835
    %v1837 = vrot.slane %v1836, 1
    %v1838 = vadd.f32 %v1836, %v1837
    %v1839 = vmul.f32 %v1802, %v1802
    %v1840 = vmul.f32 %v1803, %v1803
    %v1841 = vmul.f32 %v1804, %v1804
    %v1842 = vmul.f32 %v1805, %v1805
    %v1843 = vmul.f32 %v1806, %v1806
    %v1844 = vmul.f32 %v1807, %v1807
    %v1845 = vmul.f32 %v1808, %v1808
    %v1846 = vmul.f32 %v1809, %v1809
    %v1847 = vmul.f32 %v1810, %v1810
    %v1848 = vmul.f32 %v1811, %v1811
    %v1849 = vmul.f32 %v1812, %v1812
    %v1850 = vmul.f32 %v1813, %v1813
    %v1851 = vmul.f32 %v1814, %v1814
    %v1852 = vmul.f32 %v1815, %v1815
    %v1853 = vmul.f32 %v1816, %v1816
    %v1854 = vmul.f32 %v1817, %v1817
    %v1855 = vadd.f32 %v1839, %v1840
    %v1856 = vadd.f32 %v1855, %v1841
    %v1857 = vadd.f32 %v1856, %v1842
    %v1858 = vadd.f32 %v1857, %v1843
    %v1859 = vadd.f32 %v1858, %v1844
    %v1860 = vadd.f32 %v1859, %v1845
    %v1861 = vadd.f32 %v1860, %v1846
    %v1862 = vadd.f32 %v1861, %v1847
    %v1863 = vadd.f32 %v1862, %v1848
    %v1864 = vadd.f32 %v1863, %v1849
    %v1865 = vadd.f32 %v1864, %v1850
    %v1866 = vadd.f32 %v1865, %v1851
    %v1867 = vadd.f32 %v1866, %v1852
    %v1868 = vadd.f32 %v1867, %v1853
    %v1869 = vadd.f32 %v1868, %v1854
    %v1870 = vrot.slane %v1869, 4
    %v1871 = vadd.f32 %v1869, %v1870
    %v1872 = vrot.slane %v1871, 2
    %v1873 = vadd.f32 %v1871, %v1872
    %v1874 = vrot.slane %v1873, 1
    %v1875 = vadd.f32 %v1873, %v1874
    %v1876 = vmul.f32 %v1838, %v1251
    %v1877 = vmul.f32 %v1875, %v1251
    %v1878 = vmul.f32 %v1876, %v1876
    %v1879 = vsub.f32 %v1877, %v1878
    %v1880 = vmax.f32 %v1879, 0.0
    %v1881 = vsub.f32 %v1802, %v1876
    %v1882 = vsub.f32 %v1803, %v1876
    %v1883 = vsub.f32 %v1804, %v1876
    %v1884 = vsub.f32 %v1805, %v1876
    %v1885 = vsub.f32 %v1806, %v1876
    %v1886 = vsub.f32 %v1807, %v1876
    %v1887 = vsub.f32 %v1808, %v1876
    %v1888 = vsub.f32 %v1809, %v1876
    %v1889 = vsub.f32 %v1810, %v1876
    %v1890 = vsub.f32 %v1811, %v1876
    %v1891 = vsub.f32 %v1812, %v1876
    %v1892 = vsub.f32 %v1813, %v1876
    %v1893 = vsub.f32 %v1814, %v1876
    %v1894 = vsub.f32 %v1815, %v1876
    %v1895 = vsub.f32 %v1816, %v1876
    %v1896 = vsub.f32 %v1817, %v1876
    %v1897 = vadd.f32 %v1880, 1e-05
    %v1898 = vrsqrt.pop %v1897
    %v1899 = vmul.f32 %v1881, %v1898
    %v1900 = vmul.f32 %v1882, %v1898
    %v1901 = vmul.f32 %v1883, %v1898
    %v1902 = vmul.f32 %v1884, %v1898
    %v1903 = vmul.f32 %v1885, %v1898
    %v1904 = vmul.f32 %v1886, %v1898
    %v1905 = vmul.f32 %v1887, %v1898
    %v1906 = vmul.f32 %v1888, %v1898
    %v1907 = vmul.f32 %v1889, %v1898
    %v1908 = vmul.f32 %v1890, %v1898
    %v1909 = vmul.f32 %v1891, %v1898
    %v1910 = vmul.f32 %v1892, %v1898
    %v1911 = vmul.f32 %v1893, %v1898
    %v1912 = vmul.f32 %v1894, %v1898
    %v1913 = vmul.f32 %v1895, %v1898
    %v1914 = vmul.f32 %v1896, %v1898
    %s1915 = sld [smem:[#allocation7 + $0x1]]
    %v1916 = vstv %s1915
    %v1917 = vmul.f32 %v1916, %v1899
    %v1918 = vmul.f32 %v1916, %v1900
    %v1919 = vmul.f32 %v1916, %v1901
    %v1920 = vmul.f32 %v1916, %v1902
    %v1921 = vmul.f32 %v1916, %v1903
    %v1922 = vmul.f32 %v1916, %v1904
    %v1923 = vmul.f32 %v1916, %v1905
    %v1924 = vmul.f32 %v1916, %v1906
    %v1925 = vmul.f32 %v1916, %v1907
    %v1926 = vmul.f32 %v1916, %v1908
    %v1927 = vmul.f32 %v1916, %v1909
    %v1928 = vmul.f32 %v1916, %v1910
    %v1929 = vmul.f32 %v1916, %v1911
    %v1930 = vmul.f32 %v1916, %v1912
    %v1931 = vmul.f32 %v1916, %v1913
    %v1932 = vmul.f32 %v1916, %v1914
    %v1933 = vadd.f32 %v1309, %v1917
    %v1934 = vadd.f32 %v1310, %v1918
    %v1935 = vadd.f32 %v1311, %v1919
    %v1936 = vadd.f32 %v1312, %v1920
    %v1937 = vadd.f32 %v1313, %v1921
    %v1938 = vadd.f32 %v1314, %v1922
    %v1939 = vadd.f32 %v1315, %v1923
    %v1940 = vadd.f32 %v1316, %v1924
    %v1941 = vadd.f32 %v1317, %v1925
    %v1942 = vadd.f32 %v1318, %v1926
    %v1943 = vadd.f32 %v1319, %v1927
    %v1944 = vadd.f32 %v1320, %v1928
    %v1945 = vadd.f32 %v1321, %v1929
    %v1946 = vadd.f32 %v1322, %v1930
    %v1947 = vadd.f32 %v1323, %v1931
    %v1948 = vadd.f32 %v1324, %v1932
    %v1949 = vpack.c.bf16 %v1900, %v1899
    %v1950 = vpack.c.bf16 %v1902, %v1901
    %v1951 = vpack.c.bf16 %v1904, %v1903
    %v1952 = vpack.c.bf16 %v1906, %v1905
    %v1953 = vpack.c.bf16 %v1908, %v1907
    %v1954 = vpack.c.bf16 %v1910, %v1909
    %v1955 = vpack.c.bf16 %v1912, %v1911
    %v1956 = vpack.c.bf16 %v1914, %v1913
    %1957 = vmatprep.subr.bf16.mxu0 0
    %1958 = vmatpush1.bf16.msra.mxu0 %v1956
    %1959 = vmatprep.subr.bf16.mxu0 0
    %1960 = vmatpush1.bf16.msra.mxu0 %v1955
    %1961 = vmatprep.subr.bf16.mxu0 0
    %1962 = vmatpush1.bf16.msra.mxu0 %v1954
    %1963 = vmatprep.subr.bf16.mxu0 0
    %1964 = vmatpush1.bf16.msra.mxu0 %v1953
    %1965 = vmatprep.subr.bf16.mxu0 0
    %1966 = vmatpush1.bf16.msra.mxu0 %v1952
    %1967 = vmatprep.subr.bf16.mxu0 0
    %1968 = vmatpush1.bf16.msra.mxu0 %v1951
    %1969 = vmatprep.subr.bf16.mxu0 0
    %1970 = vmatpush1.bf16.msra.mxu0 %v1950
    %1971 = vmatprep.subr.bf16.mxu0 0
    %1972 = vmatpush1.bf16.msra.mxu0 %v1949
    %1973 = vmatprep.subr.bf16.mxu0 0
    %1974 = vmatpush2.bf16.msra.mxu0 0
    %1975 = vmatprep.subr.bf16.mxu0 0
    %1976 = vmatpush2.bf16.msra.mxu0 0
    %1977 = vmatprep.subr.bf16.mxu0 0
    %1978 = vmatpush2.bf16.msra.mxu0 0
    %1979 = vmatprep.subr.bf16.mxu0 0
    %1980 = vmatpush2.bf16.msra.mxu0 0
    %1981 = vmatprep.subr.bf16.mxu0 0
    %1982 = vmatpush2.bf16.msra.mxu0 0
    %1983 = vmatprep.subr.bf16.mxu0 0
    %1984 = vmatpush2.bf16.msra.mxu0 0
    %1985 = vmatprep.subr.bf16.mxu0 0
    %1986 = vmatpush2.bf16.msra.mxu0 0
    %1987 = vmatprep.subr.bf16.mxu0 0
    %1988 = vmatpush2.bf16.msra.mxu0 0
    %1989 = vmatprep.mubr.bf16.mxu0 0
    %1990 = vmatmul.mubr.bf16.gmra.mxu0 %v696
    %v1991 = vpop.f32.mrf.mxu0
    %v1992 = vadd.f32 0.0, %v1991
    %v1993 = vpop.f32.mrf.mxu0
    %v1994 = vpop.f32.mrf.mxu0
    %v1995 = vadd.f32 0.0, %v1994
    %v1996 = vpop.f32.mrf.mxu0
    %1997 = vmatprep.mubr.bf16.mxu0 0
    %1998 = vmatmul.mubr.bf16.gmra.mxu0 %v697
    %v1999 = vpop.f32.mrf.mxu0
    %v2000 = vadd.f32 0.0, %v1999
    %v2001 = vpop.f32.mrf.mxu0
    %v2002 = vpop.f32.mrf.mxu0
    %v2003 = vadd.f32 0.0, %v2002
    %v2004 = vpop.f32.mrf.mxu0
    %2005 = vmatprep.mubr.bf16.mxu0 0
    %2006 = vmatmul.mubr.bf16.gmra.mxu0 %v698
    %v2007 = vpop.f32.mrf.mxu0
    %v2008 = vadd.f32 0.0, %v2007
    %v2009 = vpop.f32.mrf.mxu0
    %v2010 = vpop.f32.mrf.mxu0
    %v2011 = vadd.f32 0.0, %v2010
    %v2012 = vpop.f32.mrf.mxu0
    %2013 = vmatprep.mubr.bf16.mxu0 0
    %2014 = vmatmul.mubr.bf16.gmra.mxu0 %v699
    %v2015 = vpop.f32.mrf.mxu0
    %v2016 = vadd.f32 0.0, %v2015
    %v2017 = vpop.f32.mrf.mxu0
    %v2018 = vpop.f32.mrf.mxu0
    %v2019 = vadd.f32 0.0, %v2018
    %v2020 = vpop.f32.mrf.mxu0
    %2021 = vmatprep.mubr.bf16.mxu0 0
    %2022 = vmatmul.mubr.bf16.gmra.mxu0 %v700
    %v2023 = vpop.f32.mrf.mxu0
    %v2024 = vadd.f32 0.0, %v2023
    %v2025 = vpop.f32.mrf.mxu0
    %v2026 = vpop.f32.mrf.mxu0
    %v2027 = vadd.f32 0.0, %v2026
    %v2028 = vpop.f32.mrf.mxu0
    %2029 = vmatprep.mubr.bf16.mxu0 0
    %2030 = vmatmul.mubr.bf16.gmra.mxu0 %v701
    %v2031 = vpop.f32.mrf.mxu0
    %v2032 = vadd.f32 0.0, %v2031
    %v2033 = vpop.f32.mrf.mxu0
    %v2034 = vpop.f32.mrf.mxu0
    %v2035 = vadd.f32 0.0, %v2034
    %v2036 = vpop.f32.mrf.mxu0
    %2037 = vmatprep.mubr.bf16.mxu0 0
    %2038 = vmatmul.mubr.bf16.gmra.mxu0 %v702
    %v2039 = vpop.f32.mrf.mxu0
    %v2040 = vadd.f32 0.0, %v2039
    %v2041 = vpop.f32.mrf.mxu0
    %v2042 = vpop.f32.mrf.mxu0
    %v2043 = vadd.f32 0.0, %v2042
    %v2044 = vpop.f32.mrf.mxu0
    %2045 = vmatprep.mubr.bf16.mxu0 0
    %2046 = vmatmul.mubr.bf16.gmra.mxu0 %v703
    %v2047 = vpop.f32.mrf.mxu0
    %v2048 = vadd.f32 0.0, %v2047
    %v2049 = vpop.f32.mrf.mxu0
    %v2050 = vpop.f32.mrf.mxu0
    %v2051 = vadd.f32 0.0, %v2050
    %v2052 = vpop.f32.mrf.mxu0
    %2053 = vdwg.mxu0
    %s2054 = scalar_lea.vmem [#allocation14], 256
    %v2055 = vld [vmem:[%s2054] sm:$0xff]
    %v2056 = vld [vmem:[%s2054 + $0x8] sm:$0xff]
    %v2057 = vld [vmem:[%s2054 + $0x10] sm:$0xff]
    %v2058 = vld [vmem:[%s2054 + $0x18] sm:$0xff]
    %v2059 = vld [vmem:[%s2054 + $0x20] sm:$0xff]
    %v2060 = vld [vmem:[%s2054 + $0x28] sm:$0xff]
    %v2061 = vld [vmem:[%s2054 + $0x30] sm:$0xff]
    %v2062 = vld [vmem:[%s2054 + $0x38] sm:$0xff]
    %v2063 = vld [vmem:[%s2054 + $0x40] sm:$0xff]
    %v2064 = vld [vmem:[%s2054 + $0x48] sm:$0xff]
    %v2065 = vld [vmem:[%s2054 + $0x50] sm:$0xff]
    %v2066 = vld [vmem:[%s2054 + $0x58] sm:$0xff]
    %v2067 = vld [vmem:[%s2054 + $0x60] sm:$0xff]
    %v2068 = vld [vmem:[%s2054 + $0x68] sm:$0xff]
    %v2069 = vld [vmem:[%s2054 + $0x70] sm:$0xff]
    %v2070 = vld [vmem:[%s2054 + $0x78] sm:$0xff]
    %s2071 = scalar_lea.vmem %s12, 2
    %v2072 = vld [vmem:[%s2071] sm:$0x1]
    %v2074 = vlaneseq
    %v2075 = vshrl.u32 %v2074, 7
    %v2076 = vsub.s32 0, %v2075
    %v2077 = vrot.slane %v2072, %v2076
    %2079 = vmatprep.subr.mxu0 0.0
    %2080 = vmatpush1.msra.mxu0 %v2070
    %2081 = vmatprep.subr.mxu0 0.0
    %2082 = vmatpush1.msra.mxu0 %v2069
    %2083 = vmatprep.subr.mxu0 0.0
    %2084 = vmatpush1.msra.mxu0 %v2068
    %2085 = vmatprep.subr.mxu0 0.0
    %2086 = vmatpush1.msra.mxu0 %v2067
    %2087 = vmatprep.subr.mxu0 0.0
    %2088 = vmatpush1.msra.mxu0 %v2066
    %2089 = vmatprep.subr.mxu0 0.0
    %2090 = vmatpush1.msra.mxu0 %v2065
    %2091 = vmatprep.subr.mxu0 0.0
    %2092 = vmatpush1.msra.mxu0 %v2064
    %2093 = vmatprep.subr.mxu0 0.0
    %2094 = vmatpush1.msra.mxu0 %v2063
    %2095 = vmatprep.subr.mxu0 0.0
    %2096 = vmatpush1.msra.mxu0 %v2062
    %2097 = vmatprep.subr.mxu0 0.0
    %2098 = vmatpush1.msra.mxu0 %v2061
    %2099 = vmatprep.subr.mxu0 0.0
    %2100 = vmatpush1.msra.mxu0 %v2060
    %2101 = vmatprep.subr.mxu0 0.0
    %2102 = vmatpush1.msra.mxu0 %v2059
    %2103 = vmatprep.subr.mxu0 0.0
    %2104 = vmatpush1.msra.mxu0 %v2058
    %2105 = vmatprep.subr.mxu0 0.0
    %2106 = vmatpush1.msra.mxu0 %v2057
    %2107 = vmatprep.subr.mxu0 0.0
    %2108 = vmatpush1.msra.mxu0 %v2056
    %2109 = vmatprep.subr.mxu0 0.0
    %2110 = vmatpush1.msra.mxu0 %v2055
    %2111 = vmatprep.subr.mxu0 0.0
    %2112 = vmatpush2.msra.mxu0 0.0
    %2113 = vmatprep.subr.mxu0 0.0
    %2114 = vmatpush2.msra.mxu0 0.0
    %2115 = vmatprep.subr.mxu0 0.0
    %2116 = vmatpush2.msra.mxu0 0.0
    %2117 = vmatprep.subr.mxu0 0.0
    %2118 = vmatpush2.msra.mxu0 0.0
    %2119 = vmatprep.subr.mxu0 0.0
    %2120 = vmatpush2.msra.mxu0 0.0
    %2121 = vmatprep.subr.mxu0 0.0
    %2122 = vmatpush2.msra.mxu0 0.0
    %2123 = vmatprep.subr.mxu0 0.0
    %2124 = vmatpush2.msra.mxu0 0.0
    %2125 = vmatprep.subr.mxu0 0.0
    %2126 = vmatpush2.msra.mxu0 0.0
    %2127 = vmatprep.subr.mxu0 0.0
    %2128 = vmatpush2.msra.mxu0 0.0
    %2129 = vmatprep.subr.mxu0 0.0
    %2130 = vmatpush2.msra.mxu0 0.0
    %2131 = vmatprep.subr.mxu0 0.0
    %2132 = vmatpush2.msra.mxu0 0.0
    %2133 = vmatprep.subr.mxu0 0.0
    %2134 = vmatpush2.msra.mxu0 0.0
    %2135 = vmatprep.subr.mxu0 0.0
    %2136 = vmatpush2.msra.mxu0 0.0
    %2137 = vmatprep.subr.mxu0 0.0
    %2138 = vmatpush2.msra.mxu0 0.0
    %2139 = vmatprep.subr.mxu0 0.0
    %2140 = vmatpush2.msra.mxu0 0.0
    %2141 = vmatprep.subr.mxu0 0.0
    %2142 = vmatpush2.msra.mxu0 0.0
    %2143 = vmatprep.mubr.f32.mxu0 0.0
    %2144 = vmatmul.mubr.f32.gmra.mxu0 %v1992
    %v2145 = vpop.f32.mrf.mxu0
    %v2146 = vadd.f32 %v2077, %v2145
    %v2147 = vpop.f32.mrf.mxu0
    %2148 = vmatprep.mubr.f32.mxu0 0.0
    %2149 = vmatmul.mubr.f32.gmra.mxu0 %v1995
    %v2150 = vpop.f32.mrf.mxu0
    %v2151 = vadd.f32 %v2077, %v2150
    %v2152 = vpop.f32.mrf.mxu0
    %2153 = vmatprep.mubr.f32.mxu0 0.0
    %2154 = vmatmul.mubr.f32.gmra.mxu0 %v2000
    %v2155 = vpop.f32.mrf.mxu0
    %v2156 = vadd.f32 %v2077, %v2155
    %v2157 = vpop.f32.mrf.mxu0
    %2158 = vmatprep.mubr.f32.mxu0 0.0
    %2159 = vmatmul.mubr.f32.gmra.mxu0 %v2003
    %v2160 = vpop.f32.mrf.mxu0
    %v2161 = vadd.f32 %v2077, %v2160
    %v2162 = vpop.f32.mrf.mxu0
    %2163 = vmatprep.mubr.f32.mxu0 0.0
    %2164 = vmatmul.mubr.f32.gmra.mxu0 %v2008
    %v2165 = vpop.f32.mrf.mxu0
    %v2166 = vadd.f32 %v2077, %v2165
    %v2167 = vpop.f32.mrf.mxu0
    %2168 = vmatprep.mubr.f32.mxu0 0.0
    %2169 = vmatmul.mubr.f32.gmra.mxu0 %v2011
    %v2170 = vpop.f32.mrf.mxu0
    %v2171 = vadd.f32 %v2077, %v2170
    %v2172 = vpop.f32.mrf.mxu0
    %2173 = vmatprep.mubr.f32.mxu0 0.0
    %2174 = vmatmul.mubr.f32.gmra.mxu0 %v2016
    %v2175 = vpop.f32.mrf.mxu0
    %v2176 = vadd.f32 %v2077, %v2175
    %v2177 = vpop.f32.mrf.mxu0
    %2178 = vmatprep.mubr.f32.mxu0 0.0
    %2179 = vmatmul.mubr.f32.gmra.mxu0 %v2019
    %v2180 = vpop.f32.mrf.mxu0
    %v2181 = vadd.f32 %v2077, %v2180
    %v2182 = vpop.f32.mrf.mxu0
    %2183 = vmatprep.mubr.f32.mxu0 0.0
    %2184 = vmatmul.mubr.f32.gmra.mxu0 %v2024
    %v2185 = vpop.f32.mrf.mxu0
    %v2186 = vadd.f32 %v2077, %v2185
    %v2187 = vpop.f32.mrf.mxu0
    %2188 = vmatprep.mubr.f32.mxu0 0.0
    %2189 = vmatmul.mubr.f32.gmra.mxu0 %v2027
    %v2190 = vpop.f32.mrf.mxu0
    %v2191 = vadd.f32 %v2077, %v2190
    %v2192 = vpop.f32.mrf.mxu0
    %2193 = vmatprep.mubr.f32.mxu0 0.0
    %2194 = vmatmul.mubr.f32.gmra.mxu0 %v2032
    %v2195 = vpop.f32.mrf.mxu0
    %v2196 = vadd.f32 %v2077, %v2195
    %v2197 = vpop.f32.mrf.mxu0
    %2198 = vmatprep.mubr.f32.mxu0 0.0
    %2199 = vmatmul.mubr.f32.gmra.mxu0 %v2035
    %v2200 = vpop.f32.mrf.mxu0
    %v2201 = vadd.f32 %v2077, %v2200
    %v2202 = vpop.f32.mrf.mxu0
    %2203 = vmatprep.mubr.f32.mxu0 0.0
    %2204 = vmatmul.mubr.f32.gmra.mxu0 %v2040
    %v2205 = vpop.f32.mrf.mxu0
    %v2206 = vadd.f32 %v2077, %v2205
    %v2207 = vpop.f32.mrf.mxu0
    %2208 = vmatprep.mubr.f32.mxu0 0.0
    %2209 = vmatmul.mubr.f32.gmra.mxu0 %v2043
    %v2210 = vpop.f32.mrf.mxu0
    %v2211 = vadd.f32 %v2077, %v2210
    %v2212 = vpop.f32.mrf.mxu0
    %2213 = vmatprep.mubr.f32.mxu0 0.0
    %2214 = vmatmul.mubr.f32.gmra.mxu0 %v2048
    %v2215 = vpop.f32.mrf.mxu0
    %v2216 = vadd.f32 %v2077, %v2215
    %v2217 = vpop.f32.mrf.mxu0
    %2218 = vmatprep.mubr.f32.mxu0 0.0
    %2219 = vmatmul.mubr.f32.gmra.mxu0 %v2051
    %v2220 = vpop.f32.mrf.mxu0
    %v2221 = vadd.f32 %v2077, %v2220
    %v2222 = vpop.f32.mrf.mxu0
    %2223 = vdwg.mxu0
    %v2224 = vmax.f32 %v2146, 0.0
    %v2225 = vmax.f32 %v2151, 0.0
    %v2226 = vmax.f32 %v2156, 0.0
    %v2227 = vmax.f32 %v2161, 0.0
    %v2228 = vmax.f32 %v2166, 0.0
    %v2229 = vmax.f32 %v2171, 0.0
    %v2230 = vmax.f32 %v2176, 0.0
    %v2231 = vmax.f32 %v2181, 0.0
    %v2232 = vmax.f32 %v2186, 0.0
    %v2233 = vmax.f32 %v2191, 0.0
    %v2234 = vmax.f32 %v2196, 0.0
    %v2235 = vmax.f32 %v2201, 0.0
    %v2236 = vmax.f32 %v2206, 0.0
    %v2237 = vmax.f32 %v2211, 0.0
    %v2238 = vmax.f32 %v2216, 0.0
    %v2239 = vmax.f32 %v2221, 0.0
    %s2240 = scalar_lea.vmem [#allocation15], 256
    %v2241 = vld [vmem:[%s2240] sm:$0xff]
    %v2242 = vld [vmem:[%s2240 + $0x8] sm:$0xff]
    %v2243 = vld [vmem:[%s2240 + $0x10] sm:$0xff]
    %v2244 = vld [vmem:[%s2240 + $0x18] sm:$0xff]
    %v2245 = vld [vmem:[%s2240 + $0x20] sm:$0xff]
    %v2246 = vld [vmem:[%s2240 + $0x28] sm:$0xff]
    %v2247 = vld [vmem:[%s2240 + $0x30] sm:$0xff]
    %v2248 = vld [vmem:[%s2240 + $0x38] sm:$0xff]
    %v2249 = vld [vmem:[%s2240 + $0x40] sm:$0xff]
    %v2250 = vld [vmem:[%s2240 + $0x48] sm:$0xff]
    %v2251 = vld [vmem:[%s2240 + $0x50] sm:$0xff]
    %v2252 = vld [vmem:[%s2240 + $0x58] sm:$0xff]
    %v2253 = vld [vmem:[%s2240 + $0x60] sm:$0xff]
    %v2254 = vld [vmem:[%s2240 + $0x68] sm:$0xff]
    %v2255 = vld [vmem:[%s2240 + $0x70] sm:$0xff]
    %v2256 = vld [vmem:[%s2240 + $0x78] sm:$0xff]
    %s2257 = scalar_lea.vmem %s14, 2
    %v2258 = vld [vmem:[%s2257] sm:$0x1]
    %v2260 = vlaneseq
    %v2261 = vshrl.u32 %v2260, 7
    %v2262 = vsub.s32 0, %v2261
    %v2263 = vrot.slane %v2258, %v2262
    %2265 = vmatprep.subr.mxu0 0.0
    %2266 = vmatpush1.msra.mxu0 %v2256
    %2267 = vmatprep.subr.mxu0 0.0
    %2268 = vmatpush1.msra.mxu0 %v2255
    %2269 = vmatprep.subr.mxu0 0.0
    %2270 = vmatpush1.msra.mxu0 %v2254
    %2271 = vmatprep.subr.mxu0 0.0
    %2272 = vmatpush1.msra.mxu0 %v2253
    %2273 = vmatprep.subr.mxu0 0.0
    %2274 = vmatpush1.msra.mxu0 %v2252
    %2275 = vmatprep.subr.mxu0 0.0
    %2276 = vmatpush1.msra.mxu0 %v2251
    %2277 = vmatprep.subr.mxu0 0.0
    %2278 = vmatpush1.msra.mxu0 %v2250
    %2279 = vmatprep.subr.mxu0 0.0
    %2280 = vmatpush1.msra.mxu0 %v2249
    %2281 = vmatprep.subr.mxu0 0.0
    %2282 = vmatpush1.msra.mxu0 %v2248
    %2283 = vmatprep.subr.mxu0 0.0
    %2284 = vmatpush1.msra.mxu0 %v2247
    %2285 = vmatprep.subr.mxu0 0.0
    %2286 = vmatpush1.msra.mxu0 %v2246
    %2287 = vmatprep.subr.mxu0 0.0
    %2288 = vmatpush1.msra.mxu0 %v2245
    %2289 = vmatprep.subr.mxu0 0.0
    %2290 = vmatpush1.msra.mxu0 %v2244
    %2291 = vmatprep.subr.mxu0 0.0
    %2292 = vmatpush1.msra.mxu0 %v2243
    %2293 = vmatprep.subr.mxu0 0.0
    %2294 = vmatpush1.msra.mxu0 %v2242
    %2295 = vmatprep.subr.mxu0 0.0
    %2296 = vmatpush1.msra.mxu0 %v2241
    %2297 = vmatprep.subr.mxu0 0.0
    %2298 = vmatpush2.msra.mxu0 0.0
    %2299 = vmatprep.subr.mxu0 0.0
    %2300 = vmatpush2.msra.mxu0 0.0
    %2301 = vmatprep.subr.mxu0 0.0
    %2302 = vmatpush2.msra.mxu0 0.0
    %2303 = vmatprep.subr.mxu0 0.0
    %2304 = vmatpush2.msra.mxu0 0.0
    %2305 = vmatprep.subr.mxu0 0.0
    %2306 = vmatpush2.msra.mxu0 0.0
    %2307 = vmatprep.subr.mxu0 0.0
    %2308 = vmatpush2.msra.mxu0 0.0
    %2309 = vmatprep.subr.mxu0 0.0
    %2310 = vmatpush2.msra.mxu0 0.0
    %2311 = vmatprep.subr.mxu0 0.0
    %2312 = vmatpush2.msra.mxu0 0.0
    %2313 = vmatprep.subr.mxu0 0.0
    %2314 = vmatpush2.msra.mxu0 0.0
    %2315 = vmatprep.subr.mxu0 0.0
    %2316 = vmatpush2.msra.mxu0 0.0
    %2317 = vmatprep.subr.mxu0 0.0
    %2318 = vmatpush2.msra.mxu0 0.0
    %2319 = vmatprep.subr.mxu0 0.0
    %2320 = vmatpush2.msra.mxu0 0.0
    %2321 = vmatprep.subr.mxu0 0.0
    %2322 = vmatpush2.msra.mxu0 0.0
    %2323 = vmatprep.subr.mxu0 0.0
    %2324 = vmatpush2.msra.mxu0 0.0
    %2325 = vmatprep.subr.mxu0 0.0
    %2326 = vmatpush2.msra.mxu0 0.0
    %2327 = vmatprep.subr.mxu0 0.0
    %2328 = vmatpush2.msra.mxu0 0.0
    %2329 = vmatprep.mubr.f32.mxu0 0.0
    %2330 = vmatmul.mubr.f32.gmra.mxu0 %v2224
    %v2331 = vpop.f32.mrf.mxu0
    %v2332 = vadd.f32 %v2263, %v2331
    %v2333 = vpop.f32.mrf.mxu0
    %2334 = vmatprep.mubr.f32.mxu0 0.0
    %2335 = vmatmul.mubr.f32.gmra.mxu0 %v2225
    %v2336 = vpop.f32.mrf.mxu0
    %v2337 = vadd.f32 %v2263, %v2336
    %v2338 = vpop.f32.mrf.mxu0
    %2339 = vmatprep.mubr.f32.mxu0 0.0
    %2340 = vmatmul.mubr.f32.gmra.mxu0 %v2226
    %v2341 = vpop.f32.mrf.mxu0
    %v2342 = vadd.f32 %v2263, %v2341
    %v2343 = vpop.f32.mrf.mxu0
    %2344 = vmatprep.mubr.f32.mxu0 0.0
    %2345 = vmatmul.mubr.f32.gmra.mxu0 %v2227
    %v2346 = vpop.f32.mrf.mxu0
    %v2347 = vadd.f32 %v2263, %v2346
    %v2348 = vpop.f32.mrf.mxu0
    %2349 = vmatprep.mubr.f32.mxu0 0.0
    %2350 = vmatmul.mubr.f32.gmra.mxu0 %v2228
    %v2351 = vpop.f32.mrf.mxu0
    %v2352 = vadd.f32 %v2263, %v2351
    %v2353 = vpop.f32.mrf.mxu0
    %2354 = vmatprep.mubr.f32.mxu0 0.0
    %2355 = vmatmul.mubr.f32.gmra.mxu0 %v2229
    %v2356 = vpop.f32.mrf.mxu0
    %v2357 = vadd.f32 %v2263, %v2356
    %v2358 = vpop.f32.mrf.mxu0
    %2359 = vmatprep.mubr.f32.mxu0 0.0
    %2360 = vmatmul.mubr.f32.gmra.mxu0 %v2230
    %v2361 = vpop.f32.mrf.mxu0
    %v2362 = vadd.f32 %v2263, %v2361
    %v2363 = vpop.f32.mrf.mxu0
    %2364 = vmatprep.mubr.f32.mxu0 0.0
    %2365 = vmatmul.mubr.f32.gmra.mxu0 %v2231
    %v2366 = vpop.f32.mrf.mxu0
    %v2367 = vadd.f32 %v2263, %v2366
    %v2368 = vpop.f32.mrf.mxu0
    %2369 = vmatprep.mubr.f32.mxu0 0.0
    %2370 = vmatmul.mubr.f32.gmra.mxu0 %v2232
    %v2371 = vpop.f32.mrf.mxu0
    %v2372 = vadd.f32 %v2263, %v2371
    %v2373 = vpop.f32.mrf.mxu0
    %2374 = vmatprep.mubr.f32.mxu0 0.0
    %2375 = vmatmul.mubr.f32.gmra.mxu0 %v2233
    %v2376 = vpop.f32.mrf.mxu0
    %v2377 = vadd.f32 %v2263, %v2376
    %v2378 = vpop.f32.mrf.mxu0
    %2379 = vmatprep.mubr.f32.mxu0 0.0
    %2380 = vmatmul.mubr.f32.gmra.mxu0 %v2234
    %v2381 = vpop.f32.mrf.mxu0
    %v2382 = vadd.f32 %v2263, %v2381
    %v2383 = vpop.f32.mrf.mxu0
    %2384 = vmatprep.mubr.f32.mxu0 0.0
    %2385 = vmatmul.mubr.f32.gmra.mxu0 %v2235
    %v2386 = vpop.f32.mrf.mxu0
    %v2387 = vadd.f32 %v2263, %v2386
    %v2388 = vpop.f32.mrf.mxu0
    %2389 = vmatprep.mubr.f32.mxu0 0.0
    %2390 = vmatmul.mubr.f32.gmra.mxu0 %v2236
    %v2391 = vpop.f32.mrf.mxu0
    %v2392 = vadd.f32 %v2263, %v2391
    %v2393 = vpop.f32.mrf.mxu0
    %2394 = vmatprep.mubr.f32.mxu0 0.0
    %2395 = vmatmul.mubr.f32.gmra.mxu0 %v2237
    %v2396 = vpop.f32.mrf.mxu0
    %v2397 = vadd.f32 %v2263, %v2396
    %v2398 = vpop.f32.mrf.mxu0
    %2399 = vmatprep.mubr.f32.mxu0 0.0
    %2400 = vmatmul.mubr.f32.gmra.mxu0 %v2238
    %v2401 = vpop.f32.mrf.mxu0
    %v2402 = vadd.f32 %v2263, %v2401
    %v2403 = vpop.f32.mrf.mxu0
    %2404 = vmatprep.mubr.f32.mxu0 0.0
    %2405 = vmatmul.mubr.f32.gmra.mxu0 %v2239
    %v2406 = vpop.f32.mrf.mxu0
    %v2407 = vadd.f32 %v2263, %v2406
    %v2408 = vpop.f32.mrf.mxu0
    %2409 = vdwg.mxu0
    %v2410 = vmax.f32 %v2332, 0.0
    %v2411 = vmax.f32 %v2337, 0.0
    %v2412 = vmax.f32 %v2342, 0.0
    %v2413 = vmax.f32 %v2347, 0.0
    %v2414 = vmax.f32 %v2352, 0.0
    %v2415 = vmax.f32 %v2357, 0.0
    %v2416 = vmax.f32 %v2362, 0.0
    %v2417 = vmax.f32 %v2367, 0.0
    %v2418 = vmax.f32 %v2372, 0.0
    %v2419 = vmax.f32 %v2377, 0.0
    %v2420 = vmax.f32 %v2382, 0.0
    %v2421 = vmax.f32 %v2387, 0.0
    %v2422 = vmax.f32 %v2392, 0.0
    %v2423 = vmax.f32 %v2397, 0.0
    %v2424 = vmax.f32 %v2402, 0.0
    %v2425 = vmax.f32 %v2407, 0.0
    %v2426 = vmul.f32 %v2410, %v543
    %v2427 = vmul.f32 %v2411, %v548
    %v2428 = vmul.f32 %v2412, %v553
    %v2429 = vmul.f32 %v2413, %v558
    %v2430 = vmul.f32 %v2414, %v563
    %v2431 = vmul.f32 %v2415, %v568
    %v2432 = vmul.f32 %v2416, %v573
    %v2433 = vmul.f32 %v2417, %v578
    %v2434 = vmul.f32 %v2418, %v583
    %v2435 = vmul.f32 %v2419, %v588
    %v2436 = vmul.f32 %v2420, %v593
    %v2437 = vmul.f32 %v2421, %v598
    %v2438 = vmul.f32 %v2422, %v603
    %v2439 = vmul.f32 %v2423, %v608
    %v2440 = vmul.f32 %v2424, %v613
    %v2441 = vmul.f32 %v2425, %v618
    %v2442 = vadd.f32 %v2426, %v2427
    %v2443 = vadd.f32 %v2442, %v2428
    %v2444 = vadd.f32 %v2443, %v2429
    %v2445 = vadd.f32 %v2444, %v2430
    %v2446 = vadd.f32 %v2445, %v2431
    %v2447 = vadd.f32 %v2446, %v2432
    %v2448 = vadd.f32 %v2447, %v2433
    %v2449 = vadd.f32 %v2448, %v2434
    %v2450 = vadd.f32 %v2449, %v2435
    %v2451 = vadd.f32 %v2450, %v2436
    %v2452 = vadd.f32 %v2451, %v2437
    %v2453 = vadd.f32 %v2452, %v2438
    %v2454 = vadd.f32 %v2453, %v2439
    %v2455 = vadd.f32 %v2454, %v2440
    %v2456 = vadd.f32 %v2455, %v2441
    %v2457 = vrot.slane %v2456, 4
    %v2458 = vadd.f32 %v2456, %v2457
    %v2459 = vrot.slane %v2458, 2
    %v2460 = vadd.f32 %v2458, %v2459
    %v2461 = vrot.slane %v2460, 1
    %v2462 = vadd.f32 %v2460, %v2461
    %v2463 = vmul.f32 %v2426, %v2426
    %v2464 = vmul.f32 %v2427, %v2427
    %v2465 = vmul.f32 %v2428, %v2428
    %v2466 = vmul.f32 %v2429, %v2429
    %v2467 = vmul.f32 %v2430, %v2430
    %v2468 = vmul.f32 %v2431, %v2431
    %v2469 = vmul.f32 %v2432, %v2432
    %v2470 = vmul.f32 %v2433, %v2433
    %v2471 = vmul.f32 %v2434, %v2434
    %v2472 = vmul.f32 %v2435, %v2435
    %v2473 = vmul.f32 %v2436, %v2436
    %v2474 = vmul.f32 %v2437, %v2437
    %v2475 = vmul.f32 %v2438, %v2438
    %v2476 = vmul.f32 %v2439, %v2439
    %v2477 = vmul.f32 %v2440, %v2440
    %v2478 = vmul.f32 %v2441, %v2441
    %v2479 = vadd.f32 %v2463, %v2464
    %v2480 = vadd.f32 %v2479, %v2465
    %v2481 = vadd.f32 %v2480, %v2466
    %v2482 = vadd.f32 %v2481, %v2467
    %v2483 = vadd.f32 %v2482, %v2468
    %v2484 = vadd.f32 %v2483, %v2469
    %v2485 = vadd.f32 %v2484, %v2470
    %v2486 = vadd.f32 %v2485, %v2471
    %v2487 = vadd.f32 %v2486, %v2472
    %v2488 = vadd.f32 %v2487, %v2473
    %v2489 = vadd.f32 %v2488, %v2474
    %v2490 = vadd.f32 %v2489, %v2475
    %v2491 = vadd.f32 %v2490, %v2476
    %v2492 = vadd.f32 %v2491, %v2477
    %v2493 = vadd.f32 %v2492, %v2478
    %v2494 = vrot.slane %v2493, 4
    %v2495 = vadd.f32 %v2493, %v2494
    %v2496 = vrot.slane %v2495, 2
    %v2497 = vadd.f32 %v2495, %v2496
    %v2498 = vrot.slane %v2497, 1
    %v2499 = vadd.f32 %v2497, %v2498
    %v2500 = vmul.f32 %v2462, %v1251
    %v2501 = vmul.f32 %v2499, %v1251
    %v2502 = vmul.f32 %v2500, %v2500
    %v2503 = vsub.f32 %v2501, %v2502
    %v2504 = vmax.f32 %v2503, 0.0
    %v2505 = vsub.f32 %v2426, %v2500
    %v2506 = vsub.f32 %v2427, %v2500
    %v2507 = vsub.f32 %v2428, %v2500
    %v2508 = vsub.f32 %v2429, %v2500
    %v2509 = vsub.f32 %v2430, %v2500
    %v2510 = vsub.f32 %v2431, %v2500
    %v2511 = vsub.f32 %v2432, %v2500
    %v2512 = vsub.f32 %v2433, %v2500
    %v2513 = vsub.f32 %v2434, %v2500
    %v2514 = vsub.f32 %v2435, %v2500
    %v2515 = vsub.f32 %v2436, %v2500
    %v2516 = vsub.f32 %v2437, %v2500
    %v2517 = vsub.f32 %v2438, %v2500
    %v2518 = vsub.f32 %v2439, %v2500
    %v2519 = vsub.f32 %v2440, %v2500
    %v2520 = vsub.f32 %v2441, %v2500
    %v2521 = vadd.f32 %v2504, 1e-05
    %v2522 = vrsqrt.pop %v2521
    %v2523 = vmul.f32 %v2505, %v2522
    %v2524 = vmul.f32 %v2506, %v2522
    %v2525 = vmul.f32 %v2507, %v2522
    %v2526 = vmul.f32 %v2508, %v2522
    %v2527 = vmul.f32 %v2509, %v2522
    %v2528 = vmul.f32 %v2510, %v2522
    %v2529 = vmul.f32 %v2511, %v2522
    %v2530 = vmul.f32 %v2512, %v2522
    %v2531 = vmul.f32 %v2513, %v2522
    %v2532 = vmul.f32 %v2514, %v2522
    %v2533 = vmul.f32 %v2515, %v2522
    %v2534 = vmul.f32 %v2516, %v2522
    %v2535 = vmul.f32 %v2517, %v2522
    %v2536 = vmul.f32 %v2518, %v2522
    %v2537 = vmul.f32 %v2519, %v2522
    %v2538 = vmul.f32 %v2520, %v2522
    %s2539 = sld [smem:[#allocation7 + $0x2]]
    %v2540 = vstv %s2539
    %v2541 = vmul.f32 %v2540, %v2523
    %v2542 = vmul.f32 %v2540, %v2524
    %v2543 = vmul.f32 %v2540, %v2525
    %v2544 = vmul.f32 %v2540, %v2526
    %v2545 = vmul.f32 %v2540, %v2527
    %v2546 = vmul.f32 %v2540, %v2528
    %v2547 = vmul.f32 %v2540, %v2529
    %v2548 = vmul.f32 %v2540, %v2530
    %v2549 = vmul.f32 %v2540, %v2531
    %v2550 = vmul.f32 %v2540, %v2532
    %v2551 = vmul.f32 %v2540, %v2533
    %v2552 = vmul.f32 %v2540, %v2534
    %v2553 = vmul.f32 %v2540, %v2535
    %v2554 = vmul.f32 %v2540, %v2536
    %v2555 = vmul.f32 %v2540, %v2537
    %v2556 = vmul.f32 %v2540, %v2538
    %v2557 = vadd.f32 %v1933, %v2541
    %v2558 = vadd.f32 %v1934, %v2542
    %v2559 = vadd.f32 %v1935, %v2543
    %v2560 = vadd.f32 %v1936, %v2544
    %v2561 = vadd.f32 %v1937, %v2545
    %v2562 = vadd.f32 %v1938, %v2546
    %v2563 = vadd.f32 %v1939, %v2547
    %v2564 = vadd.f32 %v1940, %v2548
    %v2565 = vadd.f32 %v1941, %v2549
    %v2566 = vadd.f32 %v1942, %v2550
    %v2567 = vadd.f32 %v1943, %v2551
    %v2568 = vadd.f32 %v1944, %v2552
    %v2569 = vadd.f32 %v1945, %v2553
    %v2570 = vadd.f32 %v1946, %v2554
    %v2571 = vadd.f32 %v1947, %v2555
    %v2572 = vadd.f32 %v1948, %v2556
    %s2573 = sld [smem:[#allocation5]]
    %v2574 = vstv %s2573
    %v2575 = vadd.f32 %v2557, %v2574
    %v2576 = vadd.f32 %v2558, %v2574
    %v2577 = vadd.f32 %v2559, %v2574
    %v2578 = vadd.f32 %v2560, %v2574
    %v2579 = vadd.f32 %v2561, %v2574
    %v2580 = vadd.f32 %v2562, %v2574
    %v2581 = vadd.f32 %v2563, %v2574
    %v2582 = vadd.f32 %v2564, %v2574
    %v2583 = vadd.f32 %v2565, %v2574
    %v2584 = vadd.f32 %v2566, %v2574
    %v2585 = vadd.f32 %v2567, %v2574
    %v2586 = vadd.f32 %v2568, %v2574
    %v2587 = vadd.f32 %v2569, %v2574
    %v2588 = vadd.f32 %v2570, %v2574
    %v2589 = vadd.f32 %v2571, %v2574
    %v2590 = vadd.f32 %v2572, %v2574
    %v2591 = vmul.f32 %v2575, %v543
    %v2592 = vmul.f32 %v2576, %v548
    %v2593 = vmul.f32 %v2577, %v553
    %v2594 = vmul.f32 %v2578, %v558
    %v2595 = vmul.f32 %v2579, %v563
    %v2596 = vmul.f32 %v2580, %v568
    %v2597 = vmul.f32 %v2581, %v573
    %v2598 = vmul.f32 %v2582, %v578
    %v2599 = vmul.f32 %v2583, %v583
    %v2600 = vmul.f32 %v2584, %v588
    %v2601 = vmul.f32 %v2585, %v593
    %v2602 = vmul.f32 %v2586, %v598
    %v2603 = vmul.f32 %v2587, %v603
    %v2604 = vmul.f32 %v2588, %v608
    %v2605 = vmul.f32 %v2589, %v613
    %v2606 = vmul.f32 %v2590, %v618
    %v2607 = vld [vmem:[#allocation17] sm:$0xff]
    %v2608 = vld [vmem:[#allocation17 + $0x8] sm:$0xff]
    %v2609 = vld [vmem:[#allocation17 + $0x10] sm:$0xff]
    %v2610 = vld [vmem:[#allocation17 + $0x18] sm:$0xff]
    %v2611 = vld [vmem:[#allocation17 + $0x20] sm:$0xff]
    %v2612 = vld [vmem:[#allocation17 + $0x28] sm:$0xff]
    %v2613 = vld [vmem:[#allocation17 + $0x30] sm:$0xff]
    %v2614 = vld [vmem:[#allocation17 + $0x38] sm:$0xff]
    %v2615 = vld [vmem:[#allocation17 + $0x40] sm:$0xff]
    %v2616 = vld [vmem:[#allocation17 + $0x48] sm:$0xff]
    %v2617 = vld [vmem:[#allocation17 + $0x50] sm:$0xff]
    %v2618 = vld [vmem:[#allocation17 + $0x58] sm:$0xff]
    %v2619 = vld [vmem:[#allocation17 + $0x60] sm:$0xff]
    %v2620 = vld [vmem:[#allocation17 + $0x68] sm:$0xff]
    %v2621 = vld [vmem:[#allocation17 + $0x70] sm:$0xff]
    %v2622 = vld [vmem:[#allocation17 + $0x78] sm:$0xff]
    %2623 = vmatprep.subr.mxu0 0.0
    %2624 = vmatpush1.msra.mxu0 %v2622
    %2625 = vmatprep.subr.mxu0 0.0
    %2626 = vmatpush1.msra.mxu0 %v2621
    %2627 = vmatprep.subr.mxu0 0.0
    %2628 = vmatpush1.msra.mxu0 %v2620
    %2629 = vmatprep.subr.mxu0 0.0
    %2630 = vmatpush1.msra.mxu0 %v2619
    %2631 = vmatprep.subr.mxu0 0.0
    %2632 = vmatpush1.msra.mxu0 %v2618
    %2633 = vmatprep.subr.mxu0 0.0
    %2634 = vmatpush1.msra.mxu0 %v2617
    %2635 = vmatprep.subr.mxu0 0.0
    %2636 = vmatpush1.msra.mxu0 %v2616
    %2637 = vmatprep.subr.mxu0 0.0
    %2638 = vmatpush1.msra.mxu0 %v2615
    %2639 = vmatprep.subr.mxu0 0.0
    %2640 = vmatpush1.msra.mxu0 %v2614
    %2641 = vmatprep.subr.mxu0 0.0
    %2642 = vmatpush1.msra.mxu0 %v2613
    %2643 = vmatprep.subr.mxu0 0.0
    %2644 = vmatpush1.msra.mxu0 %v2612
    %2645 = vmatprep.subr.mxu0 0.0
    %2646 = vmatpush1.msra.mxu0 %v2611
    %2647 = vmatprep.subr.mxu0 0.0
    %2648 = vmatpush1.msra.mxu0 %v2610
    %2649 = vmatprep.subr.mxu0 0.0
    %2650 = vmatpush1.msra.mxu0 %v2609
    %2651 = vmatprep.subr.mxu0 0.0
    %2652 = vmatpush1.msra.mxu0 %v2608
    %2653 = vmatprep.subr.mxu0 0.0
    %2654 = vmatpush1.msra.mxu0 %v2607
    %2655 = vmatprep.subr.mxu0 0.0
    %2656 = vmatpush2.msra.mxu0 0.0
    %2657 = vmatprep.subr.mxu0 0.0
    %2658 = vmatpush2.msra.mxu0 0.0
    %2659 = vmatprep.subr.mxu0 0.0
    %2660 = vmatpush2.msra.mxu0 0.0
    %2661 = vmatprep.subr.mxu0 0.0
    %2662 = vmatpush2.msra.mxu0 0.0
    %2663 = vmatprep.subr.mxu0 0.0
    %2664 = vmatpush2.msra.mxu0 0.0
    %2665 = vmatprep.subr.mxu0 0.0
    %2666 = vmatpush2.msra.mxu0 0.0
    %2667 = vmatprep.subr.mxu0 0.0
    %2668 = vmatpush2.msra.mxu0 0.0
    %2669 = vmatprep.subr.mxu0 0.0
    %2670 = vmatpush2.msra.mxu0 0.0
    %2671 = vmatprep.subr.mxu0 0.0
    %2672 = vmatpush2.msra.mxu0 0.0
    %2673 = vmatprep.subr.mxu0 0.0
    %2674 = vmatpush2.msra.mxu0 0.0
    %2675 = vmatprep.subr.mxu0 0.0
    %2676 = vmatpush2.msra.mxu0 0.0
    %2677 = vmatprep.subr.mxu0 0.0
    %2678 = vmatpush2.msra.mxu0 0.0
    %2679 = vmatprep.subr.mxu0 0.0
    %2680 = vmatpush2.msra.mxu0 0.0
    %2681 = vmatprep.subr.mxu0 0.0
    %2682 = vmatpush2.msra.mxu0 0.0
    %2683 = vmatprep.subr.mxu0 0.0
    %2684 = vmatpush2.msra.mxu0 0.0
    %2685 = vmatprep.subr.mxu0 0.0
    %2686 = vmatpush2.msra.mxu0 0.0
    %2687 = vmatprep.mubr.f32.mxu0 0.0
    %2688 = vmatmul.mubr.f32.gmra.mxu0 %v2591
    %v2689 = vpop.f32.mrf.mxu0
    %v2690 = vadd.f32 0.0, %v2689
    %v2691 = vpop.f32.mrf.mxu0
    %2692 = vmatprep.mubr.f32.mxu0 0.0
    %2693 = vmatmul.mubr.f32.gmra.mxu0 %v2592
    %v2694 = vpop.f32.mrf.mxu0
    %v2695 = vadd.f32 0.0, %v2694
    %v2696 = vpop.f32.mrf.mxu0
    %2697 = vmatprep.mubr.f32.mxu0 0.0
    %2698 = vmatmul.mubr.f32.gmra.mxu0 %v2593
    %v2699 = vpop.f32.mrf.mxu0
    %v2700 = vadd.f32 0.0, %v2699
    %v2701 = vpop.f32.mrf.mxu0
    %2702 = vmatprep.mubr.f32.mxu0 0.0
    %2703 = vmatmul.mubr.f32.gmra.mxu0 %v2594
    %v2704 = vpop.f32.mrf.mxu0
    %v2705 = vadd.f32 0.0, %v2704
    %v2706 = vpop.f32.mrf.mxu0
    %2707 = vmatprep.mubr.f32.mxu0 0.0
    %2708 = vmatmul.mubr.f32.gmra.mxu0 %v2595
    %v2709 = vpop.f32.mrf.mxu0
    %v2710 = vadd.f32 0.0, %v2709
    %v2711 = vpop.f32.mrf.mxu0
    %2712 = vmatprep.mubr.f32.mxu0 0.0
    %2713 = vmatmul.mubr.f32.gmra.mxu0 %v2596
    %v2714 = vpop.f32.mrf.mxu0
    %v2715 = vadd.f32 0.0, %v2714
    %v2716 = vpop.f32.mrf.mxu0
    %2717 = vmatprep.mubr.f32.mxu0 0.0
    %2718 = vmatmul.mubr.f32.gmra.mxu0 %v2597
    %v2719 = vpop.f32.mrf.mxu0
    %v2720 = vadd.f32 0.0, %v2719
    %v2721 = vpop.f32.mrf.mxu0
    %2722 = vmatprep.mubr.f32.mxu0 0.0
    %2723 = vmatmul.mubr.f32.gmra.mxu0 %v2598
    %v2724 = vpop.f32.mrf.mxu0
    %v2725 = vadd.f32 0.0, %v2724
    %v2726 = vpop.f32.mrf.mxu0
    %2727 = vmatprep.mubr.f32.mxu0 0.0
    %2728 = vmatmul.mubr.f32.gmra.mxu0 %v2599
    %v2729 = vpop.f32.mrf.mxu0
    %v2730 = vadd.f32 0.0, %v2729
    %v2731 = vpop.f32.mrf.mxu0
    %2732 = vmatprep.mubr.f32.mxu0 0.0
    %2733 = vmatmul.mubr.f32.gmra.mxu0 %v2600
    %v2734 = vpop.f32.mrf.mxu0
    %v2735 = vadd.f32 0.0, %v2734
    %v2736 = vpop.f32.mrf.mxu0
    %2737 = vmatprep.mubr.f32.mxu0 0.0
    %2738 = vmatmul.mubr.f32.gmra.mxu0 %v2601
    %v2739 = vpop.f32.mrf.mxu0
    %v2740 = vadd.f32 0.0, %v2739
    %v2741 = vpop.f32.mrf.mxu0
    %2742 = vmatprep.mubr.f32.mxu0 0.0
    %2743 = vmatmul.mubr.f32.gmra.mxu0 %v2602
    %v2744 = vpop.f32.mrf.mxu0
    %v2745 = vadd.f32 0.0, %v2744
    %v2746 = vpop.f32.mrf.mxu0
    %2747 = vmatprep.mubr.f32.mxu0 0.0
    %2748 = vmatmul.mubr.f32.gmra.mxu0 %v2603
    %v2749 = vpop.f32.mrf.mxu0
    %v2750 = vadd.f32 0.0, %v2749
    %v2751 = vpop.f32.mrf.mxu0
    %2752 = vmatprep.mubr.f32.mxu0 0.0
    %2753 = vmatmul.mubr.f32.gmra.mxu0 %v2604
    %v2754 = vpop.f32.mrf.mxu0
    %v2755 = vadd.f32 0.0, %v2754
    %v2756 = vpop.f32.mrf.mxu0
    %2757 = vmatprep.mubr.f32.mxu0 0.0
    %2758 = vmatmul.mubr.f32.gmra.mxu0 %v2605
    %v2759 = vpop.f32.mrf.mxu0
    %v2760 = vadd.f32 0.0, %v2759
    %v2761 = vpop.f32.mrf.mxu0
    %2762 = vmatprep.mubr.f32.mxu0 0.0
    %2763 = vmatmul.mubr.f32.gmra.mxu0 %v2606
    %v2764 = vpop.f32.mrf.mxu0
    %v2765 = vadd.f32 0.0, %v2764
    %v2766 = vpop.f32.mrf.mxu0
    %2767 = vdwg.mxu0
    %vm2768 = vcmp.ge.f32.partialorder %v2690, 0.0
    %vm2769 = vcmp.ge.f32.partialorder %v2695, 0.0
    %vm2770 = vcmp.ge.f32.partialorder %v2700, 0.0
    %vm2771 = vcmp.ge.f32.partialorder %v2705, 0.0
    %vm2772 = vcmp.ge.f32.partialorder %v2710, 0.0
    %vm2773 = vcmp.ge.f32.partialorder %v2715, 0.0
    %vm2774 = vcmp.ge.f32.partialorder %v2720, 0.0
    %vm2775 = vcmp.ge.f32.partialorder %v2725, 0.0
    %vm2776 = vcmp.ge.f32.partialorder %v2730, 0.0
    %vm2777 = vcmp.ge.f32.partialorder %v2735, 0.0
    %vm2778 = vcmp.ge.f32.partialorder %v2740, 0.0
    %vm2779 = vcmp.ge.f32.partialorder %v2745, 0.0
    %vm2780 = vcmp.ge.f32.partialorder %v2750, 0.0
    %vm2781 = vcmp.ge.f32.partialorder %v2755, 0.0
    %vm2782 = vcmp.ge.f32.partialorder %v2760, 0.0
    %vm2783 = vcmp.ge.f32.partialorder %v2765, 0.0
    %v2784 = vsel %vm2768, 1, 0
    %v2785 = vsel %vm2769, 1, 0
    %v2786 = vsel %vm2770, 1, 0
    %v2787 = vsel %vm2771, 1, 0
    %v2788 = vsel %vm2772, 1, 0
    %v2789 = vsel %vm2773, 1, 0
    %v2790 = vsel %vm2774, 1, 0
    %v2791 = vsel %vm2775, 1, 0
    %v2792 = vsel %vm2776, 1, 0
    %v2793 = vsel %vm2777, 1, 0
    %v2794 = vsel %vm2778, 1, 0
    %v2795 = vsel %vm2779, 1, 0
    %v2796 = vsel %vm2780, 1, 0
    %v2797 = vsel %vm2781, 1, 0
    %v2798 = vsel %vm2782, 1, 0
    %v2799 = vsel %vm2783, 1, 0
    %v2800 = vcvt.s32.f32 %v2784
    %v2801 = vcvt.s32.f32 %v2785
    %v2802 = vcvt.s32.f32 %v2786
    %v2803 = vcvt.s32.f32 %v2787
    %v2804 = vcvt.s32.f32 %v2788
    %v2805 = vcvt.s32.f32 %v2789
    %v2806 = vcvt.s32.f32 %v2790
    %v2807 = vcvt.s32.f32 %v2791
    %v2808 = vcvt.s32.f32 %v2792
    %v2809 = vcvt.s32.f32 %v2793
    %v2810 = vcvt.s32.f32 %v2794
    %v2811 = vcvt.s32.f32 %v2795
    %v2812 = vcvt.s32.f32 %v2796
    %v2813 = vcvt.s32.f32 %v2797
    %v2814 = vcvt.s32.f32 %v2798
    %v2815 = vcvt.s32.f32 %v2799
    %v2816 = vld [vmem:[%s16] sm:$0x1]
    %v2818 = vlaneseq
    %v2819 = vshrl.u32 %v2818, 7
    %v2820 = vsub.s32 0, %v2819
    %v2821 = vrot.slane %v2816, %v2820
    %v2823 = vmul.f32 %v2800, %v2821
    %v2824 = vmul.f32 %v2801, %v2821
    %v2825 = vmul.f32 %v2802, %v2821
    %v2826 = vmul.f32 %v2803, %v2821
    %v2827 = vmul.f32 %v2804, %v2821
    %v2828 = vmul.f32 %v2805, %v2821
    %v2829 = vmul.f32 %v2806, %v2821
    %v2830 = vmul.f32 %v2807, %v2821
    %v2831 = vmul.f32 %v2808, %v2821
    %v2832 = vmul.f32 %v2809, %v2821
    %v2833 = vmul.f32 %v2810, %v2821
    %v2834 = vmul.f32 %v2811, %v2821
    %v2835 = vmul.f32 %v2812, %v2821
    %v2836 = vmul.f32 %v2813, %v2821
    %v2837 = vmul.f32 %v2814, %v2821
    %v2838 = vmul.f32 %v2815, %v2821
    %2839 = vadd.xlane.f32.xlu0 %v2823
    %v2840 = vpop.xlane.xlu0 %2839
    %2841 = vadd.xlane.f32.xlu0 %v2824
    %v2842 = vpop.xlane.xlu0 %2841
    %2843 = vadd.xlane.f32.xlu0 %v2825
    %v2844 = vpop.xlane.xlu0 %2843
    %2845 = vadd.xlane.f32.xlu0 %v2826
    %v2846 = vpop.xlane.xlu0 %2845
    %2847 = vadd.xlane.f32.xlu0 %v2827
    %v2848 = vpop.xlane.xlu0 %2847
    %2849 = vadd.xlane.f32.xlu0 %v2828
    %v2850 = vpop.xlane.xlu0 %2849
    %2851 = vadd.xlane.f32.xlu0 %v2829
    %v2852 = vpop.xlane.xlu0 %2851
    %2853 = vadd.xlane.f32.xlu0 %v2830
    %v2854 = vpop.xlane.xlu0 %2853
    %2855 = vadd.xlane.f32.xlu0 %v2831
    %v2856 = vpop.xlane.xlu0 %2855
    %2857 = vadd.xlane.f32.xlu0 %v2832
    %v2858 = vpop.xlane.xlu0 %2857
    %2859 = vadd.xlane.f32.xlu0 %v2833
    %v2860 = vpop.xlane.xlu0 %2859
    %2861 = vadd.xlane.f32.xlu0 %v2834
    %v2862 = vpop.xlane.xlu0 %2861
    %2863 = vadd.xlane.f32.xlu0 %v2835
    %v2864 = vpop.xlane.xlu0 %2863
    %2865 = vadd.xlane.f32.xlu0 %v2836
    %v2866 = vpop.xlane.xlu0 %2865
    %2867 = vadd.xlane.f32.xlu0 %v2837
    %v2868 = vpop.xlane.xlu0 %2867
    %2869 = vadd.xlane.f32.xlu0 %v2838
    %v2870 = vpop.xlane.xlu0 %2869
    %v2871 = vmul.f32 %v2591, %v2840
    %v2872 = vmul.f32 %v2592, %v2842
    %v2873 = vmul.f32 %v2593, %v2844
    %v2874 = vmul.f32 %v2594, %v2846
    %v2875 = vmul.f32 %v2595, %v2848
    %v2876 = vmul.f32 %v2596, %v2850
    %v2877 = vmul.f32 %v2597, %v2852
    %v2878 = vmul.f32 %v2598, %v2854
    %v2879 = vmul.f32 %v2599, %v2856
    %v2880 = vmul.f32 %v2600, %v2858
    %v2881 = vmul.f32 %v2601, %v2860
    %v2882 = vmul.f32 %v2602, %v2862
    %v2883 = vmul.f32 %v2603, %v2864
    %v2884 = vmul.f32 %v2604, %v2866
    %v2885 = vmul.f32 %v2605, %v2868
    %v2886 = vmul.f32 %v2606, %v2870
    %s2887 = sld [smem:[#allocation6]]
    %v2888 = vstv %s2887
    %v2889 = vadd.f32 %v2871, %v2888
    %v2890 = vadd.f32 %v2872, %v2888
    %v2891 = vadd.f32 %v2873, %v2888
    %v2892 = vadd.f32 %v2874, %v2888
    %v2893 = vadd.f32 %v2875, %v2888
    %v2894 = vadd.f32 %v2876, %v2888
    %v2895 = vadd.f32 %v2877, %v2888
    %v2896 = vadd.f32 %v2878, %v2888
    %v2897 = vadd.f32 %v2879, %v2888
    %v2898 = vadd.f32 %v2880, %v2888
    %v2899 = vadd.f32 %v2881, %v2888
    %v2900 = vadd.f32 %v2882, %v2888
    %v2901 = vadd.f32 %v2883, %v2888
    %v2902 = vadd.f32 %v2884, %v2888
    %v2903 = vadd.f32 %v2885, %v2888
    %v2904 = vadd.f32 %v2886, %v2888
    %v2905 = vld [vmem:[%s5] sm:$0xff]
    %2906 = vmatprep.subr.mxu0 %v2904
    %2907 = vmatpush1.msra.mxu0 %v2606
    %2908 = vmatprep.subr.mxu0 %v2903
    %2909 = vmatpush1.msra.mxu0 %v2605
    %2910 = vmatprep.subr.mxu0 %v2902
    %2911 = vmatpush1.msra.mxu0 %v2604
    %2912 = vmatprep.subr.mxu0 %v2901
    %2913 = vmatpush1.msra.mxu0 %v2603
    %2914 = vmatprep.subr.mxu0 %v2900
    %2915 = vmatpush1.msra.mxu0 %v2602
    %2916 = vmatprep.subr.mxu0 %v2899
    %2917 = vmatpush1.msra.mxu0 %v2601
    %2918 = vmatprep.subr.mxu0 %v2898
    %2919 = vmatpush1.msra.mxu0 %v2600
    %2920 = vmatprep.subr.mxu0 %v2897
    %2921 = vmatpush1.msra.mxu0 %v2599
    %2922 = vmatprep.subr.mxu0 %v2896
    %2923 = vmatpush1.msra.mxu0 %v2598
    %2924 = vmatprep.subr.mxu0 %v2895
    %2925 = vmatpush1.msra.mxu0 %v2597
    %2926 = vmatprep.subr.mxu0 %v2894
    %2927 = vmatpush1.msra.mxu0 %v2596
    %2928 = vmatprep.subr.mxu0 %v2893
    %2929 = vmatpush1.msra.mxu0 %v2595
    %2930 = vmatprep.subr.mxu0 %v2892
    %2931 = vmatpush1.msra.mxu0 %v2594
    %2932 = vmatprep.subr.mxu0 %v2891
    %2933 = vmatpush1.msra.mxu0 %v2593
    %2934 = vmatprep.subr.mxu0 %v2890
    %2935 = vmatpush1.msra.mxu0 %v2592
    %2936 = vmatprep.subr.mxu0 %v2889
    %2937 = vmatpush1.msra.mxu0 %v2591
    %2938 = vmatprep.subr.mxu0 0.0
    %2939 = vmatpush2.msra.mxu0 0.0
    %2940 = vmatprep.subr.mxu0 0.0
    %2941 = vmatpush2.msra.mxu0 0.0
    %2942 = vmatprep.subr.mxu0 0.0
    %2943 = vmatpush2.msra.mxu0 0.0
    %2944 = vmatprep.subr.mxu0 0.0
    %2945 = vmatpush2.msra.mxu0 0.0
    %2946 = vmatprep.subr.mxu0 0.0
    %2947 = vmatpush2.msra.mxu0 0.0
    %2948 = vmatprep.subr.mxu0 0.0
    %2949 = vmatpush2.msra.mxu0 0.0
    %2950 = vmatprep.subr.mxu0 0.0
    %2951 = vmatpush2.msra.mxu0 0.0
    %2952 = vmatprep.subr.mxu0 0.0
    %2953 = vmatpush2.msra.mxu0 0.0
    %2954 = vmatprep.subr.mxu0 0.0
    %2955 = vmatpush2.msra.mxu0 0.0
    %2956 = vmatprep.subr.mxu0 0.0
    %2957 = vmatpush2.msra.mxu0 0.0
    %2958 = vmatprep.subr.mxu0 0.0
    %2959 = vmatpush2.msra.mxu0 0.0
    %2960 = vmatprep.subr.mxu0 0.0
    %2961 = vmatpush2.msra.mxu0 0.0
    %2962 = vmatprep.subr.mxu0 0.0
    %2963 = vmatpush2.msra.mxu0 0.0
    %2964 = vmatprep.subr.mxu0 0.0
    %2965 = vmatpush2.msra.mxu0 0.0
    %2966 = vmatprep.subr.mxu0 0.0
    %2967 = vmatpush2.msra.mxu0 0.0
    %2968 = vmatprep.subr.mxu0 0.0
    %2969 = vmatpush2.msra.mxu0 0.0
    %2970 = vmatprep.mubr.f32.mxu0 0.0
    %2971 = vmatmul.mubr.f32.gmra.mxu0 %v2905
    %v2972 = vpop.f32.mrf.mxu0
    %v2973 = vadd.f32 0.0, %v2972
    %v2974 = vpop.f32.mrf.mxu0
    %v2975 = vadd.f32 0.0, %v2974
    %2976 = vdwg.mxu0
    %2977 = vst [vmem:[#allocation18] sm:$0xff] %v2973
    %2978 = vst [vmem:[#allocation19] sm:$0xff] %v2975
    // Predicated region
    $region98: #{tpu_custom_call.1} parent=1 // pred_check
      _
    $region99: #{tpu_custom_call.1} parent=1 // pred_check_branch
      %2980 = sbr.rel (0) target = $region101
    $region100: #{tpu_custom_call.1} parent=1 // pred_region
      %s2982 = ssub.s32 128, 128
      %2983 = vsyncadd [#allocation9], %s2982
      %s2985 = sshll.u32 [#allocation18], 4
      %s2986 = int_to_ptr.vmem [resolvable:$true] %s2985
      %2988 = dma.vmem_to_hbm [thread:$0]  %s2986, 128, %s18, [#allocation9]
    $region101: #{tpu_custom_call.1} parent=1 // pred_fallthru
      _
    // Predicated region
    $region102: #{tpu_custom_call.1} parent=1 // pred_check
      _
    $region103: #{tpu_custom_call.1} parent=1 // pred_check_branch
      %2990 = sbr.rel (0) target = $region105
    $region104: #{tpu_custom_call.1} parent=1 // pred_region
      %s2992 = ssub.s32 128, 128
      %2993 = vsyncadd [#allocation20], %s2992
      %s2995 = sshll.u32 [#allocation19], 4
      %s2996 = int_to_ptr.vmem [resolvable:$true] %s2995
      %2998 = dma.vmem_to_hbm [thread:$0]  %s2996, 128, %s19, [#allocation20]
    $region105: #{tpu_custom_call.1} parent=1 // pred_fallthru
      _
    // Predicated region
    $region106: #{tpu_custom_call.1} parent=1 // pred_check
      _
    $region107: #{tpu_custom_call.1} parent=1 // pred_check_branch
      %3000 = sbr.rel (0) target = $region109
    $region108: #{tpu_custom_call.1} parent=1 // pred_region
      %3001 = dma.done [#allocation9], 128
    $region109: #{tpu_custom_call.1} parent=1 // pred_fallthru
      _
    // Predicated region
    $region110: #{tpu_custom_call.1} parent=1 // pred_check
      _
    $region111: #{tpu_custom_call.1} parent=1 // pred_check_branch
      %3003 = sbr.rel (0) target = $region113
    $region112: #{tpu_custom_call.1} parent=1 // pred_region
      %3004 = dma.done [#allocation20], 128
    $region113: #{tpu_custom_call.1} parent=1 // pred_fallthru
      _
    %3005 = vsyncpa [#allocation8], 1
    %3006 = vsyncpa [#allocation13], 1
    %3007 = vsyncpa [#allocation16], 1
    %3008 = vsyncpa [#allocation9], 1
    %3009 = vsyncpa [#allocation20], 1
    %3010 = vsyncpa [#allocation10], 1
  %3011 = vsyncmov [#allocation3]
  %s3012 = vpop.sfrf %3011
  %p3013 = scmp.eq.s32.totalorder %s3012, 0
  %p3014 = pneg %p3013
  %3016 = shalt.err (%p3014)

</llo_original>
